<compile_context>
chip_gen: v7x
topology: tpu7x:2x2x1
jax: 0.10.0
libtpu: 0.0.40
codegen_flags: <defaults>
</compile_context>

<pallas_src>
import math

import jax
import jax.numpy as jnp
import numpy as np
from jax import lax
from jax.experimental import pallas as pl
from jax.experimental.pallas import tpu as pltpu


# ----------------------------------------------------------------------------
# Kernel: one (batch element, query tile) per grid step.
# ----------------------------------------------------------------------------
def _make_decoder_layer_kernel(nhead: int, eps: float = 1e-5):
    def kernel(tgt_t_ref, tgt_f_ref, mem_ref,
               wq1, wk1, wv1, wo1,          # self-attention projections (bf16)
               wq2, wk2, wv2, wo2,          # cross-attention projections (bf16)
               w1, b1, w2, b2,              # feed-forward (w bf16, b f32)
               g1, be1, g2, be2, g3, be3,   # layernorm gamma / beta (1, D) f32
               out_ref,
               k1_sc, v1_sc, k2_sc, v2_sc):  # persistent per-batch K/V scratch (bf16)
        D = out_ref.shape[-1]
        dh = D // nhead
        bf = jnp.bfloat16

        # ---- once per batch element: project K/V for self- and cross-attention ----
        @pl.when(pl.program_id(1) == 0)
        def _():
            tgt_full = tgt_f_ref[0].astype(bf)      # (S, D)
            mem_full = mem_ref[0].astype(bf)        # (M, D)
            k1_sc[...] = jnp.dot(tgt_full, wk1[...],
                                 preferred_element_type=jnp.float32).astype(bf)
            v1_sc[...] = jnp.dot(tgt_full, wv1[...],
                                 preferred_element_type=jnp.float32).astype(bf)
            k2_sc[...] = jnp.dot(mem_full, wk2[...],
                                 preferred_element_type=jnp.float32).astype(bf)
            v2_sc[...] = jnp.dot(mem_full, wv2[...],
                                 preferred_element_type=jnp.float32).astype(bf)

        def layernorm(x, g_ref, b_ref):
            mu = jnp.mean(x, axis=-1, keepdims=True)
            xc = x - mu
            var = jnp.mean(xc * xc, axis=-1, keepdims=True)
            return xc * lax.rsqrt(var + eps) * g_ref[...] + b_ref[...]

        def mha(q_in, k_sc, v_sc, wq_ref, wo_ref):
            # q projection; the 1/sqrt(dh) scale is already folded into wq.
            q = jnp.dot(q_in.astype(bf), wq_ref[...],
                        preferred_element_type=jnp.float32)     # (T, D) f32
            k = k_sc[...]                                       # (L, D) bf16
            v = v_sc[...]                                       # (L, D) bf16
            attn = jnp.zeros((q.shape[0], D), jnp.float32)
            for h in range(nhead):                              # static unroll over heads
                sl = slice(h * dh, (h + 1) * dh)
                qh = q[:, sl].astype(bf)
                # scores via transposed contraction — no kh.T materialization
                s = lax.dot_general(qh, k[:, sl], (((1,), (1,)), ((), ())),
                                    preferred_element_type=jnp.float32)  # (T, L)
                m = jnp.max(s, axis=-1, keepdims=True)
                e = jnp.exp(s - m)
                p = e * pl.reciprocal(jnp.sum(e, axis=-1, keepdims=True), approx=True)
                ctx = jnp.dot(p.astype(bf), v[:, sl],
                              preferred_element_type=jnp.float32)        # (T, dh)
                # accumulate through the matching Wo row-slice (no concatenate)
                attn = attn + jnp.dot(ctx.astype(bf), wo_ref[sl, :],
                                      preferred_element_type=jnp.float32)
            return attn

        tgt = tgt_t_ref[0].astype(jnp.float32)                  # (T, D) query tile

        # self-attention block (dropout1 = identity in eval)
        x = layernorm(tgt + mha(tgt, k1_sc, v1_sc, wq1, wo1), g1, be1)
        # cross-attention block (dropout2 = identity in eval)
        x = layernorm(x + mha(x, k2_sc, v2_sc, wq2, wo2), g2, be2)
        # feed-forward block (dropout / dropout3 = identity in eval)
        hdn = jnp.maximum(
            jnp.dot(x.astype(bf), w1[...], preferred_element_type=jnp.float32) + b1[...],
            0.0)
        ff = jnp.dot(hdn.astype(bf), w2[...],
                     preferred_element_type=jnp.float32) + b2[...]
        x = layernorm(x + ff, g3, be3)

        out_ref[0] = x.astype(out_ref.dtype)

    return kernel


def transformer_decoder_layer(tgt, memory, params, nhead, *, tile_s=128):
    """params: f32 arrays in the order produced by init_params()."""
    B, S, D = tgt.shape
    _, M, _ = memory.shape
    assert D % nhead == 0

    (wq1, wk1, wv1, wo1, wq2, wk2, wv2, wo2,
     w1, b1, w2, b2, g1, be1, g2, be2, g3, be3) = params
    dh = D // nhead
    scale = 1.0 / math.sqrt(dh)
    bf = jnp.bfloat16

    # Fold the softmax scale into the query projections and cast all matmul
    # weights to bf16 (f32 accumulation in-kernel). Biases / LN params stay f32.
    kparams = [
        (wq1 * scale).astype(bf), wk1.astype(bf), wv1.astype(bf), wo1.astype(bf),
        (wq2 * scale).astype(bf), wk2.astype(bf), wv2.astype(bf), wo2.astype(bf),
        w1.astype(bf), b1, w2.astype(bf), b2,
        g1, be1, g2, be2, g3, be3,
    ]

    TS = S if S <= tile_s else tile_s
    assert S % TS == 0, "TODO(synk): ragged sequence tails need masking"
    n_s = S // TS

    def full_spec(arr):
        nd = arr.ndim
        return pl.BlockSpec(arr.shape, lambda b, s, _nd=nd: (0,) * _nd)

    in_specs = [
        pl.BlockSpec((1, TS, D), lambda b, s: (b, s, 0)),   # query tile of tgt
        pl.BlockSpec((1, S, D), lambda b, s: (b, 0, 0)),    # full tgt (self-attn K/V source)
        pl.BlockSpec((1, M, D), lambda b, s: (b, 0, 0)),    # full memory (cross-attn K/V source)
    ] + [full_spec(p) for p in kparams]

    scratch_shapes = [
        pltpu.VMEM((S, D), bf), pltpu.VMEM((S, D), bf),     # self-attn K, V
        pltpu.VMEM((M, D), bf), pltpu.VMEM((M, D), bf),     # cross-attn K, V
    ]

    # VMEM budget: double-buffered input/output blocks + persistent scratch +
    # in-kernel working set (scores + FF hidden), with generous headroom,
    # clamped to stay below v7x physical VMEM (64 MiB).
    def nbytes(a):
        return int(np.prod(a.shape)) * jnp.dtype(a.dtype).itemsize
    blk_bytes = (TS * D + S * D + M * D + TS * D) * 4 + sum(nbytes(p) for p in kparams)
    scr_bytes = 2 * (S + M) * D * 2
    work_bytes = (TS * max(S, M) + TS * w1.shape[1]) * 4
    vmem_limit = int(min(max(4 * (2 * blk_bytes + scr_bytes + work_bytes),
                             16 * 1024 * 1024),
                         64 * 1024 * 1024))

    kernel = _make_decoder_layer_kernel(nhead)

    return pl.pallas_call(
        kernel,
        out_shape=jax.ShapeDtypeStruct((B, S, D), jnp.float32),
        grid=(B, n_s),
        in_specs=in_specs,
        out_specs=pl.BlockSpec((1, TS, D), lambda b, s: (b, s, 0)),
        scratch_shapes=scratch_shapes,
        compiler_params=pltpu.CompilerParams(
            dimension_semantics=("parallel", "arbitrary"),
            vmem_limit_bytes=vmem_limit),
    )(tgt, tgt, memory, *kparams)


# ----------------------------------------------------------------------------
# Pure-JAX f32 reference (same math) for correctness check.
# ----------------------------------------------------------------------------
def reference(tgt, memory, params, nhead, eps=1e-5):
    (wq1, wk1, wv1, wo1, wq2, wk2, wv2, wo2,
     w1, b1, w2, b2, g1, be1, g2, be2, g3, be3) = params

    def layernorm(x, g, b):
        mu = jnp.mean(x, axis=-1, keepdims=True)
        var = jnp.mean(jnp.square(x - mu), axis=-1, keepdims=True)
        return (x - mu) * lax.rsqrt(var + eps) * g + b

    def mha(q_in, kv_in, wq, wk, wv, wo):
        B, S, D = q_in.shape
        M = kv_in.shape[1]
        dh = D // nhead
        q = (q_in @ wq).reshape(B, S, nhead, dh)
        k = (kv_in @ wk).reshape(B, M, nhead, dh)
        v = (kv_in @ wv).reshape(B, M, nhead, dh)
        s = jnp.einsum("bshd,bmhd->bhsm", q, k) / math.sqrt(dh)
        p = jax.nn.softmax(s, axis=-1)
        ctx = jnp.einsum("bhsm,bmhd->bshd", p, v).reshape(B, S, D)
        return ctx @ wo

    x = layernorm(tgt + mha(tgt, tgt, wq1, wk1, wv1, wo1), g1, be1)
    x = layernorm(x + mha(x, memory, wq2, wk2, wv2, wo2), g2, be2)
    ff = jnp.maximum(x @ w1 + b1, 0.0) @ w2 + b2
    x = layernorm(x + ff, g3, be3)
    return x


# ----------------------------------------------------------------------------
# Deterministic parameter init (xavier-uniform like reset_parameters).
# ----------------------------------------------------------------------------
def init_params(key, d_model, nhead, dim_ff):
    keys = jax.random.split(key, 12)

    def xavier(k, fan_in, fan_out, gain=1.0):
        bound = gain * math.sqrt(6.0 / (fan_in + fan_out))
        return jax.random.uniform(k, (fan_in, fan_out), jnp.float32, -bound, bound)

    wq1 = xavier(keys[0], d_model, d_model)
    wk1 = xavier(keys[1], d_model, d_model)
    wv1 = xavier(keys[2], d_model, d_model)
    wo1 = xavier(keys[3], d_model, d_model)
    wq2 = xavier(keys[4], d_model, d_model)
    wk2 = xavier(keys[5], d_model, d_model)
    wv2 = xavier(keys[6], d_model, d_model)
    wo2 = xavier(keys[7], d_model, d_model)
    w1 = xavier(keys[8], d_model, dim_ff, gain=math.sqrt(2.0))
    b1 = jnp.zeros((1, dim_ff), jnp.float32)
    w2 = xavier(keys[9], dim_ff, d_model)
    b2 = jnp.zeros((1, d_model), jnp.float32)
    g1 = jnp.ones((1, d_model), jnp.float32); be1 = jnp.zeros((1, d_model), jnp.float32)
    g2 = jnp.ones((1, d_model), jnp.float32); be2 = jnp.zeros((1, d_model), jnp.float32)
    g3 = jnp.ones((1, d_model), jnp.float32); be3 = jnp.zeros((1, d_model), jnp.float32)

    return [wq1, wk1, wv1, wo1, wq2, wk2, wv2, wo2,
            w1, b1, w2, b2, g1, be1, g2, be2, g3, be3]


if __name__ == "__main__":
    B, S_TGT, S_MEM = 2, 8, 8
    D_MODEL, NHEAD, DIM_FF = 32, 4, 64

    key = jax.random.PRNGKey(0)
    k_tgt, k_mem, k_par = jax.random.split(key, 3)
    tgt = jax.random.normal(k_tgt, (B, S_TGT, D_MODEL), jnp.float32)
    memory = jax.random.normal(k_mem, (B, S_MEM, D_MODEL), jnp.float32)
    params = init_params(k_par, D_MODEL, NHEAD, DIM_FF)

    out = transformer_decoder_layer(tgt, memory, params, NHEAD)
    out = jax.block_until_ready(out)

    ref = reference(tgt, memory, params, NHEAD)
    assert out.shape == (B, S_TGT, D_MODEL)
    # Tolerance is loosened vs. the all-f32 version because matmul operands are
    # bf16 (accumulation stays f32); genuine bugs would show O(1) errors.
    assert np.allclose(np.asarray(out), np.asarray(ref), rtol=5e-2, atol=5e-2), \
        "Pallas kernel output does not match pure-JAX reference"

    print("KERNEL_OK")
</pallas_src>

<mosaic_0001>
module attributes {stable_mosaic.version = 11 : i64} {
  func.func @kernel(%arg0: i32, %arg1: i32, %arg2: memref<1x8x32xf32, #tpu.memory_space<vmem>>, %arg3: memref<1x8x32xf32, #tpu.memory_space<vmem>>, %arg4: memref<1x8x32xf32, #tpu.memory_space<vmem>>, %arg5: memref<32x32xbf16, #tpu.memory_space<vmem>>, %arg6: memref<32x32xbf16, #tpu.memory_space<vmem>>, %arg7: memref<32x32xbf16, #tpu.memory_space<vmem>>, %arg8: memref<32x32xbf16, #tpu.memory_space<vmem>>, %arg9: memref<32x32xbf16, #tpu.memory_space<vmem>>, %arg10: memref<32x32xbf16, #tpu.memory_space<vmem>>, %arg11: memref<32x32xbf16, #tpu.memory_space<vmem>>, %arg12: memref<32x32xbf16, #tpu.memory_space<vmem>>, %arg13: memref<32x64xbf16, #tpu.memory_space<vmem>>, %arg14: memref<1x64xf32, #tpu.memory_space<vmem>>, %arg15: memref<64x32xbf16, #tpu.memory_space<vmem>>, %arg16: memref<1x32xf32, #tpu.memory_space<vmem>>, %arg17: memref<1x32xf32, #tpu.memory_space<vmem>>, %arg18: memref<1x32xf32, #tpu.memory_space<vmem>>, %arg19: memref<1x32xf32, #tpu.memory_space<vmem>>, %arg20: memref<1x32xf32, #tpu.memory_space<vmem>>, %arg21: memref<1x32xf32, #tpu.memory_space<vmem>>, %arg22: memref<1x32xf32, #tpu.memory_space<vmem>>, %arg23: memref<1x8x32xf32, #tpu.memory_space<vmem>>, %arg24: memref<8x32xbf16, #tpu.memory_space<vmem>>, %arg25: memref<8x32xbf16, #tpu.memory_space<vmem>>, %arg26: memref<8x32xbf16, #tpu.memory_space<vmem>>, %arg27: memref<8x32xbf16, #tpu.memory_space<vmem>>) attributes {dimension_semantics = [#tpu.dimension_semantics<parallel>, #tpu.dimension_semantics<arbitrary>], iteration_bounds = array<i64: 2, 1>, scalar_prefetch = 0 : i64, scratch_operands = 4 : i64, tpu.core_type = #tpu.core_type<tc>, window_params = [{transform_indices = @transform_0, window_bounds = array<i64: 1, 8, 32>}, {transform_indices = @transform_1, window_bounds = array<i64: 1, 8, 32>}, {transform_indices = @transform_2, window_bounds = array<i64: 1, 8, 32>}, {pipeline_mode = #tpu.pipeline_mode<synchronous>, transform_indices = @transform_3, window_bounds = array<i64: 32, 32>}, {pipeline_mode = #tpu.pipeline_mode<synchronous>, transform_indices = @transform_4, window_bounds = array<i64: 32, 32>}, {pipeline_mode = #tpu.pipeline_mode<synchronous>, transform_indices = @transform_5, window_bounds = array<i64: 32, 32>}, {pipeline_mode = #tpu.pipeline_mode<synchronous>, transform_indices = @transform_6, window_bounds = array<i64: 32, 32>}, {pipeline_mode = #tpu.pipeline_mode<synchronous>, transform_indices = @transform_7, window_bounds = array<i64: 32, 32>}, {pipeline_mode = #tpu.pipeline_mode<synchronous>, transform_indices = @transform_8, window_bounds = array<i64: 32, 32>}, {pipeline_mode = #tpu.pipeline_mode<synchronous>, transform_indices = @transform_9, window_bounds = array<i64: 32, 32>}, {pipeline_mode = #tpu.pipeline_mode<synchronous>, transform_indices = @transform_10, window_bounds = array<i64: 32, 32>}, {pipeline_mode = #tpu.pipeline_mode<synchronous>, transform_indices = @transform_11, window_bounds = array<i64: 32, 64>}, {pipeline_mode = #tpu.pipeline_mode<synchronous>, transform_indices = @transform_12, window_bounds = array<i64: 1, 64>}, {pipeline_mode = #tpu.pipeline_mode<synchronous>, transform_indices = @transform_13, window_bounds = array<i64: 64, 32>}, {pipeline_mode = #tpu.pipeline_mode<synchronous>, transform_indices = @transform_14, window_bounds = array<i64: 1, 32>}, {pipeline_mode = #tpu.pipeline_mode<synchronous>, transform_indices = @transform_15, window_bounds = array<i64: 1, 32>}, {pipeline_mode = #tpu.pipeline_mode<synchronous>, transform_indices = @transform_16, window_bounds = array<i64: 1, 32>}, {pipeline_mode = #tpu.pipeline_mode<synchronous>, transform_indices = @transform_17, window_bounds = array<i64: 1, 32>}, {pipeline_mode = #tpu.pipeline_mode<synchronous>, transform_indices = @transform_18, window_bounds = array<i64: 1, 32>}, {pipeline_mode = #tpu.pipeline_mode<synchronous>, transform_indices = @transform_19, window_bounds = array<i64: 1, 32>}, {pipeline_mode = #tpu.pipeline_mode<synchronous>, transform_indices = @transform_20, window_bounds = array<i64: 1, 32>}, {transform_indices = @transform_21, window_bounds = array<i64: 1, 8, 32>}]} {
    %c0_i32 = arith.constant 0 : i32
    %0 = arith.cmpi eq, %arg1, %c0_i32 : i32
    %1 = arith.extui %0 : i1 to i32
    %c0_i32_0 = arith.constant 0 : i32
    %2 = arith.cmpi ne, %1, %c0_i32_0 : i32
    scf.if %2 {
      %c0_112 = arith.constant 0 : index
      %c0_113 = arith.constant 0 : index
      %c0_114 = arith.constant 0 : index
      %271 = vector.load %arg3[%c0_112, %c0_113, %c0_114] : memref<1x8x32xf32, #tpu.memory_space<vmem>>, vector<1x8x32xf32>
      %272 = vector.shape_cast %271 : vector<1x8x32xf32> to vector<8x32xf32>
      %273 = arith.truncf %272 : vector<8x32xf32> to vector<8x32xbf16>
      %c0_115 = arith.constant 0 : index
      %c0_116 = arith.constant 0 : index
      %c0_117 = arith.constant 0 : index
      %274 = vector.load %arg4[%c0_115, %c0_116, %c0_117] : memref<1x8x32xf32, #tpu.memory_space<vmem>>, vector<1x8x32xf32>
      %275 = vector.shape_cast %274 : vector<1x8x32xf32> to vector<8x32xf32>
      %276 = arith.truncf %275 : vector<8x32xf32> to vector<8x32xbf16>
      %c0_118 = arith.constant 0 : index
      %c0_119 = arith.constant 0 : index
      %277 = vector.load %arg6[%c0_118, %c0_119] : memref<32x32xbf16, #tpu.memory_space<vmem>>, vector<32x32xbf16>
      %cst_120 = arith.constant dense<0.000000e+00> : vector<8x32xf32>
      %278 = tpu.matmul %273, %277, %cst_120 {dimension_numbers = #tpu.dot_dimension_numbers<[1], [0], [0], [1], [0, 0, 1, 1], [], []>} : vector<8x32xbf16>, vector<32x32xbf16>, vector<8x32xf32> -> vector<8x32xf32>
      %279 = arith.truncf %278 : vector<8x32xf32> to vector<8x32xbf16>
      %c0_121 = arith.constant 0 : index
      %c0_122 = arith.constant 0 : index
      %280 = vector.load %arg24[%c0_121, %c0_122] : memref<8x32xbf16, #tpu.memory_space<vmem>>, vector<8x32xbf16>
      tpu.vector_store %arg24[%c0_121, %c0_122], %279 {strides = array<i32>} : memref<8x32xbf16, #tpu.memory_space<vmem>>, vector<8x32xbf16>,
      %c0_123 = arith.constant 0 : index
      %c0_124 = arith.constant 0 : index
      %281 = vector.load %arg7[%c0_123, %c0_124] : memref<32x32xbf16, #tpu.memory_space<vmem>>, vector<32x32xbf16>
      %cst_125 = arith.constant dense<0.000000e+00> : vector<8x32xf32>
      %282 = tpu.matmul %273, %281, %cst_125 {dimension_numbers = #tpu.dot_dimension_numbers<[1], [0], [0], [1], [0, 0, 1, 1], [], []>} : vector<8x32xbf16>, vector<32x32xbf16>, vector<8x32xf32> -> vector<8x32xf32>
      %283 = arith.truncf %282 : vector<8x32xf32> to vector<8x32xbf16>
      %c0_126 = arith.constant 0 : index
      %c0_127 = arith.constant 0 : index
      %284 = vector.load %arg25[%c0_126, %c0_127] : memref<8x32xbf16, #tpu.memory_space<vmem>>, vector<8x32xbf16>
      tpu.vector_store %arg25[%c0_126, %c0_127], %283 {strides = array<i32>} : memref<8x32xbf16, #tpu.memory_space<vmem>>, vector<8x32xbf16>,
      %c0_128 = arith.constant 0 : index
      %c0_129 = arith.constant 0 : index
      %285 = vector.load %arg10[%c0_128, %c0_129] : memref<32x32xbf16, #tpu.memory_space<vmem>>, vector<32x32xbf16>
      %cst_130 = arith.constant dense<0.000000e+00> : vector<8x32xf32>
      %286 = tpu.matmul %276, %285, %cst_130 {dimension_numbers = #tpu.dot_dimension_numbers<[1], [0], [0], [1], [0, 0, 1, 1], [], []>} : vector<8x32xbf16>, vector<32x32xbf16>, vector<8x32xf32> -> vector<8x32xf32>
      %287 = arith.truncf %286 : vector<8x32xf32> to vector<8x32xbf16>
      %c0_131 = arith.constant 0 : index
      %c0_132 = arith.constant 0 : index
      %288 = vector.load %arg26[%c0_131, %c0_132] : memref<8x32xbf16, #tpu.memory_space<vmem>>, vector<8x32xbf16>
      tpu.vector_store %arg26[%c0_131, %c0_132], %287 {strides = array<i32>} : memref<8x32xbf16, #tpu.memory_space<vmem>>, vector<8x32xbf16>,
      %c0_133 = arith.constant 0 : index
      %c0_134 = arith.constant 0 : index
      %289 = vector.load %arg11[%c0_133, %c0_134] : memref<32x32xbf16, #tpu.memory_space<vmem>>, vector<32x32xbf16>
      %cst_135 = arith.constant dense<0.000000e+00> : vector<8x32xf32>
      %290 = tpu.matmul %276, %289, %cst_135 {dimension_numbers = #tpu.dot_dimension_numbers<[1], [0], [0], [1], [0, 0, 1, 1], [], []>} : vector<8x32xbf16>, vector<32x32xbf16>, vector<8x32xf32> -> vector<8x32xf32>
      %291 = arith.truncf %290 : vector<8x32xf32> to vector<8x32xbf16>
      %c0_136 = arith.constant 0 : index
      %c0_137 = arith.constant 0 : index
      %292 = vector.load %arg27[%c0_136, %c0_137] : memref<8x32xbf16, #tpu.memory_space<vmem>>, vector<8x32xbf16>
      tpu.vector_store %arg27[%c0_136, %c0_137], %291 {strides = array<i32>} : memref<8x32xbf16, #tpu.memory_space<vmem>>, vector<8x32xbf16>,
    } else {
    }
    %c0 = arith.constant 0 : index
    %c0_1 = arith.constant 0 : index
    %c0_2 = arith.constant 0 : index
    %3 = vector.load %arg2[%c0, %c0_1, %c0_2] : memref<1x8x32xf32, #tpu.memory_space<vmem>>, vector<1x8x32xf32>
    %4 = vector.shape_cast %3 : vector<1x8x32xf32> to vector<8x32xf32>
    %5 = arith.truncf %4 : vector<8x32xf32> to vector<8x32xbf16>
    %c0_3 = arith.constant 0 : index
    %c0_4 = arith.constant 0 : index
    %6 = vector.load %arg5[%c0_3, %c0_4] : memref<32x32xbf16, #tpu.memory_space<vmem>>, vector<32x32xbf16>
    %cst = arith.constant dense<0.000000e+00> : vector<8x32xf32>
    %7 = tpu.matmul %5, %6, %cst {dimension_numbers = #tpu.dot_dimension_numbers<[1], [0], [0], [1], [0, 0, 1, 1], [], []>} : vector<8x32xbf16>, vector<32x32xbf16>, vector<8x32xf32> -> vector<8x32xf32>
    %c0_5 = arith.constant 0 : index
    %c0_6 = arith.constant 0 : index
    %8 = vector.load %arg24[%c0_5, %c0_6] : memref<8x32xbf16, #tpu.memory_space<vmem>>, vector<8x32xbf16>
    %c0_7 = arith.constant 0 : index
    %c0_8 = arith.constant 0 : index
    %9 = vector.load %arg25[%c0_7, %c0_8] : memref<8x32xbf16, #tpu.memory_space<vmem>>, vector<8x32xbf16>
    %cst_9 = arith.constant 0.000000e+00 : f32
    %10 = vector.broadcast %cst_9 : f32 to vector<8x32xf32>
    %11 = vector.extract_strided_slice %7 {offsets = [0, 0], sizes = [8, 8], strides = [1, 1]} : vector<8x32xf32> to vector<8x8xf32>
    %12 = arith.truncf %11 : vector<8x8xf32> to vector<8x8xbf16>
    %13 = vector.extract_strided_slice %8 {offsets = [0, 0], sizes = [8, 8], strides = [1, 1]} : vector<8x32xbf16> to vector<8x8xbf16>
    %cst_10 = arith.constant dense<0.000000e+00> : vector<8x8xf32>
    %14 = tpu.matmul %12, %13, %cst_10 {dimension_numbers = #tpu.dot_dimension_numbers<[1], [1], [0], [0], [0, 0, 1, 0], [], []>} : vector<8x8xbf16>, vector<8x8xbf16>, vector<8x8xf32> -> vector<8x8xf32>
    %cst_11 = arith.constant dense<0xFF800000> : vector<8xf32>
    %15 = vector.multi_reduction <maximumf>, %14, %cst_11 [1] : vector<8x8xf32> to vector<8xf32>
    %16 = vector.shape_cast %15 : vector<8xf32> to vector<8x1xf32>
    %17 = vector.broadcast %16 : vector<8x1xf32> to vector<8x8xf32>
    %18 = arith.subf %14, %17 : vector<8x8xf32>
    %19 = math.exp %18 : vector<8x8xf32>
    %cst_12 = arith.constant dense<0.000000e+00> : vector<8xf32>
    %20 = vector.multi_reduction <add>, %19, %cst_12 [1] : vector<8x8xf32> to vector<8xf32>
    %21 = vector.shape_cast %20 : vector<8xf32> to vector<8x1xf32>
    %22 = tpu.reciprocal %21 {approx = true} : vector<8x1xf32> -> vector<8x1xf32>
    %23 = vector.broadcast %22 : vector<8x1xf32> to vector<8x8xf32>
    %24 = arith.mulf %19, %23 : vector<8x8xf32>
    %25 = arith.truncf %24 : vector<8x8xf32> to vector<8x8xbf16>
    %26 = vector.extract_strided_slice %9 {offsets = [0, 0], sizes = [8, 8], strides = [1, 1]} : vector<8x32xbf16> to vector<8x8xbf16>
    %cst_13 = arith.constant dense<0.000000e+00> : vector<8x8xf32>
    %27 = tpu.matmul %25, %26, %cst_13 {dimension_numbers = #tpu.dot_dimension_numbers<[1], [0], [0], [1], [0, 0, 1, 1], [], []>} : vector<8x8xbf16>, vector<8x8xbf16>, vector<8x8xf32> -> vector<8x8xf32>
    %28 = arith.truncf %27 : vector<8x8xf32> to vector<8x8xbf16>
    %c0_14 = arith.constant 0 : index
    %c0_15 = arith.constant 0 : index
    %29 = vector.load %arg8[%c0_14, %c0_15] : memref<32x32xbf16, #tpu.memory_space<vmem>>, vector<8x32xbf16>
    %cst_16 = arith.constant dense<0.000000e+00> : vector<8x32xf32>
    %30 = tpu.matmul %28, %29, %cst_16 {dimension_numbers = #tpu.dot_dimension_numbers<[1], [0], [0], [1], [0, 0, 1, 1], [], []>} : vector<8x8xbf16>, vector<8x32xbf16>, vector<8x32xf32> -> vector<8x32xf32>
    %31 = arith.addf %10, %30 : vector<8x32xf32>
    %32 = vector.extract_strided_slice %7 {offsets = [0, 8], sizes = [8, 8], strides = [1, 1]} : vector<8x32xf32> to vector<8x8xf32>
    %33 = arith.truncf %32 : vector<8x8xf32> to vector<8x8xbf16>
    %34 = vector.extract_strided_slice %8 {offsets = [0, 8], sizes = [8, 8], strides = [1, 1]} : vector<8x32xbf16> to vector<8x8xbf16>
    %cst_17 = arith.constant dense<0.000000e+00> : vector<8x8xf32>
    %35 = tpu.matmul %33, %34, %cst_17 {dimension_numbers = #tpu.dot_dimension_numbers<[1], [1], [0], [0], [0, 0, 1, 0], [], []>} : vector<8x8xbf16>, vector<8x8xbf16>, vector<8x8xf32> -> vector<8x8xf32>
    %cst_18 = arith.constant dense<0xFF800000> : vector<8xf32>
    %36 = vector.multi_reduction <maximumf>, %35, %cst_18 [1] : vector<8x8xf32> to vector<8xf32>
    %37 = vector.shape_cast %36 : vector<8xf32> to vector<8x1xf32>
    %38 = vector.broadcast %37 : vector<8x1xf32> to vector<8x8xf32>
    %39 = arith.subf %35, %38 : vector<8x8xf32>
    %40 = math.exp %39 : vector<8x8xf32>
    %cst_19 = arith.constant dense<0.000000e+00> : vector<8xf32>
    %41 = vector.multi_reduction <add>, %40, %cst_19 [1] : vector<8x8xf32> to vector<8xf32>
    %42 = vector.shape_cast %41 : vector<8xf32> to vector<8x1xf32>
    %43 = tpu.reciprocal %42 {approx = true} : vector<8x1xf32> -> vector<8x1xf32>
    %44 = vector.broadcast %43 : vector<8x1xf32> to vector<8x8xf32>
    %45 = arith.mulf %40, %44 : vector<8x8xf32>
    %46 = arith.truncf %45 : vector<8x8xf32> to vector<8x8xbf16>
    %47 = vector.extract_strided_slice %9 {offsets = [0, 8], sizes = [8, 8], strides = [1, 1]} : vector<8x32xbf16> to vector<8x8xbf16>
    %cst_20 = arith.constant dense<0.000000e+00> : vector<8x8xf32>
    %48 = tpu.matmul %46, %47, %cst_20 {dimension_numbers = #tpu.dot_dimension_numbers<[1], [0], [0], [1], [0, 0, 1, 1], [], []>} : vector<8x8xbf16>, vector<8x8xbf16>, vector<8x8xf32> -> vector<8x8xf32>
    %49 = arith.truncf %48 : vector<8x8xf32> to vector<8x8xbf16>
    %c8 = arith.constant 8 : index
    %c0_21 = arith.constant 0 : index
    %50 = vector.load %arg8[%c8, %c0_21] : memref<32x32xbf16, #tpu.memory_space<vmem>>, vector<8x32xbf16>
    %cst_22 = arith.constant dense<0.000000e+00> : vector<8x32xf32>
    %51 = tpu.matmul %49, %50, %cst_22 {dimension_numbers = #tpu.dot_dimension_numbers<[1], [0], [0], [1], [0, 0, 1, 1], [], []>} : vector<8x8xbf16>, vector<8x32xbf16>, vector<8x32xf32> -> vector<8x32xf32>
    %52 = arith.addf %31, %51 : vector<8x32xf32>
    %53 = vector.extract_strided_slice %7 {offsets = [0, 16], sizes = [8, 8], strides = [1, 1]} : vector<8x32xf32> to vector<8x8xf32>
    %54 = arith.truncf %53 : vector<8x8xf32> to vector<8x8xbf16>
    %55 = vector.extract_strided_slice %8 {offsets = [0, 16], sizes = [8, 8], strides = [1, 1]} : vector<8x32xbf16> to vector<8x8xbf16>
    %cst_23 = arith.constant dense<0.000000e+00> : vector<8x8xf32>
    %56 = tpu.matmul %54, %55, %cst_23 {dimension_numbers = #tpu.dot_dimension_numbers<[1], [1], [0], [0], [0, 0, 1, 0], [], []>} : vector<8x8xbf16>, vector<8x8xbf16>, vector<8x8xf32> -> vector<8x8xf32>
    %cst_24 = arith.constant dense<0xFF800000> : vector<8xf32>
    %57 = vector.multi_reduction <maximumf>, %56, %cst_24 [1] : vector<8x8xf32> to vector<8xf32>
    %58 = vector.shape_cast %57 : vector<8xf32> to vector<8x1xf32>
    %59 = vector.broadcast %58 : vector<8x1xf32> to vector<8x8xf32>
    %60 = arith.subf %56, %59 : vector<8x8xf32>
    %61 = math.exp %60 : vector<8x8xf32>
    %cst_25 = arith.constant dense<0.000000e+00> : vector<8xf32>
    %62 = vector.multi_reduction <add>, %61, %cst_25 [1] : vector<8x8xf32> to vector<8xf32>
    %63 = vector.shape_cast %62 : vector<8xf32> to vector<8x1xf32>
    %64 = tpu.reciprocal %63 {approx = true} : vector<8x1xf32> -> vector<8x1xf32>
    %65 = vector.broadcast %64 : vector<8x1xf32> to vector<8x8xf32>
    %66 = arith.mulf %61, %65 : vector<8x8xf32>
    %67 = arith.truncf %66 : vector<8x8xf32> to vector<8x8xbf16>
    %68 = vector.extract_strided_slice %9 {offsets = [0, 16], sizes = [8, 8], strides = [1, 1]} : vector<8x32xbf16> to vector<8x8xbf16>
    %cst_26 = arith.constant dense<0.000000e+00> : vector<8x8xf32>
    %69 = tpu.matmul %67, %68, %cst_26 {dimension_numbers = #tpu.dot_dimension_numbers<[1], [0], [0], [1], [0, 0, 1, 1], [], []>} : vector<8x8xbf16>, vector<8x8xbf16>, vector<8x8xf32> -> vector<8x8xf32>
    %70 = arith.truncf %69 : vector<8x8xf32> to vector<8x8xbf16>
    %c16 = arith.constant 16 : index
    %c0_27 = arith.constant 0 : index
    %71 = vector.load %arg8[%c16, %c0_27] : memref<32x32xbf16, #tpu.memory_space<vmem>>, vector<8x32xbf16>
    %cst_28 = arith.constant dense<0.000000e+00> : vector<8x32xf32>
    %72 = tpu.matmul %70, %71, %cst_28 {dimension_numbers = #tpu.dot_dimension_numbers<[1], [0], [0], [1], [0, 0, 1, 1], [], []>} : vector<8x8xbf16>, vector<8x32xbf16>, vector<8x32xf32> -> vector<8x32xf32>
    %73 = arith.addf %52, %72 : vector<8x32xf32>
    %74 = vector.extract_strided_slice %7 {offsets = [0, 24], sizes = [8, 8], strides = [1, 1]} : vector<8x32xf32> to vector<8x8xf32>
    %75 = arith.truncf %74 : vector<8x8xf32> to vector<8x8xbf16>
    %76 = vector.extract_strided_slice %8 {offsets = [0, 24], sizes = [8, 8], strides = [1, 1]} : vector<8x32xbf16> to vector<8x8xbf16>
    %cst_29 = arith.constant dense<0.000000e+00> : vector<8x8xf32>
    %77 = tpu.matmul %75, %76, %cst_29 {dimension_numbers = #tpu.dot_dimension_numbers<[1], [1], [0], [0], [0, 0, 1, 0], [], []>} : vector<8x8xbf16>, vector<8x8xbf16>, vector<8x8xf32> -> vector<8x8xf32>
    %cst_30 = arith.constant dense<0xFF800000> : vector<8xf32>
    %78 = vector.multi_reduction <maximumf>, %77, %cst_30 [1] : vector<8x8xf32> to vector<8xf32>
    %79 = vector.shape_cast %78 : vector<8xf32> to vector<8x1xf32>
    %80 = vector.broadcast %79 : vector<8x1xf32> to vector<8x8xf32>
    %81 = arith.subf %77, %80 : vector<8x8xf32>
    %82 = math.exp %81 : vector<8x8xf32>
    %cst_31 = arith.constant dense<0.000000e+00> : vector<8xf32>
    %83 = vector.multi_reduction <add>, %82, %cst_31 [1] : vector<8x8xf32> to vector<8xf32>
    %84 = vector.shape_cast %83 : vector<8xf32> to vector<8x1xf32>
    %85 = tpu.reciprocal %84 {approx = true} : vector<8x1xf32> -> vector<8x1xf32>
    %86 = vector.broadcast %85 : vector<8x1xf32> to vector<8x8xf32>
    %87 = arith.mulf %82, %86 : vector<8x8xf32>
    %88 = arith.truncf %87 : vector<8x8xf32> to vector<8x8xbf16>
    %89 = vector.extract_strided_slice %9 {offsets = [0, 24], sizes = [8, 8], strides = [1, 1]} : vector<8x32xbf16> to vector<8x8xbf16>
    %cst_32 = arith.constant dense<0.000000e+00> : vector<8x8xf32>
    %90 = tpu.matmul %88, %89, %cst_32 {dimension_numbers = #tpu.dot_dimension_numbers<[1], [0], [0], [1], [0, 0, 1, 1], [], []>} : vector<8x8xbf16>, vector<8x8xbf16>, vector<8x8xf32> -> vector<8x8xf32>
    %91 = arith.truncf %90 : vector<8x8xf32> to vector<8x8xbf16>
    %c24 = arith.constant 24 : index
    %c0_33 = arith.constant 0 : index
    %92 = vector.load %arg8[%c24, %c0_33] : memref<32x32xbf16, #tpu.memory_space<vmem>>, vector<8x32xbf16>
    %cst_34 = arith.constant dense<0.000000e+00> : vector<8x32xf32>
    %93 = tpu.matmul %91, %92, %cst_34 {dimension_numbers = #tpu.dot_dimension_numbers<[1], [0], [0], [1], [0, 0, 1, 1], [], []>} : vector<8x8xbf16>, vector<8x32xbf16>, vector<8x32xf32> -> vector<8x32xf32>
    %94 = arith.addf %73, %93 : vector<8x32xf32>
    %95 = arith.addf %4, %94 : vector<8x32xf32>
    %cst_35 = arith.constant dense<0.000000e+00> : vector<8xf32>
    %96 = vector.multi_reduction <add>, %95, %cst_35 [1] : vector<8x32xf32> to vector<8xf32>
    %97 = vector.shape_cast %96 : vector<8xf32> to vector<8x1xf32>
    %cst_36 = arith.constant 3.200000e+01 : f32
    %98 = vector.broadcast %cst_36 : f32 to vector<8x1xf32>
    %99 = arith.divf %97, %98 : vector<8x1xf32>
    %100 = vector.broadcast %99 : vector<8x1xf32> to vector<8x32xf32>
    %101 = arith.subf %95, %100 : vector<8x32xf32>
    %102 = arith.mulf %101, %101 : vector<8x32xf32>
    %cst_37 = arith.constant dense<0.000000e+00> : vector<8xf32>
    %103 = vector.multi_reduction <add>, %102, %cst_37 [1] : vector<8x32xf32> to vector<8xf32>
    %104 = vector.shape_cast %103 : vector<8xf32> to vector<8x1xf32>
    %cst_38 = arith.constant 3.200000e+01 : f32
    %105 = vector.broadcast %cst_38 : f32 to vector<8x1xf32>
    %106 = arith.divf %104, %105 : vector<8x1xf32>
    %cst_39 = arith.constant 9.99999974E-6 : f32
    %107 = vector.broadcast %cst_39 : f32 to vector<8x1xf32>
    %108 = arith.addf %106, %107 : vector<8x1xf32>
    %109 = math.rsqrt %108 : vector<8x1xf32>
    %110 = vector.broadcast %109 : vector<8x1xf32> to vector<8x32xf32>
    %111 = arith.mulf %101, %110 : vector<8x32xf32>
    %c0_40 = arith.constant 0 : index
    %c0_41 = arith.constant 0 : index
    %112 = vector.load %arg17[%c0_40, %c0_41] : memref<1x32xf32, #tpu.memory_space<vmem>>, vector<1x32xf32>
    %113 = vector.broadcast %112 : vector<1x32xf32> to vector<8x32xf32>
    %114 = arith.mulf %111, %113 : vector<8x32xf32>
    %c0_42 = arith.constant 0 : index
    %c0_43 = arith.constant 0 : index
    %115 = vector.load %arg18[%c0_42, %c0_43] : memref<1x32xf32, #tpu.memory_space<vmem>>, vector<1x32xf32>
    %116 = vector.broadcast %115 : vector<1x32xf32> to vector<8x32xf32>
    %117 = arith.addf %114, %116 : vector<8x32xf32>
    %118 = arith.truncf %117 : vector<8x32xf32> to vector<8x32xbf16>
    %c0_44 = arith.constant 0 : index
    %c0_45 = arith.constant 0 : index
    %119 = vector.load %arg9[%c0_44, %c0_45] : memref<32x32xbf16, #tpu.memory_space<vmem>>, vector<32x32xbf16>
    %cst_46 = arith.constant dense<0.000000e+00> : vector<8x32xf32>
    %120 = tpu.matmul %118, %119, %cst_46 {dimension_numbers = #tpu.dot_dimension_numbers<[1], [0], [0], [1], [0, 0, 1, 1], [], []>} : vector<8x32xbf16>, vector<32x32xbf16>, vector<8x32xf32> -> vector<8x32xf32>
    %c0_47 = arith.constant 0 : index
    %c0_48 = arith.constant 0 : index
    %121 = vector.load %arg26[%c0_47, %c0_48] : memref<8x32xbf16, #tpu.memory_space<vmem>>, vector<8x32xbf16>
    %c0_49 = arith.constant 0 : index
    %c0_50 = arith.constant 0 : index
    %122 = vector.load %arg27[%c0_49, %c0_50] : memref<8x32xbf16, #tpu.memory_space<vmem>>, vector<8x32xbf16>
    %cst_51 = arith.constant 0.000000e+00 : f32
    %123 = vector.broadcast %cst_51 : f32 to vector<8x32xf32>
    %124 = vector.extract_strided_slice %120 {offsets = [0, 0], sizes = [8, 8], strides = [1, 1]} : vector<8x32xf32> to vector<8x8xf32>
    %125 = arith.truncf %124 : vector<8x8xf32> to vector<8x8xbf16>
    %126 = vector.extract_strided_slice %121 {offsets = [0, 0], sizes = [8, 8], strides = [1, 1]} : vector<8x32xbf16> to vector<8x8xbf16>
    %cst_52 = arith.constant dense<0.000000e+00> : vector<8x8xf32>
    %127 = tpu.matmul %125, %126, %cst_52 {dimension_numbers = #tpu.dot_dimension_numbers<[1], [1], [0], [0], [0, 0, 1, 0], [], []>} : vector<8x8xbf16>, vector<8x8xbf16>, vector<8x8xf32> -> vector<8x8xf32>
    %cst_53 = arith.constant dense<0xFF800000> : vector<8xf32>
    %128 = vector.multi_reduction <maximumf>, %127, %cst_53 [1] : vector<8x8xf32> to vector<8xf32>
    %129 = vector.shape_cast %128 : vector<8xf32> to vector<8x1xf32>
    %130 = vector.broadcast %129 : vector<8x1xf32> to vector<8x8xf32>
    %131 = arith.subf %127, %130 : vector<8x8xf32>
    %132 = math.exp %131 : vector<8x8xf32>
    %cst_54 = arith.constant dense<0.000000e+00> : vector<8xf32>
    %133 = vector.multi_reduction <add>, %132, %cst_54 [1] : vector<8x8xf32> to vector<8xf32>
    %134 = vector.shape_cast %133 : vector<8xf32> to vector<8x1xf32>
    %135 = tpu.reciprocal %134 {approx = true} : vector<8x1xf32> -> vector<8x1xf32>
    %136 = vector.broadcast %135 : vector<8x1xf32> to vector<8x8xf32>
    %137 = arith.mulf %132, %136 : vector<8x8xf32>
    %138 = arith.truncf %137 : vector<8x8xf32> to vector<8x8xbf16>
    %139 = vector.extract_strided_slice %122 {offsets = [0, 0], sizes = [8, 8], strides = [1, 1]} : vector<8x32xbf16> to vector<8x8xbf16>
    %cst_55 = arith.constant dense<0.000000e+00> : vector<8x8xf32>
    %140 = tpu.matmul %138, %139, %cst_55 {dimension_numbers = #tpu.dot_dimension_numbers<[1], [0], [0], [1], [0, 0, 1, 1], [], []>} : vector<8x8xbf16>, vector<8x8xbf16>, vector<8x8xf32> -> vector<8x8xf32>
    %141 = arith.truncf %140 : vector<8x8xf32> to vector<8x8xbf16>
    %c0_56 = arith.constant 0 : index
    %c0_57 = arith.constant 0 : index
    %142 = vector.load %arg12[%c0_56, %c0_57] : memref<32x32xbf16, #tpu.memory_space<vmem>>, vector<8x32xbf16>
    %cst_58 = arith.constant dense<0.000000e+00> : vector<8x32xf32>
    %143 = tpu.matmul %141, %142, %cst_58 {dimension_numbers = #tpu.dot_dimension_numbers<[1], [0], [0], [1], [0, 0, 1, 1], [], []>} : vector<8x8xbf16>, vector<8x32xbf16>, vector<8x32xf32> -> vector<8x32xf32>
    %144 = arith.addf %123, %143 : vector<8x32xf32>
    %145 = vector.extract_strided_slice %120 {offsets = [0, 8], sizes = [8, 8], strides = [1, 1]} : vector<8x32xf32> to vector<8x8xf32>
    %146 = arith.truncf %145 : vector<8x8xf32> to vector<8x8xbf16>
    %147 = vector.extract_strided_slice %121 {offsets = [0, 8], sizes = [8, 8], strides = [1, 1]} : vector<8x32xbf16> to vector<8x8xbf16>
    %cst_59 = arith.constant dense<0.000000e+00> : vector<8x8xf32>
    %148 = tpu.matmul %146, %147, %cst_59 {dimension_numbers = #tpu.dot_dimension_numbers<[1], [1], [0], [0], [0, 0, 1, 0], [], []>} : vector<8x8xbf16>, vector<8x8xbf16>, vector<8x8xf32> -> vector<8x8xf32>
    %cst_60 = arith.constant dense<0xFF800000> : vector<8xf32>
    %149 = vector.multi_reduction <maximumf>, %148, %cst_60 [1] : vector<8x8xf32> to vector<8xf32>
    %150 = vector.shape_cast %149 : vector<8xf32> to vector<8x1xf32>
    %151 = vector.broadcast %150 : vector<8x1xf32> to vector<8x8xf32>
    %152 = arith.subf %148, %151 : vector<8x8xf32>
    %153 = math.exp %152 : vector<8x8xf32>
    %cst_61 = arith.constant dense<0.000000e+00> : vector<8xf32>
    %154 = vector.multi_reduction <add>, %153, %cst_61 [1] : vector<8x8xf32> to vector<8xf32>
    %155 = vector.shape_cast %154 : vector<8xf32> to vector<8x1xf32>
    %156 = tpu.reciprocal %155 {approx = true} : vector<8x1xf32> -> vector<8x1xf32>
    %157 = vector.broadcast %156 : vector<8x1xf32> to vector<8x8xf32>
    %158 = arith.mulf %153, %157 : vector<8x8xf32>
    %159 = arith.truncf %158 : vector<8x8xf32> to vector<8x8xbf16>
    %160 = vector.extract_strided_slice %122 {offsets = [0, 8], sizes = [8, 8], strides = [1, 1]} : vector<8x32xbf16> to vector<8x8xbf16>
    %cst_62 = arith.constant dense<0.000000e+00> : vector<8x8xf32>
    %161 = tpu.matmul %159, %160, %cst_62 {dimension_numbers = #tpu.dot_dimension_numbers<[1], [0], [0], [1], [0, 0, 1, 1], [], []>} : vector<8x8xbf16>, vector<8x8xbf16>, vector<8x8xf32> -> vector<8x8xf32>
    %162 = arith.truncf %161 : vector<8x8xf32> to vector<8x8xbf16>
    %c8_63 = arith.constant 8 : index
    %c0_64 = arith.constant 0 : index
    %163 = vector.load %arg12[%c8_63, %c0_64] : memref<32x32xbf16, #tpu.memory_space<vmem>>, vector<8x32xbf16>
    %cst_65 = arith.constant dense<0.000000e+00> : vector<8x32xf32>
    %164 = tpu.matmul %162, %163, %cst_65 {dimension_numbers = #tpu.dot_dimension_numbers<[1], [0], [0], [1], [0, 0, 1, 1], [], []>} : vector<8x8xbf16>, vector<8x32xbf16>, vector<8x32xf32> -> vector<8x32xf32>
    %165 = arith.addf %144, %164 : vector<8x32xf32>
    %166 = vector.extract_strided_slice %120 {offsets = [0, 16], sizes = [8, 8], strides = [1, 1]} : vector<8x32xf32> to vector<8x8xf32>
    %167 = arith.truncf %166 : vector<8x8xf32> to vector<8x8xbf16>
    %168 = vector.extract_strided_slice %121 {offsets = [0, 16], sizes = [8, 8], strides = [1, 1]} : vector<8x32xbf16> to vector<8x8xbf16>
    %cst_66 = arith.constant dense<0.000000e+00> : vector<8x8xf32>
    %169 = tpu.matmul %167, %168, %cst_66 {dimension_numbers = #tpu.dot_dimension_numbers<[1], [1], [0], [0], [0, 0, 1, 0], [], []>} : vector<8x8xbf16>, vector<8x8xbf16>, vector<8x8xf32> -> vector<8x8xf32>
    %cst_67 = arith.constant dense<0xFF800000> : vector<8xf32>
    %170 = vector.multi_reduction <maximumf>, %169, %cst_67 [1] : vector<8x8xf32> to vector<8xf32>
    %171 = vector.shape_cast %170 : vector<8xf32> to vector<8x1xf32>
    %172 = vector.broadcast %171 : vector<8x1xf32> to vector<8x8xf32>
    %173 = arith.subf %169, %172 : vector<8x8xf32>
    %174 = math.exp %173 : vector<8x8xf32>
    %cst_68 = arith.constant dense<0.000000e+00> : vector<8xf32>
    %175 = vector.multi_reduction <add>, %174, %cst_68 [1] : vector<8x8xf32> to vector<8xf32>
    %176 = vector.shape_cast %175 : vector<8xf32> to vector<8x1xf32>
    %177 = tpu.reciprocal %176 {approx = true} : vector<8x1xf32> -> vector<8x1xf32>
    %178 = vector.broadcast %177 : vector<8x1xf32> to vector<8x8xf32>
    %179 = arith.mulf %174, %178 : vector<8x8xf32>
    %180 = arith.truncf %179 : vector<8x8xf32> to vector<8x8xbf16>
    %181 = vector.extract_strided_slice %122 {offsets = [0, 16], sizes = [8, 8], strides = [1, 1]} : vector<8x32xbf16> to vector<8x8xbf16>
    %cst_69 = arith.constant dense<0.000000e+00> : vector<8x8xf32>
    %182 = tpu.matmul %180, %181, %cst_69 {dimension_numbers = #tpu.dot_dimension_numbers<[1], [0], [0], [1], [0, 0, 1, 1], [], []>} : vector<8x8xbf16>, vector<8x8xbf16>, vector<8x8xf32> -> vector<8x8xf32>
    %183 = arith.truncf %182 : vector<8x8xf32> to vector<8x8xbf16>
    %c16_70 = arith.constant 16 : index
    %c0_71 = arith.constant 0 : index
    %184 = vector.load %arg12[%c16_70, %c0_71] : memref<32x32xbf16, #tpu.memory_space<vmem>>, vector<8x32xbf16>
    %cst_72 = arith.constant dense<0.000000e+00> : vector<8x32xf32>
    %185 = tpu.matmul %183, %184, %cst_72 {dimension_numbers = #tpu.dot_dimension_numbers<[1], [0], [0], [1], [0, 0, 1, 1], [], []>} : vector<8x8xbf16>, vector<8x32xbf16>, vector<8x32xf32> -> vector<8x32xf32>
    %186 = arith.addf %165, %185 : vector<8x32xf32>
    %187 = vector.extract_strided_slice %120 {offsets = [0, 24], sizes = [8, 8], strides = [1, 1]} : vector<8x32xf32> to vector<8x8xf32>
    %188 = arith.truncf %187 : vector<8x8xf32> to vector<8x8xbf16>
    %189 = vector.extract_strided_slice %121 {offsets = [0, 24], sizes = [8, 8], strides = [1, 1]} : vector<8x32xbf16> to vector<8x8xbf16>
    %cst_73 = arith.constant dense<0.000000e+00> : vector<8x8xf32>
    %190 = tpu.matmul %188, %189, %cst_73 {dimension_numbers = #tpu.dot_dimension_numbers<[1], [1], [0], [0], [0, 0, 1, 0], [], []>} : vector<8x8xbf16>, vector<8x8xbf16>, vector<8x8xf32> -> vector<8x8xf32>
    %cst_74 = arith.constant dense<0xFF800000> : vector<8xf32>
    %191 = vector.multi_reduction <maximumf>, %190, %cst_74 [1] : vector<8x8xf32> to vector<8xf32>
    %192 = vector.shape_cast %191 : vector<8xf32> to vector<8x1xf32>
    %193 = vector.broadcast %192 : vector<8x1xf32> to vector<8x8xf32>
    %194 = arith.subf %190, %193 : vector<8x8xf32>
    %195 = math.exp %194 : vector<8x8xf32>
    %cst_75 = arith.constant dense<0.000000e+00> : vector<8xf32>
    %196 = vector.multi_reduction <add>, %195, %cst_75 [1] : vector<8x8xf32> to vector<8xf32>
    %197 = vector.shape_cast %196 : vector<8xf32> to vector<8x1xf32>
    %198 = tpu.reciprocal %197 {approx = true} : vector<8x1xf32> -> vector<8x1xf32>
    %199 = vector.broadcast %198 : vector<8x1xf32> to vector<8x8xf32>
    %200 = arith.mulf %195, %199 : vector<8x8xf32>
    %201 = arith.truncf %200 : vector<8x8xf32> to vector<8x8xbf16>
    %202 = vector.extract_strided_slice %122 {offsets = [0, 24], sizes = [8, 8], strides = [1, 1]} : vector<8x32xbf16> to vector<8x8xbf16>
    %cst_76 = arith.constant dense<0.000000e+00> : vector<8x8xf32>
    %203 = tpu.matmul %201, %202, %cst_76 {dimension_numbers = #tpu.dot_dimension_numbers<[1], [0], [0], [1], [0, 0, 1, 1], [], []>} : vector<8x8xbf16>, vector<8x8xbf16>, vector<8x8xf32> -> vector<8x8xf32>
    %204 = arith.truncf %203 : vector<8x8xf32> to vector<8x8xbf16>
    %c24_77 = arith.constant 24 : index
    %c0_78 = arith.constant 0 : index
    %205 = vector.load %arg12[%c24_77, %c0_78] : memref<32x32xbf16, #tpu.memory_space<vmem>>, vector<8x32xbf16>
    %cst_79 = arith.constant dense<0.000000e+00> : vector<8x32xf32>
    %206 = tpu.matmul %204, %205, %cst_79 {dimension_numbers = #tpu.dot_dimension_numbers<[1], [0], [0], [1], [0, 0, 1, 1], [], []>} : vector<8x8xbf16>, vector<8x32xbf16>, vector<8x32xf32> -> vector<8x32xf32>
    %207 = arith.addf %186, %206 : vector<8x32xf32>
    %208 = arith.addf %117, %207 : vector<8x32xf32>
    %cst_80 = arith.constant dense<0.000000e+00> : vector<8xf32>
    %209 = vector.multi_reduction <add>, %208, %cst_80 [1] : vector<8x32xf32> to vector<8xf32>
    %210 = vector.shape_cast %209 : vector<8xf32> to vector<8x1xf32>
    %cst_81 = arith.constant 3.200000e+01 : f32
    %211 = vector.broadcast %cst_81 : f32 to vector<8x1xf32>
    %212 = arith.divf %210, %211 : vector<8x1xf32>
    %213 = vector.broadcast %212 : vector<8x1xf32> to vector<8x32xf32>
    %214 = arith.subf %208, %213 : vector<8x32xf32>
    %215 = arith.mulf %214, %214 : vector<8x32xf32>
    %cst_82 = arith.constant dense<0.000000e+00> : vector<8xf32>
    %216 = vector.multi_reduction <add>, %215, %cst_82 [1] : vector<8x32xf32> to vector<8xf32>
    %217 = vector.shape_cast %216 : vector<8xf32> to vector<8x1xf32>
    %cst_83 = arith.constant 3.200000e+01 : f32
    %218 = vector.broadcast %cst_83 : f32 to vector<8x1xf32>
    %219 = arith.divf %217, %218 : vector<8x1xf32>
    %cst_84 = arith.constant 9.99999974E-6 : f32
    %220 = vector.broadcast %cst_84 : f32 to vector<8x1xf32>
    %221 = arith.addf %219, %220 : vector<8x1xf32>
    %222 = math.rsqrt %221 : vector<8x1xf32>
    %223 = vector.broadcast %222 : vector<8x1xf32> to vector<8x32xf32>
    %224 = arith.mulf %214, %223 : vector<8x32xf32>
    %c0_85 = arith.constant 0 : index
    %c0_86 = arith.constant 0 : index
    %225 = vector.load %arg19[%c0_85, %c0_86] : memref<1x32xf32, #tpu.memory_space<vmem>>, vector<1x32xf32>
    %226 = vector.broadcast %225 : vector<1x32xf32> to vector<8x32xf32>
    %227 = arith.mulf %224, %226 : vector<8x32xf32>
    %c0_87 = arith.constant 0 : index
    %c0_88 = arith.constant 0 : index
    %228 = vector.load %arg20[%c0_87, %c0_88] : memref<1x32xf32, #tpu.memory_space<vmem>>, vector<1x32xf32>
    %229 = vector.broadcast %228 : vector<1x32xf32> to vector<8x32xf32>
    %230 = arith.addf %227, %229 : vector<8x32xf32>
    %231 = arith.truncf %230 : vector<8x32xf32> to vector<8x32xbf16>
    %c0_89 = arith.constant 0 : index
    %c0_90 = arith.constant 0 : index
    %232 = vector.load %arg13[%c0_89, %c0_90] : memref<32x64xbf16, #tpu.memory_space<vmem>>, vector<32x64xbf16>
    %cst_91 = arith.constant dense<0.000000e+00> : vector<8x64xf32>
    %233 = tpu.matmul %231, %232, %cst_91 {dimension_numbers = #tpu.dot_dimension_numbers<[1], [0], [0], [1], [0, 0, 1, 1], [], []>} : vector<8x32xbf16>, vector<32x64xbf16>, vector<8x64xf32> -> vector<8x64xf32>
    %c0_92 = arith.constant 0 : index
    %c0_93 = arith.constant 0 : index
    %234 = vector.load %arg14[%c0_92, %c0_93] : memref<1x64xf32, #tpu.memory_space<vmem>>, vector<1x64xf32>
    %235 = vector.broadcast %234 : vector<1x64xf32> to vector<8x64xf32>
    %236 = arith.addf %233, %235 : vector<8x64xf32>
    %cst_94 = arith.constant 0.000000e+00 : f32
    %237 = vector.broadcast %cst_94 : f32 to vector<8x64xf32>
    %238 = arith.maximumf %236, %237 : vector<8x64xf32>
    %239 = arith.truncf %238 : vector<8x64xf32> to vector<8x64xbf16>
    %c0_95 = arith.constant 0 : index
    %c0_96 = arith.constant 0 : index
    %240 = vector.load %arg15[%c0_95, %c0_96] : memref<64x32xbf16, #tpu.memory_space<vmem>>, vector<64x32xbf16>
    %cst_97 = arith.constant dense<0.000000e+00> : vector<8x32xf32>
    %241 = tpu.matmul %239, %240, %cst_97 {dimension_numbers = #tpu.dot_dimension_numbers<[1], [0], [0], [1], [0, 0, 1, 1], [], []>} : vector<8x64xbf16>, vector<64x32xbf16>, vector<8x32xf32> -> vector<8x32xf32>
    %c0_98 = arith.constant 0 : index
    %c0_99 = arith.constant 0 : index
    %242 = vector.load %arg16[%c0_98, %c0_99] : memref<1x32xf32, #tpu.memory_space<vmem>>, vector<1x32xf32>
    %243 = vector.broadcast %242 : vector<1x32xf32> to vector<8x32xf32>
    %244 = arith.addf %241, %243 : vector<8x32xf32>
    %245 = arith.addf %230, %244 : vector<8x32xf32>
    %cst_100 = arith.constant dense<0.000000e+00> : vector<8xf32>
    %246 = vector.multi_reduction <add>, %245, %cst_100 [1] : vector<8x32xf32> to vector<8xf32>
    %247 = vector.shape_cast %246 : vector<8xf32> to vector<8x1xf32>
    %cst_101 = arith.constant 3.200000e+01 : f32
    %248 = vector.broadcast %cst_101 : f32 to vector<8x1xf32>
    %249 = arith.divf %247, %248 : vector<8x1xf32>
    %250 = vector.broadcast %249 : vector<8x1xf32> to vector<8x32xf32>
    %251 = arith.subf %245, %250 : vector<8x32xf32>
    %252 = arith.mulf %251, %251 : vector<8x32xf32>
    %cst_102 = arith.constant dense<0.000000e+00> : vector<8xf32>
    %253 = vector.multi_reduction <add>, %252, %cst_102 [1] : vector<8x32xf32> to vector<8xf32>
    %254 = vector.shape_cast %253 : vector<8xf32> to vector<8x1xf32>
    %cst_103 = arith.constant 3.200000e+01 : f32
    %255 = vector.broadcast %cst_103 : f32 to vector<8x1xf32>
    %256 = arith.divf %254, %255 : vector<8x1xf32>
    %cst_104 = arith.constant 9.99999974E-6 : f32
    %257 = vector.broadcast %cst_104 : f32 to vector<8x1xf32>
    %258 = arith.addf %256, %257 : vector<8x1xf32>
    %259 = math.rsqrt %258 : vector<8x1xf32>
    %260 = vector.broadcast %259 : vector<8x1xf32> to vector<8x32xf32>
    %261 = arith.mulf %251, %260 : vector<8x32xf32>
    %c0_105 = arith.constant 0 : index
    %c0_106 = arith.constant 0 : index
    %262 = vector.load %arg21[%c0_105, %c0_106] : memref<1x32xf32, #tpu.memory_space<vmem>>, vector<1x32xf32>
    %263 = vector.broadcast %262 : vector<1x32xf32> to vector<8x32xf32>
    %264 = arith.mulf %261, %263 : vector<8x32xf32>
    %c0_107 = arith.constant 0 : index
    %c0_108 = arith.constant 0 : index
    %265 = vector.load %arg22[%c0_107, %c0_108] : memref<1x32xf32, #tpu.memory_space<vmem>>, vector<1x32xf32>
    %266 = vector.broadcast %265 : vector<1x32xf32> to vector<8x32xf32>
    %267 = arith.addf %264, %266 : vector<8x32xf32>
    %c0_109 = arith.constant 0 : index
    %c0_110 = arith.constant 0 : index
    %c0_111 = arith.constant 0 : index
    %268 = vector.load %arg23[%c0_109, %c0_110, %c0_111] : memref<1x8x32xf32, #tpu.memory_space<vmem>>, vector<1x8x32xf32>
    %269 = vector.shape_cast %268 : vector<1x8x32xf32> to vector<8x32xf32>
    %270 = vector.shape_cast %267 : vector<8x32xf32> to vector<1x8x32xf32>
    tpu.vector_store %arg23[%c0_109, %c0_110, %c0_111], %270 {strides = array<i32>} : memref<1x8x32xf32, #tpu.memory_space<vmem>>, vector<1x8x32xf32>,
    return
  }
  func.func @transform_0(%arg0: i32, %arg1: i32) -> (i32, i32, i32) {
    %c0_i32 = arith.constant 0 : i32
    %c0_i32_0 = arith.constant 0 : i32
    return %arg0, %arg1, %c0_i32 : i32, i32, i32
  }
  func.func @transform_1(%arg0: i32, %arg1: i32) -> (i32, i32, i32) {
    %c0_i32 = arith.constant 0 : i32
    %c0_i32_0 = arith.constant 0 : i32
    %c0_i32_1 = arith.constant 0 : i32
    return %arg0, %c0_i32, %c0_i32_0 : i32, i32, i32
  }
  func.func @transform_2(%arg0: i32, %arg1: i32) -> (i32, i32, i32) {
    %c0_i32 = arith.constant 0 : i32
    %c0_i32_0 = arith.constant 0 : i32
    %c0_i32_1 = arith.constant 0 : i32
    return %arg0, %c0_i32, %c0_i32_0 : i32, i32, i32
  }
  func.func @transform_3(%arg0: i32, %arg1: i32) -> (i32, i32) {
    %c0_i32 = arith.constant 0 : i32
    %c0_i32_0 = arith.constant 0 : i32
    %c0_i32_1 = arith.constant 0 : i32
    return %c0_i32, %c0_i32_0 : i32, i32
  }
  func.func @transform_4(%arg0: i32, %arg1: i32) -> (i32, i32) {
    %c0_i32 = arith.constant 0 : i32
    %c0_i32_0 = arith.constant 0 : i32
    %c0_i32_1 = arith.constant 0 : i32
    return %c0_i32, %c0_i32_0 : i32, i32
  }
  func.func @transform_5(%arg0: i32, %arg1: i32) -> (i32, i32) {
    %c0_i32 = arith.constant 0 : i32
    %c0_i32_0 = arith.constant 0 : i32
    %c0_i32_1 = arith.constant 0 : i32
    return %c0_i32, %c0_i32_0 : i32, i32
  }
  func.func @transform_6(%arg0: i32, %arg1: i32) -> (i32, i32) {
    %c0_i32 = arith.constant 0 : i32
    %c0_i32_0 = arith.constant 0 : i32
    %c0_i32_1 = arith.constant 0 : i32
    return %c0_i32, %c0_i32_0 : i32, i32
  }
  func.func @transform_7(%arg0: i32, %arg1: i32) -> (i32, i32) {
    %c0_i32 = arith.constant 0 : i32
    %c0_i32_0 = arith.constant 0 : i32
    %c0_i32_1 = arith.constant 0 : i32
    return %c0_i32, %c0_i32_0 : i32, i32
  }
  func.func @transform_8(%arg0: i32, %arg1: i32) -> (i32, i32) {
    %c0_i32 = arith.constant 0 : i32
    %c0_i32_0 = arith.constant 0 : i32
    %c0_i32_1 = arith.constant 0 : i32
    return %c0_i32, %c0_i32_0 : i32, i32
  }
  func.func @transform_9(%arg0: i32, %arg1: i32) -> (i32, i32) {
    %c0_i32 = arith.constant 0 : i32
    %c0_i32_0 = arith.constant 0 : i32
    %c0_i32_1 = arith.constant 0 : i32
    return %c0_i32, %c0_i32_0 : i32, i32
  }
  func.func @transform_10(%arg0: i32, %arg1: i32) -> (i32, i32) {
    %c0_i32 = arith.constant 0 : i32
    %c0_i32_0 = arith.constant 0 : i32
    %c0_i32_1 = arith.constant 0 : i32
    return %c0_i32, %c0_i32_0 : i32, i32
  }
  func.func @transform_11(%arg0: i32, %arg1: i32) -> (i32, i32) {
    %c0_i32 = arith.constant 0 : i32
    %c0_i32_0 = arith.constant 0 : i32
    %c0_i32_1 = arith.constant 0 : i32
    return %c0_i32, %c0_i32_0 : i32, i32
  }
  func.func @transform_12(%arg0: i32, %arg1: i32) -> (i32, i32) {
    %c0_i32 = arith.constant 0 : i32
    %c0_i32_0 = arith.constant 0 : i32
    %c0_i32_1 = arith.constant 0 : i32
    return %c0_i32, %c0_i32_0 : i32, i32
  }
  func.func @transform_13(%arg0: i32, %arg1: i32) -> (i32, i32) {
    %c0_i32 = arith.constant 0 : i32
    %c0_i32_0 = arith.constant 0 : i32
    %c0_i32_1 = arith.constant 0 : i32
    return %c0_i32, %c0_i32_0 : i32, i32
  }
  func.func @transform_14(%arg0: i32, %arg1: i32) -> (i32, i32) {
    %c0_i32 = arith.constant 0 : i32
    %c0_i32_0 = arith.constant 0 : i32
    %c0_i32_1 = arith.constant 0 : i32
    return %c0_i32, %c0_i32_0 : i32, i32
  }
  func.func @transform_15(%arg0: i32, %arg1: i32) -> (i32, i32) {
    %c0_i32 = arith.constant 0 : i32
    %c0_i32_0 = arith.constant 0 : i32
    %c0_i32_1 = arith.constant 0 : i32
    return %c0_i32, %c0_i32_0 : i32, i32
  }
  func.func @transform_16(%arg0: i32, %arg1: i32) -> (i32, i32) {
    %c0_i32 = arith.constant 0 : i32
    %c0_i32_0 = arith.constant 0 : i32
    %c0_i32_1 = arith.constant 0 : i32
    return %c0_i32, %c0_i32_0 : i32, i32
  }
  func.func @transform_17(%arg0: i32, %arg1: i32) -> (i32, i32) {
    %c0_i32 = arith.constant 0 : i32
    %c0_i32_0 = arith.constant 0 : i32
    %c0_i32_1 = arith.constant 0 : i32
    return %c0_i32, %c0_i32_0 : i32, i32
  }
  func.func @transform_18(%arg0: i32, %arg1: i32) -> (i32, i32) {
    %c0_i32 = arith.constant 0 : i32
    %c0_i32_0 = arith.constant 0 : i32
    %c0_i32_1 = arith.constant 0 : i32
    return %c0_i32, %c0_i32_0 : i32, i32
  }
  func.func @transform_19(%arg0: i32, %arg1: i32) -> (i32, i32) {
    %c0_i32 = arith.constant 0 : i32
    %c0_i32_0 = arith.constant 0 : i32
    %c0_i32_1 = arith.constant 0 : i32
    return %c0_i32, %c0_i32_0 : i32, i32
  }
  func.func @transform_20(%arg0: i32, %arg1: i32) -> (i32, i32) {
    %c0_i32 = arith.constant 0 : i32
    %c0_i32_0 = arith.constant 0 : i32
    %c0_i32_1 = arith.constant 0 : i32
    return %c0_i32, %c0_i32_0 : i32, i32
  }
  func.func @transform_21(%arg0: i32, %arg1: i32) -> (i32, i32, i32) {
    %c0_i32 = arith.constant 0 : i32
    %c0_i32_0 = arith.constant 0 : i32
    return %arg0, %arg1, %c0_i32 : i32, i32, i32
  }
}

</mosaic_0001>

<llo_original>
// kernel: tpu_custom_call.1
$region0: #{tpu_custom_call.1}
  #allocation0 [shape = 'u32[]', space=smem, size = 0x4, offset = 0x4, fixed_abs, tag = 'smem constant byte address 0x4 - core index']
  #allocation1 [shape = 'u32[144,128]{1,0:T(1,128)}', space=vmem, size = 0x12000, scoped, tag = 'internal scratch']
  #allocation2 [shape = 'bf16[8,32]{1,0:T(8,128)(2,1)}', space=vmem, size = 0x800, scoped, tag = 'scratch operand']
  #allocation3 [shape = 'bf16[8,32]{1,0:T(8,128)(2,1)}', space=vmem, size = 0x800, scoped, tag = 'scratch operand']
  #allocation4 [shape = 'bf16[8,32]{1,0:T(8,128)(2,1)}', space=vmem, size = 0x800, scoped, tag = 'scratch operand']
  #allocation5 [shape = 'bf16[8,32]{1,0:T(8,128)(2,1)}', space=vmem, size = 0x800, scoped, tag = 'scratch operand']
  %s0 = inlined_call_operand.vmem [shape: f32[2,8,32], index: 0, kind: input, shape index: {}]
  %s1 = inlined_call_operand.vmem [shape: f32[2,8,32], index: 1, kind: input, shape index: {}]
  %s2 = inlined_call_operand.vmem [shape: f32[2,8,32], index: 2, kind: input, shape index: {}]
  %s3 = inlined_call_operand.hbm [shape: bf16[32,32], index: 3, kind: input, shape index: {}]
  %s4 = inlined_call_operand.hbm [shape: bf16[32,32], index: 4, kind: input, shape index: {}]
  %s5 = inlined_call_operand.hbm [shape: bf16[32,32], index: 5, kind: input, shape index: {}]
  %s6 = inlined_call_operand.hbm [shape: bf16[32,32], index: 6, kind: input, shape index: {}]
  %s7 = inlined_call_operand.hbm [shape: bf16[32,32], index: 7, kind: input, shape index: {}]
  %s8 = inlined_call_operand.hbm [shape: bf16[32,32], index: 8, kind: input, shape index: {}]
  %s9 = inlined_call_operand.vmem [shape: bf16[32,32], index: 9, kind: input, shape index: {}]
  %s10 = inlined_call_operand.hbm [shape: bf16[32,32], index: 10, kind: input, shape index: {}]
  %s11 = inlined_call_operand.hbm [shape: bf16[32,64], index: 11, kind: input, shape index: {}]
  %s12 = inlined_call_operand.vmem [shape: f32[1,64], index: 12, kind: input, shape index: {}]
  %s13 = inlined_call_operand.vmem [shape: bf16[64,32], index: 13, kind: input, shape index: {}]
  %s14 = inlined_call_operand.vmem [shape: f32[1,32], index: 14, kind: input, shape index: {}]
  %s15 = inlined_call_operand.vmem [shape: f32[1,32], index: 15, kind: input, shape index: {}]
  %s16 = inlined_call_operand.vmem [shape: f32[1,32], index: 16, kind: input, shape index: {}]
  %s17 = inlined_call_operand.vmem [shape: f32[1,32], index: 17, kind: input, shape index: {}]
  %s18 = inlined_call_operand.vmem [shape: f32[1,32], index: 18, kind: input, shape index: {}]
  %s19 = inlined_call_operand.vmem [shape: f32[1,32], index: 19, kind: input, shape index: {}]
  %s20 = inlined_call_operand.vmem [shape: f32[1,32], index: 20, kind: input, shape index: {}]
  %s21 = inlined_call_operand.hbm [shape: f32[2,8,32], index: 21, kind: output, shape index: {}]
  %s22 = sld [smem:[#allocation0]]
  $region153: #{tpu_custom_call.1} parent=0
    _
  %s24 = ssub.s32 1, %s22
  %s25 = scalar_select 0, %s24, %s22
  $region1: #{tpu_custom_call.1} parent=0
    #allocation6 [shape = 'u8[8192]{0}', space=vmem, size = 0x2000, scoped, tag = 'input window, operand 3, single buffered']
    #allocation7 [shape = 's32[2]{0}', space=sflag, size = 0x8, scoped, tag = 'scoped memory for tpu_custom_call.1']
    #allocation8 [shape = 's32[2]{0}', space=sflag, size = 0x8, scoped, tag = 'scoped memory for tpu_custom_call.1']
    #allocation9 [shape = 'u8[8192]{0}', space=vmem, size = 0x2000, scoped, tag = 'input window, operand 4, single buffered']
    #allocation10 [shape = 's32[1]{0}', space=sflag, size = 0x4, scoped, tag = 'scoped memory for tpu_custom_call.1']
    #allocation11 [shape = 'u8[8192]{0}', space=vmem, size = 0x2000, scoped, tag = 'input window, operand 5, single buffered']
    #allocation12 [shape = 'u8[8192]{0}', space=vmem, size = 0x2000, scoped, tag = 'input window, operand 6, single buffered']
    #allocation13 [shape = 's32[1]{0}', space=sflag, size = 0x4, scoped, tag = 'scoped memory for tpu_custom_call.1']
    #allocation14 [shape = 'u8[8192]{0}', space=vmem, size = 0x2000, scoped, tag = 'input window, operand 7, single buffered']
    #allocation15 [shape = 'u8[8192]{0}', space=vmem, size = 0x2000, scoped, tag = 'input window, operand 8, single buffered']
    #allocation16 [shape = 's32[1]{0}', space=sflag, size = 0x4, scoped, tag = 'scoped memory for tpu_custom_call.1']
    #allocation17 [shape = 'u8[8192]{0}', space=vmem, size = 0x2000, scoped, tag = 'input window, operand 10, single buffered']
    #allocation18 [shape = 'u8[8192]{0}', space=vmem, size = 0x2000, scoped, tag = 'input window, operand 11, single buffered']
    #allocation19 [shape = 's32[1]{0}', space=sflag, size = 0x4, scoped, tag = 'scoped memory for tpu_custom_call.1']
    #allocation20 [shape = 'u8[8192]{0}', space=vmem, size = 0x2000, scoped, tag = 'output window, operand 0']
    %26 = vsyncpa [#allocation7], 0
    %27 = vsyncpa [#allocation10], 0
    %28 = vsyncpa [#allocation13], 0
    %29 = vsyncpa [#allocation16], 0
    %30 = vsyncpa [#allocation19], 0
    %31 = vsyncpa [#allocation8], 0
    %s32 = scalar_lea.sflag [#allocation8], 1
    %33 = vsyncpa %s32, 0
    loop: start=0, step=1, limit=4
    $region2: #{tpu_custom_call.1} parent=1 // loop_pre_header
      _
    $region3: #{tpu_custom_call.1} parent=1 // loop_header
      %s35 = sphi 0, %s39
      %p36 = scmp.ge.s32.totalorder %s35, 4
      %s42 = sphi 0, %s54
      %s43 = sphi 0, %s50
      %s44 = sphi 0, %s42
      %s45 = sphi 0, %s43
      %s46 = sphi 0, %s44
      %s47 = sphi 0, %s45
      %s59 = sphi 0, %s61
      %s62 = sphi 0, %s59
      %s63 = sphi 0, %s62
      %s79 = sphi 0, %s63
      %s85 = sphi 0, %s87
      %s88 = sphi 0, %s85
      %s89 = sphi 0, %s88
      %s105 = sphi 0, %s89
      %s111 = sphi 0, %s113
      %s114 = sphi 0, %s111
      %s115 = sphi 0, %s114
      %s131 = sphi 0, %s115
      %s135 = sphi 0, %s135
      %s137 = sphi 0, %s135
      %s138 = sphi 0, %s137
      %s152 = sphi 0, %s138
      %s156 = sphi 0, %s156
      %s158 = sphi 0, %s156
      %s159 = sphi 0, %s158
      %s173 = sphi 0, %s159
      %s177 = sphi 0, %s177
      %s179 = sphi 0, %s177
      %s180 = sphi 0, %s179
      %s194 = sphi 0, %s180
      %s198 = sphi 0, %s198
      %s200 = sphi 0, %s198
      %s201 = sphi 0, %s200
      %s215 = sphi 0, %s201
      %s219 = sphi 0, %s219
      %s221 = sphi 0, %s219
      %s222 = sphi 0, %s221
      %s236 = sphi 0, %s222
      %s240 = sphi 0, %s240
      %s242 = sphi 0, %s240
      %s243 = sphi 0, %s242
      %s257 = sphi 0, %s243
      %s261 = sphi 0, %s261
      %s263 = sphi 0, %s261
      %s264 = sphi 0, %s263
      %s278 = sphi 0, %s264
      %s282 = sphi 0, %s282
      %s284 = sphi 0, %s282
      %s285 = sphi 0, %s284
      %s299 = sphi 0, %s285
      %s303 = sphi 0, %s303
      %s305 = sphi 0, %s303
      %s306 = sphi 0, %s305
      %s320 = sphi 0, %s306
      %s324 = sphi 0, %s324
      %s326 = sphi 0, %s324
      %s327 = sphi 0, %s326
      %s341 = sphi 0, %s327
      %s345 = sphi 0, %s345
      %s347 = sphi 0, %s345
      %s348 = sphi 0, %s347
      %s362 = sphi 0, %s348
      %s366 = sphi 0, %s366
      %s368 = sphi 0, %s366
      %s369 = sphi 0, %s368
      %s383 = sphi 0, %s369
      %s387 = sphi 0, %s387
      %s389 = sphi 0, %s387
      %s390 = sphi 0, %s389
      %s404 = sphi 0, %s390
      %s408 = sphi 0, %s408
      %s410 = sphi 0, %s408
      %s411 = sphi 0, %s410
      %s425 = sphi 0, %s411
      %s429 = sphi 0, %s429
      %s431 = sphi 0, %s429
      %s432 = sphi 0, %s431
      %s446 = sphi 0, %s432
      %s450 = sphi 0, %s450
      %s452 = sphi 0, %s450
      %s453 = sphi 0, %s452
      %s467 = sphi 0, %s453
      %s471 = sphi 0, %s471
      %s473 = sphi 0, %s471
      %s474 = sphi 0, %s473
      %s488 = sphi 0, %s474
      %s492 = sphi 0, %s492
      %s494 = sphi 0, %s492
      %s495 = sphi 0, %s494
      %s509 = sphi 0, %s495
      %s517 = sphi 0, %s519
      %s520 = sphi 0, %s517
      %s521 = sphi 0, %s520
      %s537 = sphi 0, %s521
    $region4: #{tpu_custom_call.1} parent=1 // loop_header_branch
      %38 = sbr.rel (%p36) target = $region8
    $region5: #{tpu_custom_call.1} parent=1 // loop_body
      %s40 = ssub.s32 %s35, 1
      %s41 = ssub.s32 %s35, 2
      %s48 = sadd.s32 1, %s43
      %p49 = scmp.ge.s32.totalorder %s48, 1
      %s50 = scalar_select %p49, 0, %s48
      %s51 = sadd.s32 1, %s42
      %s52 = scalar_select %p49, %s51, %s42
      %p53 = scmp.ge.s32.totalorder %s52, 2
      %s54 = scalar_select %p53, 0, %s52
      %s55 = ssub.s32 %s42, %s54
      %s56 = ssub.s32 %s43, %s50
      %s57 = sor.u32 %s55, %s56
      %p58 = scmp.eq.s32.totalorder %s57, 0
      %s60 = sadd.s32 %s59, 1
      %s61 = scalar_select %p58, %s59, %s60
      %p64 = pneg %p58
      %p65 = scmp.eq.s32.totalorder %s35, 1
      %p66 = por %p64, %p65
      %p67 = scmp.ne.s32.totalorder %s59, %s62
      %p68 = scmp.eq.s32.totalorder %s35, 0
      %p69 = por %p67, %p68
      %p70 = scmp.ne.s32.totalorder %s59, %s62
      %p71 = scmp.eq.s32.totalorder %s40, 1
      %p72 = por %p70, %p71
      %p73 = scmp.ne.s32.totalorder %s62, %s63
      %p74 = scmp.eq.s32.totalorder %s40, 0
      %p75 = por %p73, %p74
      %p76 = scmp.ne.s32.totalorder %s62, %s63
      %p77 = scmp.eq.s32.totalorder %s41, 1
      %p78 = por %p76, %p77
      %p80 = scmp.ne.s32.totalorder %s63, %s79
      %p81 = scmp.eq.s32.totalorder %s41, 0
      %p82 = por %p80, %p81
      %s83 = ssub.s32 %s42, %s54
      %p84 = scmp.eq.s32.totalorder %s83, 0
      %s86 = sadd.s32 %s85, 1
      %s87 = scalar_select %p84, %s85, %s86
      %p90 = pneg %p84
      %p91 = scmp.eq.s32.totalorder %s35, 1
      %p92 = por %p90, %p91
      %p93 = scmp.ne.s32.totalorder %s85, %s88
      %p94 = scmp.eq.s32.totalorder %s35, 0
      %p95 = por %p93, %p94
      %p96 = scmp.ne.s32.totalorder %s85, %s88
      %p97 = scmp.eq.s32.totalorder %s40, 1
      %p98 = por %p96, %p97
      %p99 = scmp.ne.s32.totalorder %s88, %s89
      %p100 = scmp.eq.s32.totalorder %s40, 0
      %p101 = por %p99, %p100
      %p102 = scmp.ne.s32.totalorder %s88, %s89
      %p103 = scmp.eq.s32.totalorder %s41, 1
      %p104 = por %p102, %p103
      %p106 = scmp.ne.s32.totalorder %s89, %s105
      %p107 = scmp.eq.s32.totalorder %s41, 0
      %p108 = por %p106, %p107
      %s109 = ssub.s32 %s42, %s54
      %p110 = scmp.eq.s32.totalorder %s109, 0
      %s112 = sadd.s32 %s111, 1
      %s113 = scalar_select %p110, %s111, %s112
      %p116 = pneg %p110
      %p117 = scmp.eq.s32.totalorder %s35, 1
      %p118 = por %p116, %p117
      %p119 = scmp.ne.s32.totalorder %s111, %s114
      %p120 = scmp.eq.s32.totalorder %s35, 0
      %p121 = por %p119, %p120
      %p122 = scmp.ne.s32.totalorder %s111, %s114
      %p123 = scmp.eq.s32.totalorder %s40, 1
      %p124 = por %p122, %p123
      %p125 = scmp.ne.s32.totalorder %s114, %s115
      %p126 = scmp.eq.s32.totalorder %s40, 0
      %p127 = por %p125, %p126
      %p128 = scmp.ne.s32.totalorder %s114, %s115
      %p129 = scmp.eq.s32.totalorder %s41, 1
      %p130 = por %p128, %p129
      %p132 = scmp.ne.s32.totalorder %s115, %s131
      %p133 = scmp.eq.s32.totalorder %s41, 0
      %p134 = por %p132, %p133
      %s136 = sadd.s32 %s135, 1
      %p139 = scmp.eq.s32.totalorder %s35, 1
      %p140 = scmp.ne.s32.totalorder %s135, %s137
      %p141 = scmp.eq.s32.totalorder %s35, 0
      %p142 = por %p140, %p141
      %p143 = scmp.ne.s32.totalorder %s135, %s137
      %p144 = scmp.eq.s32.totalorder %s40, 1
      %p145 = por %p143, %p144
      %p146 = scmp.ne.s32.totalorder %s137, %s138
      %p147 = scmp.eq.s32.totalorder %s40, 0
      %p148 = por %p146, %p147
      %p149 = scmp.ne.s32.totalorder %s137, %s138
      %p150 = scmp.eq.s32.totalorder %s41, 1
      %p151 = por %p149, %p150
      %p153 = scmp.ne.s32.totalorder %s138, %s152
      %p154 = scmp.eq.s32.totalorder %s41, 0
      %p155 = por %p153, %p154
      %s157 = sadd.s32 %s156, 1
      %p160 = scmp.eq.s32.totalorder %s35, 1
      %p161 = scmp.ne.s32.totalorder %s156, %s158
      %p162 = scmp.eq.s32.totalorder %s35, 0
      %p163 = por %p161, %p162
      %p164 = scmp.ne.s32.totalorder %s156, %s158
      %p165 = scmp.eq.s32.totalorder %s40, 1
      %p166 = por %p164, %p165
      %p167 = scmp.ne.s32.totalorder %s158, %s159
      %p168 = scmp.eq.s32.totalorder %s40, 0
      %p169 = por %p167, %p168
      %p170 = scmp.ne.s32.totalorder %s158, %s159
      %p171 = scmp.eq.s32.totalorder %s41, 1
      %p172 = por %p170, %p171
      %p174 = scmp.ne.s32.totalorder %s159, %s173
      %p175 = scmp.eq.s32.totalorder %s41, 0
      %p176 = por %p174, %p175
      %s178 = sadd.s32 %s177, 1
      %p181 = scmp.eq.s32.totalorder %s35, 1
      %p182 = scmp.ne.s32.totalorder %s177, %s179
      %p183 = scmp.eq.s32.totalorder %s35, 0
      %p184 = por %p182, %p183
      %p185 = scmp.ne.s32.totalorder %s177, %s179
      %p186 = scmp.eq.s32.totalorder %s40, 1
      %p187 = por %p185, %p186
      %p188 = scmp.ne.s32.totalorder %s179, %s180
      %p189 = scmp.eq.s32.totalorder %s40, 0
      %p190 = por %p188, %p189
      %p191 = scmp.ne.s32.totalorder %s179, %s180
      %p192 = scmp.eq.s32.totalorder %s41, 1
      %p193 = por %p191, %p192
      %p195 = scmp.ne.s32.totalorder %s180, %s194
      %p196 = scmp.eq.s32.totalorder %s41, 0
      %p197 = por %p195, %p196
      %s199 = sadd.s32 %s198, 1
      %p202 = scmp.eq.s32.totalorder %s35, 1
      %p203 = scmp.ne.s32.totalorder %s198, %s200
      %p204 = scmp.eq.s32.totalorder %s35, 0
      %p205 = por %p203, %p204
      %p206 = scmp.ne.s32.totalorder %s198, %s200
      %p207 = scmp.eq.s32.totalorder %s40, 1
      %p208 = por %p206, %p207
      %p209 = scmp.ne.s32.totalorder %s200, %s201
      %p210 = scmp.eq.s32.totalorder %s40, 0
      %p211 = por %p209, %p210
      %p212 = scmp.ne.s32.totalorder %s200, %s201
      %p213 = scmp.eq.s32.totalorder %s41, 1
      %p214 = por %p212, %p213
      %p216 = scmp.ne.s32.totalorder %s201, %s215
      %p217 = scmp.eq.s32.totalorder %s41, 0
      %p218 = por %p216, %p217
      %s220 = sadd.s32 %s219, 1
      %p223 = scmp.eq.s32.totalorder %s35, 1
      %p224 = scmp.ne.s32.totalorder %s219, %s221
      %p225 = scmp.eq.s32.totalorder %s35, 0
      %p226 = por %p224, %p225
      %p227 = scmp.ne.s32.totalorder %s219, %s221
      %p228 = scmp.eq.s32.totalorder %s40, 1
      %p229 = por %p227, %p228
      %p230 = scmp.ne.s32.totalorder %s221, %s222
      %p231 = scmp.eq.s32.totalorder %s40, 0
      %p232 = por %p230, %p231
      %p233 = scmp.ne.s32.totalorder %s221, %s222
      %p234 = scmp.eq.s32.totalorder %s41, 1
      %p235 = por %p233, %p234
      %p237 = scmp.ne.s32.totalorder %s222, %s236
      %p238 = scmp.eq.s32.totalorder %s41, 0
      %p239 = por %p237, %p238
      %s241 = sadd.s32 %s240, 1
      %p244 = scmp.eq.s32.totalorder %s35, 1
      %p245 = scmp.ne.s32.totalorder %s240, %s242
      %p246 = scmp.eq.s32.totalorder %s35, 0
      %p247 = por %p245, %p246
      %p248 = scmp.ne.s32.totalorder %s240, %s242
      %p249 = scmp.eq.s32.totalorder %s40, 1
      %p250 = por %p248, %p249
      %p251 = scmp.ne.s32.totalorder %s242, %s243
      %p252 = scmp.eq.s32.totalorder %s40, 0
      %p253 = por %p251, %p252
      %p254 = scmp.ne.s32.totalorder %s242, %s243
      %p255 = scmp.eq.s32.totalorder %s41, 1
      %p256 = por %p254, %p255
      %p258 = scmp.ne.s32.totalorder %s243, %s257
      %p259 = scmp.eq.s32.totalorder %s41, 0
      %p260 = por %p258, %p259
      %s262 = sadd.s32 %s261, 1
      %p265 = scmp.eq.s32.totalorder %s35, 1
      %p266 = scmp.ne.s32.totalorder %s261, %s263
      %p267 = scmp.eq.s32.totalorder %s35, 0
      %p268 = por %p266, %p267
      %p269 = scmp.ne.s32.totalorder %s261, %s263
      %p270 = scmp.eq.s32.totalorder %s40, 1
      %p271 = por %p269, %p270
      %p272 = scmp.ne.s32.totalorder %s263, %s264
      %p273 = scmp.eq.s32.totalorder %s40, 0
      %p274 = por %p272, %p273
      %p275 = scmp.ne.s32.totalorder %s263, %s264
      %p276 = scmp.eq.s32.totalorder %s41, 1
      %p277 = por %p275, %p276
      %p279 = scmp.ne.s32.totalorder %s264, %s278
      %p280 = scmp.eq.s32.totalorder %s41, 0
      %p281 = por %p279, %p280
      %s283 = sadd.s32 %s282, 1
      %p286 = scmp.eq.s32.totalorder %s35, 1
      %p287 = scmp.ne.s32.totalorder %s282, %s284
      %p288 = scmp.eq.s32.totalorder %s35, 0
      %p289 = por %p287, %p288
      %p290 = scmp.ne.s32.totalorder %s282, %s284
      %p291 = scmp.eq.s32.totalorder %s40, 1
      %p292 = por %p290, %p291
      %p293 = scmp.ne.s32.totalorder %s284, %s285
      %p294 = scmp.eq.s32.totalorder %s40, 0
      %p295 = por %p293, %p294
      %p296 = scmp.ne.s32.totalorder %s284, %s285
      %p297 = scmp.eq.s32.totalorder %s41, 1
      %p298 = por %p296, %p297
      %p300 = scmp.ne.s32.totalorder %s285, %s299
      %p301 = scmp.eq.s32.totalorder %s41, 0
      %p302 = por %p300, %p301
      %s304 = sadd.s32 %s303, 1
      %p307 = scmp.eq.s32.totalorder %s35, 1
      %p308 = scmp.ne.s32.totalorder %s303, %s305
      %p309 = scmp.eq.s32.totalorder %s35, 0
      %p310 = por %p308, %p309
      %p311 = scmp.ne.s32.totalorder %s303, %s305
      %p312 = scmp.eq.s32.totalorder %s40, 1
      %p313 = por %p311, %p312
      %p314 = scmp.ne.s32.totalorder %s305, %s306
      %p315 = scmp.eq.s32.totalorder %s40, 0
      %p316 = por %p314, %p315
      %p317 = scmp.ne.s32.totalorder %s305, %s306
      %p318 = scmp.eq.s32.totalorder %s41, 1
      %p319 = por %p317, %p318
      %p321 = scmp.ne.s32.totalorder %s306, %s320
      %p322 = scmp.eq.s32.totalorder %s41, 0
      %p323 = por %p321, %p322
      %s325 = sadd.s32 %s324, 1
      %p328 = scmp.eq.s32.totalorder %s35, 1
      %p329 = scmp.ne.s32.totalorder %s324, %s326
      %p330 = scmp.eq.s32.totalorder %s35, 0
      %p331 = por %p329, %p330
      %p332 = scmp.ne.s32.totalorder %s324, %s326
      %p333 = scmp.eq.s32.totalorder %s40, 1
      %p334 = por %p332, %p333
      %p335 = scmp.ne.s32.totalorder %s326, %s327
      %p336 = scmp.eq.s32.totalorder %s40, 0
      %p337 = por %p335, %p336
      %p338 = scmp.ne.s32.totalorder %s326, %s327
      %p339 = scmp.eq.s32.totalorder %s41, 1
      %p340 = por %p338, %p339
      %p342 = scmp.ne.s32.totalorder %s327, %s341
      %p343 = scmp.eq.s32.totalorder %s41, 0
      %p344 = por %p342, %p343
      %s346 = sadd.s32 %s345, 1
      %p349 = scmp.eq.s32.totalorder %s35, 1
      %p350 = scmp.ne.s32.totalorder %s345, %s347
      %p351 = scmp.eq.s32.totalorder %s35, 0
      %p352 = por %p350, %p351
      %p353 = scmp.ne.s32.totalorder %s345, %s347
      %p354 = scmp.eq.s32.totalorder %s40, 1
      %p355 = por %p353, %p354
      %p356 = scmp.ne.s32.totalorder %s347, %s348
      %p357 = scmp.eq.s32.totalorder %s40, 0
      %p358 = por %p356, %p357
      %p359 = scmp.ne.s32.totalorder %s347, %s348
      %p360 = scmp.eq.s32.totalorder %s41, 1
      %p361 = por %p359, %p360
      %p363 = scmp.ne.s32.totalorder %s348, %s362
      %p364 = scmp.eq.s32.totalorder %s41, 0
      %p365 = por %p363, %p364
      %s367 = sadd.s32 %s366, 1
      %p370 = scmp.eq.s32.totalorder %s35, 1
      %p371 = scmp.ne.s32.totalorder %s366, %s368
      %p372 = scmp.eq.s32.totalorder %s35, 0
      %p373 = por %p371, %p372
      %p374 = scmp.ne.s32.totalorder %s366, %s368
      %p375 = scmp.eq.s32.totalorder %s40, 1
      %p376 = por %p374, %p375
      %p377 = scmp.ne.s32.totalorder %s368, %s369
      %p378 = scmp.eq.s32.totalorder %s40, 0
      %p379 = por %p377, %p378
      %p380 = scmp.ne.s32.totalorder %s368, %s369
      %p381 = scmp.eq.s32.totalorder %s41, 1
      %p382 = por %p380, %p381
      %p384 = scmp.ne.s32.totalorder %s369, %s383
      %p385 = scmp.eq.s32.totalorder %s41, 0
      %p386 = por %p384, %p385
      %s388 = sadd.s32 %s387, 1
      %p391 = scmp.eq.s32.totalorder %s35, 1
      %p392 = scmp.ne.s32.totalorder %s387, %s389
      %p393 = scmp.eq.s32.totalorder %s35, 0
      %p394 = por %p392, %p393
      %p395 = scmp.ne.s32.totalorder %s387, %s389
      %p396 = scmp.eq.s32.totalorder %s40, 1
      %p397 = por %p395, %p396
      %p398 = scmp.ne.s32.totalorder %s389, %s390
      %p399 = scmp.eq.s32.totalorder %s40, 0
      %p400 = por %p398, %p399
      %p401 = scmp.ne.s32.totalorder %s389, %s390
      %p402 = scmp.eq.s32.totalorder %s41, 1
      %p403 = por %p401, %p402
      %p405 = scmp.ne.s32.totalorder %s390, %s404
      %p406 = scmp.eq.s32.totalorder %s41, 0
      %p407 = por %p405, %p406
      %s409 = sadd.s32 %s408, 1
      %p412 = scmp.eq.s32.totalorder %s35, 1
      %p413 = scmp.ne.s32.totalorder %s408, %s410
      %p414 = scmp.eq.s32.totalorder %s35, 0
      %p415 = por %p413, %p414
      %p416 = scmp.ne.s32.totalorder %s408, %s410
      %p417 = scmp.eq.s32.totalorder %s40, 1
      %p418 = por %p416, %p417
      %p419 = scmp.ne.s32.totalorder %s410, %s411
      %p420 = scmp.eq.s32.totalorder %s40, 0
      %p421 = por %p419, %p420
      %p422 = scmp.ne.s32.totalorder %s410, %s411
      %p423 = scmp.eq.s32.totalorder %s41, 1
      %p424 = por %p422, %p423
      %p426 = scmp.ne.s32.totalorder %s411, %s425
      %p427 = scmp.eq.s32.totalorder %s41, 0
      %p428 = por %p426, %p427
      %s430 = sadd.s32 %s429, 1
      %p433 = scmp.eq.s32.totalorder %s35, 1
      %p434 = scmp.ne.s32.totalorder %s429, %s431
      %p435 = scmp.eq.s32.totalorder %s35, 0
      %p436 = por %p434, %p435
      %p437 = scmp.ne.s32.totalorder %s429, %s431
      %p438 = scmp.eq.s32.totalorder %s40, 1
      %p439 = por %p437, %p438
      %p440 = scmp.ne.s32.totalorder %s431, %s432
      %p441 = scmp.eq.s32.totalorder %s40, 0
      %p442 = por %p440, %p441
      %p443 = scmp.ne.s32.totalorder %s431, %s432
      %p444 = scmp.eq.s32.totalorder %s41, 1
      %p445 = por %p443, %p444
      %p447 = scmp.ne.s32.totalorder %s432, %s446
      %p448 = scmp.eq.s32.totalorder %s41, 0
      %p449 = por %p447, %p448
      %s451 = sadd.s32 %s450, 1
      %p454 = scmp.eq.s32.totalorder %s35, 1
      %p455 = scmp.ne.s32.totalorder %s450, %s452
      %p456 = scmp.eq.s32.totalorder %s35, 0
      %p457 = por %p455, %p456
      %p458 = scmp.ne.s32.totalorder %s450, %s452
      %p459 = scmp.eq.s32.totalorder %s40, 1
      %p460 = por %p458, %p459
      %p461 = scmp.ne.s32.totalorder %s452, %s453
      %p462 = scmp.eq.s32.totalorder %s40, 0
      %p463 = por %p461, %p462
      %p464 = scmp.ne.s32.totalorder %s452, %s453
      %p465 = scmp.eq.s32.totalorder %s41, 1
      %p466 = por %p464, %p465
      %p468 = scmp.ne.s32.totalorder %s453, %s467
      %p469 = scmp.eq.s32.totalorder %s41, 0
      %p470 = por %p468, %p469
      %s472 = sadd.s32 %s471, 1
      %p475 = scmp.eq.s32.totalorder %s35, 1
      %p476 = scmp.ne.s32.totalorder %s471, %s473
      %p477 = scmp.eq.s32.totalorder %s35, 0
      %p478 = por %p476, %p477
      %p479 = scmp.ne.s32.totalorder %s471, %s473
      %p480 = scmp.eq.s32.totalorder %s40, 1
      %p481 = por %p479, %p480
      %p482 = scmp.ne.s32.totalorder %s473, %s474
      %p483 = scmp.eq.s32.totalorder %s40, 0
      %p484 = por %p482, %p483
      %p485 = scmp.ne.s32.totalorder %s473, %s474
      %p486 = scmp.eq.s32.totalorder %s41, 1
      %p487 = por %p485, %p486
      %p489 = scmp.ne.s32.totalorder %s474, %s488
      %p490 = scmp.eq.s32.totalorder %s41, 0
      %p491 = por %p489, %p490
      %s493 = sadd.s32 %s492, 1
      %p496 = scmp.eq.s32.totalorder %s35, 1
      %p497 = scmp.ne.s32.totalorder %s492, %s494
      %p498 = scmp.eq.s32.totalorder %s35, 0
      %p499 = por %p497, %p498
      %p500 = scmp.ne.s32.totalorder %s492, %s494
      %p501 = scmp.eq.s32.totalorder %s40, 1
      %p502 = por %p500, %p501
      %p503 = scmp.ne.s32.totalorder %s494, %s495
      %p504 = scmp.eq.s32.totalorder %s40, 0
      %p505 = por %p503, %p504
      %p506 = scmp.ne.s32.totalorder %s494, %s495
      %p507 = scmp.eq.s32.totalorder %s41, 1
      %p508 = por %p506, %p507
      %p510 = scmp.ne.s32.totalorder %s495, %s509
      %p511 = scmp.eq.s32.totalorder %s41, 0
      %p512 = por %p510, %p511
      %s513 = ssub.s32 %s42, %s54
      %s514 = ssub.s32 %s43, %s50
      %s515 = sor.u32 %s513, %s514
      %p516 = scmp.eq.s32.totalorder %s515, 0
      %s518 = sadd.s32 %s517, 1
      %s519 = scalar_select %p516, %s517, %s518
      %p522 = pneg %p516
      %p523 = scmp.eq.s32.totalorder %s35, 1
      %p524 = por %p522, %p523
      %p525 = scmp.ne.s32.totalorder %s517, %s520
      %p526 = scmp.eq.s32.totalorder %s35, 0
      %p527 = por %p525, %p526
      %p528 = scmp.ne.s32.totalorder %s517, %s520
      %p529 = scmp.eq.s32.totalorder %s40, 1
      %p530 = por %p528, %p529
      %p531 = scmp.ne.s32.totalorder %s520, %s521
      %p532 = scmp.eq.s32.totalorder %s40, 0
      %p533 = por %p531, %p532
      %p534 = scmp.ne.s32.totalorder %s520, %s521
      %p535 = scmp.eq.s32.totalorder %s41, 1
      %p536 = por %p534, %p535
      %p538 = scmp.ne.s32.totalorder %s521, %s537
      %p539 = scmp.eq.s32.totalorder %s41, 0
      %p540 = por %p538, %p539
      %p541 = scmp.le.s32.totalorder 1, %s35
      %p542 = scmp.lt.s32.totalorder %s35, 3
      %p543 = pnand %p541, %p542
      %p544 = pneg %p543
      // Predicated region
      $region9: #{tpu_custom_call.1} parent=5 // pred_check
        _
      $region10: #{tpu_custom_call.1} parent=5 // pred_check_branch
        %546 = sbr.rel (%p543) target = $region12
      $region11: #{tpu_custom_call.1} parent=5 // pred_region
        %s547 = ssub.s32 %s35, 1
        // Predicated region
        $region13: #{tpu_custom_call.1} parent=11 // pred_check
          %p548 = pneg %p148
        $region14: #{tpu_custom_call.1} parent=11 // pred_check_branch
          %550 = sbr.rel (%p548) target = $region16
        $region15: #{tpu_custom_call.1} parent=11 // pred_region
          %s552 = ssub.s32 256, 256
          %553 = vsyncadd [#allocation7], %s552
          %s554 = sshll.u32 [#allocation6], 4
          %s555 = int_to_ptr.vmem [resolvable:$true] %s554
          %560 = dma.hbm_to_vmem [thread:$0]  %s3, 256, %s555, [#allocation7], 64, 64, 4
        $region16: #{tpu_custom_call.1} parent=11 // pred_fallthru
          _
        // Predicated region
        $region17: #{tpu_custom_call.1} parent=11 // pred_check
          %p561 = pneg %p169
        $region18: #{tpu_custom_call.1} parent=11 // pred_check_branch
          %563 = sbr.rel (%p561) target = $region20
        $region19: #{tpu_custom_call.1} parent=11 // pred_region
          %s565 = ssub.s32 256, 256
          %566 = vsyncadd [#allocation10], %s565
          %s567 = sshll.u32 [#allocation9], 4
          %s568 = int_to_ptr.vmem [resolvable:$true] %s567
          %573 = dma.hbm_to_vmem [thread:$0]  %s4, 256, %s568, [#allocation10], 64, 64, 4
        $region20: #{tpu_custom_call.1} parent=11 // pred_fallthru
          _
        // Predicated region
        $region21: #{tpu_custom_call.1} parent=11 // pred_check
          %p574 = pneg %p190
        $region22: #{tpu_custom_call.1} parent=11 // pred_check_branch
          %576 = sbr.rel (%p574) target = $region24
        $region23: #{tpu_custom_call.1} parent=11 // pred_region
          %s578 = ssub.s32 256, 256
          %579 = vsyncadd [#allocation10], %s578
          %s580 = sshll.u32 [#allocation11], 4
          %s581 = int_to_ptr.vmem [resolvable:$true] %s580
          %586 = dma.hbm_to_vmem [thread:$0]  %s5, 256, %s581, [#allocation10], 64, 64, 4
        $region24: #{tpu_custom_call.1} parent=11 // pred_fallthru
          _
        // Predicated region
        $region25: #{tpu_custom_call.1} parent=11 // pred_check
          %p587 = pneg %p211
        $region26: #{tpu_custom_call.1} parent=11 // pred_check_branch
          %589 = sbr.rel (%p587) target = $region28
        $region27: #{tpu_custom_call.1} parent=11 // pred_region
          %s591 = ssub.s32 256, 256
          %592 = vsyncadd [#allocation13], %s591
          %s593 = sshll.u32 [#allocation12], 4
          %s594 = int_to_ptr.vmem [resolvable:$true] %s593
          %599 = dma.hbm_to_vmem [thread:$0]  %s6, 256, %s594, [#allocation13], 64, 64, 4
        $region28: #{tpu_custom_call.1} parent=11 // pred_fallthru
          _
        // Predicated region
        $region29: #{tpu_custom_call.1} parent=11 // pred_check
          %p600 = pneg %p232
        $region30: #{tpu_custom_call.1} parent=11 // pred_check_branch
          %602 = sbr.rel (%p600) target = $region32
        $region31: #{tpu_custom_call.1} parent=11 // pred_region
          %s604 = ssub.s32 256, 256
          %605 = vsyncadd [#allocation13], %s604
          %s606 = sshll.u32 [#allocation14], 4
          %s607 = int_to_ptr.vmem [resolvable:$true] %s606
          %612 = dma.hbm_to_vmem [thread:$0]  %s7, 256, %s607, [#allocation13], 64, 64, 4
        $region32: #{tpu_custom_call.1} parent=11 // pred_fallthru
          _
        // Predicated region
        $region33: #{tpu_custom_call.1} parent=11 // pred_check
          %p613 = pneg %p253
        $region34: #{tpu_custom_call.1} parent=11 // pred_check_branch
          %615 = sbr.rel (%p613) target = $region36
        $region35: #{tpu_custom_call.1} parent=11 // pred_region
          %s617 = ssub.s32 256, 256
          %618 = vsyncadd [#allocation16], %s617
          %s619 = sshll.u32 [#allocation15], 4
          %s620 = int_to_ptr.vmem [resolvable:$true] %s619
          %625 = dma.hbm_to_vmem [thread:$0]  %s8, 256, %s620, [#allocation16], 64, 64, 4
        $region36: #{tpu_custom_call.1} parent=11 // pred_fallthru
          _
        // Predicated region
        $region37: #{tpu_custom_call.1} parent=11 // pred_check
          %p626 = pneg %p274
        $region38: #{tpu_custom_call.1} parent=11 // pred_check_branch
          %628 = sbr.rel (%p626) target = $region40
        $region39: #{tpu_custom_call.1} parent=11 // pred_region
          _
        $region40: #{tpu_custom_call.1} parent=11 // pred_fallthru
          _
        // Predicated region
        $region41: #{tpu_custom_call.1} parent=11 // pred_check
          %p629 = pneg %p295
        $region42: #{tpu_custom_call.1} parent=11 // pred_check_branch
          %631 = sbr.rel (%p629) target = $region44
        $region43: #{tpu_custom_call.1} parent=11 // pred_region
          %s633 = ssub.s32 256, 256
          %634 = vsyncadd [#allocation16], %s633
          %s635 = sshll.u32 [#allocation17], 4
          %s636 = int_to_ptr.vmem [resolvable:$true] %s635
          %641 = dma.hbm_to_vmem [thread:$0]  %s10, 256, %s636, [#allocation16], 64, 64, 4
        $region44: #{tpu_custom_call.1} parent=11 // pred_fallthru
          _
        // Predicated region
        $region45: #{tpu_custom_call.1} parent=11 // pred_check
          %p642 = pneg %p316
        $region46: #{tpu_custom_call.1} parent=11 // pred_check_branch
          %644 = sbr.rel (%p642) target = $region48
        $region47: #{tpu_custom_call.1} parent=11 // pred_region
          %s646 = ssub.s32 256, 256
          %647 = vsyncadd [#allocation19], %s646
          %s648 = sshll.u32 [#allocation18], 4
          %s649 = int_to_ptr.vmem [resolvable:$true] %s648
          %654 = dma.hbm_to_vmem [thread:$0]  %s11, 256, %s649, [#allocation19], 64, 64, 4
        $region48: #{tpu_custom_call.1} parent=11 // pred_fallthru
          _
        // Predicated region
        $region49: #{tpu_custom_call.1} parent=11 // pred_check
          %p655 = pneg %p337
        $region50: #{tpu_custom_call.1} parent=11 // pred_check_branch
          %657 = sbr.rel (%p655) target = $region52
        $region51: #{tpu_custom_call.1} parent=11 // pred_region
          _
        $region52: #{tpu_custom_call.1} parent=11 // pred_fallthru
          _
        // Predicated region
        $region53: #{tpu_custom_call.1} parent=11 // pred_check
          %p658 = pneg %p358
        $region54: #{tpu_custom_call.1} parent=11 // pred_check_branch
          %660 = sbr.rel (%p658) target = $region56
        $region55: #{tpu_custom_call.1} parent=11 // pred_region
          _
        $region56: #{tpu_custom_call.1} parent=11 // pred_fallthru
          _
        // Predicated region
        $region57: #{tpu_custom_call.1} parent=11 // pred_check
          %p661 = pneg %p379
        $region58: #{tpu_custom_call.1} parent=11 // pred_check_branch
          %663 = sbr.rel (%p661) target = $region60
        $region59: #{tpu_custom_call.1} parent=11 // pred_region
          _
        $region60: #{tpu_custom_call.1} parent=11 // pred_fallthru
          _
        // Predicated region
        $region61: #{tpu_custom_call.1} parent=11 // pred_check
          %p664 = pneg %p400
        $region62: #{tpu_custom_call.1} parent=11 // pred_check_branch
          %666 = sbr.rel (%p664) target = $region64
        $region63: #{tpu_custom_call.1} parent=11 // pred_region
          _
        $region64: #{tpu_custom_call.1} parent=11 // pred_fallthru
          _
        // Predicated region
        $region65: #{tpu_custom_call.1} parent=11 // pred_check
          %p667 = pneg %p421
        $region66: #{tpu_custom_call.1} parent=11 // pred_check_branch
          %669 = sbr.rel (%p667) target = $region68
        $region67: #{tpu_custom_call.1} parent=11 // pred_region
          _
        $region68: #{tpu_custom_call.1} parent=11 // pred_fallthru
          _
        // Predicated region
        $region69: #{tpu_custom_call.1} parent=11 // pred_check
          %p670 = pneg %p442
        $region70: #{tpu_custom_call.1} parent=11 // pred_check_branch
          %672 = sbr.rel (%p670) target = $region72
        $region71: #{tpu_custom_call.1} parent=11 // pred_region
          _
        $region72: #{tpu_custom_call.1} parent=11 // pred_fallthru
          _
        // Predicated region
        $region73: #{tpu_custom_call.1} parent=11 // pred_check
          %p673 = pneg %p463
        $region74: #{tpu_custom_call.1} parent=11 // pred_check_branch
          %675 = sbr.rel (%p673) target = $region76
        $region75: #{tpu_custom_call.1} parent=11 // pred_region
          _
        $region76: #{tpu_custom_call.1} parent=11 // pred_fallthru
          _
        // Predicated region
        $region77: #{tpu_custom_call.1} parent=11 // pred_check
          %p676 = pneg %p484
        $region78: #{tpu_custom_call.1} parent=11 // pred_check_branch
          %678 = sbr.rel (%p676) target = $region80
        $region79: #{tpu_custom_call.1} parent=11 // pred_region
          _
        $region80: #{tpu_custom_call.1} parent=11 // pred_fallthru
          _
        // Predicated region
        $region81: #{tpu_custom_call.1} parent=11 // pred_check
          %p679 = pneg %p505
        $region82: #{tpu_custom_call.1} parent=11 // pred_check_branch
          %681 = sbr.rel (%p679) target = $region84
        $region83: #{tpu_custom_call.1} parent=11 // pred_region
          _
        $region84: #{tpu_custom_call.1} parent=11 // pred_fallthru
          _
      $region12: #{tpu_custom_call.1} parent=5 // pred_fallthru
        _
      %p682 = scmp.lt.s32.totalorder %s35, 2
      // Predicated region
      $region85: #{tpu_custom_call.1} parent=5 // pred_check
        %p683 = pneg %p682
      $region86: #{tpu_custom_call.1} parent=5 // pred_check_branch
        %685 = sbr.rel (%p683) target = $region88
      $region87: #{tpu_custom_call.1} parent=5 // pred_region
        // Predicated region
        $region89: #{tpu_custom_call.1} parent=87 // pred_check
          %p686 = pneg %p69
        $region90: #{tpu_custom_call.1} parent=87 // pred_check_branch
          %688 = sbr.rel (%p686) target = $region92
        $region91: #{tpu_custom_call.1} parent=87 // pred_region
          %p689 = scmp.lt.s32.totalorder %s42, 1
          %s690 = scalar_select %p689, %s42, 1
          %p691 = scmp.lt.s32.totalorder %s43, 0
          %s692 = scalar_select %p691, %s43, 0
          %s693 = sadd.s32 %s692, %s690
          %s694 = smul.addr %s693, 8
          %s695 = scalar_lea.vmem %s0, %s694
        $region92: #{tpu_custom_call.1} parent=87 // pred_fallthru
          _
        // Predicated region
        $region93: #{tpu_custom_call.1} parent=87 // pred_check
          %p696 = pneg %p95
        $region94: #{tpu_custom_call.1} parent=87 // pred_check_branch
          %698 = sbr.rel (%p696) target = $region96
        $region95: #{tpu_custom_call.1} parent=87 // pred_region
          %p699 = scmp.lt.s32.totalorder %s42, 1
          %s700 = scalar_select %p699, %s42, 1
          %s701 = smul.addr %s700, 8
          %s702 = scalar_lea.vmem %s1, %s701
        $region96: #{tpu_custom_call.1} parent=87 // pred_fallthru
          _
        // Predicated region
        $region97: #{tpu_custom_call.1} parent=87 // pred_check
          %p703 = pneg %p121
        $region98: #{tpu_custom_call.1} parent=87 // pred_check_branch
          %705 = sbr.rel (%p703) target = $region100
        $region99: #{tpu_custom_call.1} parent=87 // pred_region
          %p706 = scmp.lt.s32.totalorder %s42, 1
          %s707 = scalar_select %p706, %s42, 1
          %s708 = smul.addr %s707, 8
          %s709 = scalar_lea.vmem %s2, %s708
        $region100: #{tpu_custom_call.1} parent=87 // pred_fallthru
          _
      $region88: #{tpu_custom_call.1} parent=5 // pred_fallthru
        _
      %p710 = scmp.le.s32.totalorder 1, %s35
      %p711 = scmp.lt.s32.totalorder %s35, 3
      %p712 = pnand %p710, %p711
      %p713 = pneg %p712
      // Predicated region
      $region101: #{tpu_custom_call.1} parent=5 // pred_check
        _
      $region102: #{tpu_custom_call.1} parent=5 // pred_check_branch
        %715 = sbr.rel (%p712) target = $region104
      $region103: #{tpu_custom_call.1} parent=5 // pred_region
        %s716 = ssub.s32 %s35, 1
        // Predicated region
        $region105: #{tpu_custom_call.1} parent=103 // pred_check
          %p717 = pneg %p148
        $region106: #{tpu_custom_call.1} parent=103 // pred_check_branch
          %719 = sbr.rel (%p717) target = $region108
        $region107: #{tpu_custom_call.1} parent=103 // pred_region
          %720 = dma.done [#allocation7], 256
        $region108: #{tpu_custom_call.1} parent=103 // pred_fallthru
          _
        // Predicated region
        $region109: #{tpu_custom_call.1} parent=103 // pred_check
          %p721 = pneg %p169
        $region110: #{tpu_custom_call.1} parent=103 // pred_check_branch
          %723 = sbr.rel (%p721) target = $region112
        $region111: #{tpu_custom_call.1} parent=103 // pred_region
          %724 = dma.done [#allocation10], 256
        $region112: #{tpu_custom_call.1} parent=103 // pred_fallthru
          _
        // Predicated region
        $region113: #{tpu_custom_call.1} parent=103 // pred_check
          %p725 = pneg %p190
        $region114: #{tpu_custom_call.1} parent=103 // pred_check_branch
          %727 = sbr.rel (%p725) target = $region116
        $region115: #{tpu_custom_call.1} parent=103 // pred_region
          %728 = dma.done [#allocation10], 256
        $region116: #{tpu_custom_call.1} parent=103 // pred_fallthru
          _
        // Predicated region
        $region117: #{tpu_custom_call.1} parent=103 // pred_check
          %p729 = pneg %p211
        $region118: #{tpu_custom_call.1} parent=103 // pred_check_branch
          %731 = sbr.rel (%p729) target = $region120
        $region119: #{tpu_custom_call.1} parent=103 // pred_region
          %732 = dma.done [#allocation13], 256
        $region120: #{tpu_custom_call.1} parent=103 // pred_fallthru
          _
        // Predicated region
        $region121: #{tpu_custom_call.1} parent=103 // pred_check
          %p733 = pneg %p232
        $region122: #{tpu_custom_call.1} parent=103 // pred_check_branch
          %735 = sbr.rel (%p733) target = $region124
        $region123: #{tpu_custom_call.1} parent=103 // pred_region
          %736 = dma.done [#allocation13], 256
        $region124: #{tpu_custom_call.1} parent=103 // pred_fallthru
          _
        // Predicated region
        $region125: #{tpu_custom_call.1} parent=103 // pred_check
          %p737 = pneg %p253
        $region126: #{tpu_custom_call.1} parent=103 // pred_check_branch
          %739 = sbr.rel (%p737) target = $region128
        $region127: #{tpu_custom_call.1} parent=103 // pred_region
          %740 = dma.done [#allocation16], 256
        $region128: #{tpu_custom_call.1} parent=103 // pred_fallthru
          _
        // Predicated region
        $region129: #{tpu_custom_call.1} parent=103 // pred_check
          %p741 = pneg %p295
        $region130: #{tpu_custom_call.1} parent=103 // pred_check_branch
          %743 = sbr.rel (%p741) target = $region132
        $region131: #{tpu_custom_call.1} parent=103 // pred_region
          %744 = dma.done [#allocation16], 256
        $region132: #{tpu_custom_call.1} parent=103 // pred_fallthru
          _
        // Predicated region
        $region133: #{tpu_custom_call.1} parent=103 // pred_check
          %p745 = pneg %p316
        $region134: #{tpu_custom_call.1} parent=103 // pred_check_branch
          %747 = sbr.rel (%p745) target = $region136
        $region135: #{tpu_custom_call.1} parent=103 // pred_region
          %748 = dma.done [#allocation19], 256
        $region136: #{tpu_custom_call.1} parent=103 // pred_fallthru
          _
        %p749 = scmp.lt.s32.totalorder %s44, 1
        %s750 = scalar_select %p749, %s44, 1
        %p751 = scmp.lt.s32.totalorder %s45, 0
        %s752 = scalar_select %p751, %s45, 0
        %s753 = sadd.s32 %s752, %s750
        %s754 = smul.addr %s753, 8
        %s755 = scalar_lea.vmem %s0, %s754
        %p756 = pneg %p75
        %p757 = pneg %p72
        %p758 = scmp.lt.s32.totalorder %s44, 1
        %s759 = scalar_select %p758, %s44, 1
        %s760 = smul.addr %s759, 8
        %s761 = scalar_lea.vmem %s1, %s760
        %p762 = pneg %p101
        %p763 = pneg %p98
        %p764 = scmp.lt.s32.totalorder %s44, 1
        %s765 = scalar_select %p764, %s44, 1
        %s766 = smul.addr %s765, 8
        %s767 = scalar_lea.vmem %s2, %s766
        %p768 = pneg %p127
        %p769 = pneg %p124
        %p770 = pneg %p148
        %p771 = pneg %p145
        %p772 = pneg %p169
        %p773 = pneg %p166
        %p774 = pneg %p190
        %p775 = pneg %p187
        %p776 = pneg %p211
        %p777 = pneg %p208
        %p778 = pneg %p232
        %p779 = pneg %p229
        %p780 = pneg %p253
        %p781 = pneg %p250
        %p782 = pneg %p274
        %p783 = pneg %p271
        %p784 = pneg %p295
        %p785 = pneg %p292
        %p786 = pneg %p316
        %p787 = pneg %p313
        %p788 = pneg %p337
        %p789 = pneg %p334
        %p790 = pneg %p358
        %p791 = pneg %p355
        %p792 = pneg %p379
        %p793 = pneg %p376
        %p794 = pneg %p400
        %p795 = pneg %p397
        %p796 = pneg %p421
        %p797 = pneg %p418
        %p798 = pneg %p442
        %p799 = pneg %p439
        %p800 = pneg %p463
        %p801 = pneg %p460
        %p802 = pneg %p484
        %p803 = pneg %p481
        %p804 = pneg %p505
        %p805 = pneg %p502
        %p806 = pneg %p533
        %p807 = pneg %p530
        %s808 = sand.u32 %s520, 1
        %s809 = scalar_lea.sflag [#allocation8], %s808
        %s810 = sand.u32 %s520, 1
        %s811 = smul.addr %s810, 8
        %s812 = scalar_lea.vmem [#allocation20], %s811
        %p813 = scmp.lt.s32.totalorder %s44, 1
        %s814 = scalar_select %p813, %s44, 1
        %p815 = scmp.lt.s32.totalorder %s45, 0
        %s816 = scalar_select %p815, %s45, 0
        %s817 = sadd.s32 %s816, %s814
        %s818 = smul.addr %s817, 8
        %s819 = scalar_lea.vmem %s0, %s818
        %p820 = scmp.lt.s32.totalorder %s44, 1
        %s821 = scalar_select %p820, %s44, 1
        %s822 = smul.addr %s821, 8
        %s823 = scalar_lea.vmem %s1, %s822
        %p824 = scmp.lt.s32.totalorder %s44, 1
        %s825 = scalar_select %p824, %s44, 1
        %s826 = smul.addr %s825, 8
        %s827 = scalar_lea.vmem %s2, %s826
        %p829 = scmp.eq.s32.totalorder %s45, 0
        // Predicated region
        $region137: #{tpu_custom_call.1} parent=103 // pred_check
          %p830 = pneg %p829
        $region138: #{tpu_custom_call.1} parent=103 // pred_check_branch
          %832 = sbr.rel (%p830) target = $region140
        $region139: #{tpu_custom_call.1} parent=103 // pred_region
          %v833 = vld [vmem:[%s823] sm:$0xff]
          %v834 = vpack.c.bf16 %v833, %v833
          %v835 = vld [vmem:[%s827] sm:$0xff]
          %v836 = vpack.c.bf16 %v835, %v835
          %v837 = vld [vmem:[#allocation9] sm:$0xf]
          %v838 = vld [vmem:[#allocation9 + $0x4] sm:$0xf]
          %v839 = vld [vmem:[#allocation9 + $0x8] sm:$0xf]
          %v840 = vld [vmem:[#allocation9 + $0xc] sm:$0xf]
          %v845 = vunpack.c.l.b16 %v837
          %v846 = vunpack.c.l.b16 %v838
          %v847 = vunpack.c.l.b16 %v839
          %v848 = vunpack.c.l.b16 %v840
          %v849 = vpack.c.b16 %v846, %v845
          %v850 = vpack.c.b16 %v848, %v847
          %vm853 = vcmask 261120
          %v855 = vsel %vm853, %v834, 0
          %857 = vmatprep.subr.bf16.mxu0 0
          %858 = vmatpush1.bf16.msra.mxu0 %v849
          %859 = vmatprep.subr.bf16.mxu0 0
          %860 = vmatpush1.bf16.msra.mxu0 %v850
          %861 = vmatprep.subr.bf16.mxu0 0
          %862 = vmatpush1.bf16.msra.mxu0 0
          %863 = vmatprep.subr.bf16.mxu0 0
          %864 = vmatpush1.bf16.msra.mxu0 0
          %865 = vmatprep.subr.bf16.mxu0 0
          %866 = vmatpush1.bf16.msra.mxu0 0
          %867 = vmatprep.subr.bf16.mxu0 0
          %868 = vmatpush1.bf16.msra.mxu0 0
          %869 = vmatprep.subr.bf16.mxu0 0
          %870 = vmatpush1.bf16.msra.mxu0 0
          %871 = vmatprep.subr.bf16.mxu0 0
          %872 = vmatpush1.bf16.msra.mxu0 0
          %873 = vmatprep.subr.bf16.mxu0 0
          %874 = vmatpush1.bf16.msra.mxu0 0
          %875 = vmatprep.subr.bf16.mxu0 0
          %876 = vmatpush1.bf16.msra.mxu0 0
          %877 = vmatprep.subr.bf16.mxu0 0
          %878 = vmatpush1.bf16.msra.mxu0 0
          %879 = vmatprep.subr.bf16.mxu0 0
          %880 = vmatpush1.bf16.msra.mxu0 0
          %881 = vmatprep.subr.bf16.mxu0 0
          %882 = vmatpush1.bf16.msra.mxu0 0
          %883 = vmatprep.subr.bf16.mxu0 0
          %884 = vmatpush1.bf16.msra.mxu0 0
          %885 = vmatprep.subr.bf16.mxu0 0
          %886 = vmatpush1.bf16.msra.mxu0 0
          %887 = vmatprep.subr.bf16.mxu0 0
          %888 = vmatpush1.bf16.msra.mxu0 0
          %889 = vmatprep.mubr.bf16.mxu0 0
          %890 = vmatmul.mubr.bf16.gmra.mrb[0].mxu0 %v855
          %v891 = vpop.f32.mrb[0].mxu0
          %v892 = vadd.f32 0.0, %v891
          %v893 = vpop.f32.mrb[0].mxu0
          %v894 = vpop.f32.mrb[0].mxu0
          %v895 = vpop.f32.mrb[0].mxu0
          %896 = vdwg.mxu0
          %v897 = vpack.c.bf16 %v892, %v892
          %vm898 = vcmask 257024
          %899 = vst.msk [vmem:[#allocation2] sm:$0xf] %vm898, %v897
          %v900 = vld [vmem:[#allocation11] sm:$0xf]
          %v901 = vld [vmem:[#allocation11 + $0x4] sm:$0xf]
          %v902 = vld [vmem:[#allocation11 + $0x8] sm:$0xf]
          %v903 = vld [vmem:[#allocation11 + $0xc] sm:$0xf]
          %v908 = vunpack.c.l.b16 %v900
          %v909 = vunpack.c.l.b16 %v901
          %v910 = vunpack.c.l.b16 %v902
          %v911 = vunpack.c.l.b16 %v903
          %v912 = vpack.c.b16 %v909, %v908
          %v913 = vpack.c.b16 %v911, %v910
          %916 = vmatprep.subr.bf16.mxu0 0
          %917 = vmatpush1.bf16.msra.mxu0 %v912
          %918 = vmatprep.subr.bf16.mxu0 0
          %919 = vmatpush1.bf16.msra.mxu0 %v913
          %920 = vmatprep.subr.bf16.mxu0 0
          %921 = vmatpush1.bf16.msra.mxu0 0
          %922 = vmatprep.subr.bf16.mxu0 0
          %923 = vmatpush1.bf16.msra.mxu0 0
          %924 = vmatprep.subr.bf16.mxu0 0
          %925 = vmatpush1.bf16.msra.mxu0 0
          %926 = vmatprep.subr.bf16.mxu0 0
          %927 = vmatpush1.bf16.msra.mxu0 0
          %928 = vmatprep.subr.bf16.mxu0 0
          %929 = vmatpush1.bf16.msra.mxu0 0
          %930 = vmatprep.subr.bf16.mxu0 0
          %931 = vmatpush1.bf16.msra.mxu0 0
          %932 = vmatprep.subr.bf16.mxu0 0
          %933 = vmatpush1.bf16.msra.mxu0 0
          %934 = vmatprep.subr.bf16.mxu0 0
          %935 = vmatpush1.bf16.msra.mxu0 0
          %936 = vmatprep.subr.bf16.mxu0 0
          %937 = vmatpush1.bf16.msra.mxu0 0
          %938 = vmatprep.subr.bf16.mxu0 0
          %939 = vmatpush1.bf16.msra.mxu0 0
          %940 = vmatprep.subr.bf16.mxu0 0
          %941 = vmatpush1.bf16.msra.mxu0 0
          %942 = vmatprep.subr.bf16.mxu0 0
          %943 = vmatpush1.bf16.msra.mxu0 0
          %944 = vmatprep.subr.bf16.mxu0 0
          %945 = vmatpush1.bf16.msra.mxu0 0
          %946 = vmatprep.subr.bf16.mxu0 0
          %947 = vmatpush1.bf16.msra.mxu0 0
          %948 = vmatprep.mubr.bf16.mxu0 0
          %949 = vmatmul.mubr.bf16.gmra.mrb[0].mxu0 %v855
          %v950 = vpop.f32.mrb[0].mxu0
          %v951 = vadd.f32 0.0, %v950
          %v952 = vpop.f32.mrb[0].mxu0
          %v953 = vpop.f32.mrb[0].mxu0
          %v954 = vpop.f32.mrb[0].mxu0
          %955 = vdwg.mxu0
          %v956 = vpack.c.bf16 %v951, %v951
          %957 = vst.msk [vmem:[#allocation3] sm:$0xf] %vm898, %v956
          %v958 = vld [vmem:[#allocation15] sm:$0xf]
          %v959 = vld [vmem:[#allocation15 + $0x4] sm:$0xf]
          %v960 = vld [vmem:[#allocation15 + $0x8] sm:$0xf]
          %v961 = vld [vmem:[#allocation15 + $0xc] sm:$0xf]
          %v966 = vunpack.c.l.b16 %v958
          %v967 = vunpack.c.l.b16 %v959
          %v968 = vunpack.c.l.b16 %v960
          %v969 = vunpack.c.l.b16 %v961
          %v970 = vpack.c.b16 %v967, %v966
          %v971 = vpack.c.b16 %v969, %v968
          %v975 = vsel %vm853, %v836, 0
          %977 = vmatprep.subr.bf16.mxu0 0
          %978 = vmatpush1.bf16.msra.mxu0 %v970
          %979 = vmatprep.subr.bf16.mxu0 0
          %980 = vmatpush1.bf16.msra.mxu0 %v971
          %981 = vmatprep.subr.bf16.mxu0 0
          %982 = vmatpush1.bf16.msra.mxu0 0
          %983 = vmatprep.subr.bf16.mxu0 0
          %984 = vmatpush1.bf16.msra.mxu0 0
          %985 = vmatprep.subr.bf16.mxu0 0
          %986 = vmatpush1.bf16.msra.mxu0 0
          %987 = vmatprep.subr.bf16.mxu0 0
          %988 = vmatpush1.bf16.msra.mxu0 0
          %989 = vmatprep.subr.bf16.mxu0 0
          %990 = vmatpush1.bf16.msra.mxu0 0
          %991 = vmatprep.subr.bf16.mxu0 0
          %992 = vmatpush1.bf16.msra.mxu0 0
          %993 = vmatprep.subr.bf16.mxu0 0
          %994 = vmatpush1.bf16.msra.mxu0 0
          %995 = vmatprep.subr.bf16.mxu0 0
          %996 = vmatpush1.bf16.msra.mxu0 0
          %997 = vmatprep.subr.bf16.mxu0 0
          %998 = vmatpush1.bf16.msra.mxu0 0
          %999 = vmatprep.subr.bf16.mxu0 0
          %1000 = vmatpush1.bf16.msra.mxu0 0
          %1001 = vmatprep.subr.bf16.mxu0 0
          %1002 = vmatpush1.bf16.msra.mxu0 0
          %1003 = vmatprep.subr.bf16.mxu0 0
          %1004 = vmatpush1.bf16.msra.mxu0 0
          %1005 = vmatprep.subr.bf16.mxu0 0
          %1006 = vmatpush1.bf16.msra.mxu0 0
          %1007 = vmatprep.subr.bf16.mxu0 0
          %1008 = vmatpush1.bf16.msra.mxu0 0
          %1009 = vmatprep.mubr.bf16.mxu0 0
          %1010 = vmatmul.mubr.bf16.gmra.mrb[0].mxu0 %v975
          %v1011 = vpop.f32.mrb[0].mxu0
          %v1012 = vadd.f32 0.0, %v1011
          %v1013 = vpop.f32.mrb[0].mxu0
          %v1014 = vpop.f32.mrb[0].mxu0
          %v1015 = vpop.f32.mrb[0].mxu0
          %1016 = vdwg.mxu0
          %v1017 = vpack.c.bf16 %v1012, %v1012
          %1018 = vst.msk [vmem:[#allocation4] sm:$0xf] %vm898, %v1017
          %v1019 = vld [vmem:[%s9] sm:$0xf]
          %v1020 = vld [vmem:[%s9 + $0x4] sm:$0xf]
          %v1021 = vld [vmem:[%s9 + $0x8] sm:$0xf]
          %v1022 = vld [vmem:[%s9 + $0xc] sm:$0xf]
          %v1027 = vunpack.c.l.b16 %v1019
          %v1028 = vunpack.c.l.b16 %v1020
          %v1029 = vunpack.c.l.b16 %v1021
          %v1030 = vunpack.c.l.b16 %v1022
          %v1031 = vpack.c.b16 %v1028, %v1027
          %v1032 = vpack.c.b16 %v1030, %v1029
          %1035 = vmatprep.subr.bf16.mxu0 0
          %1036 = vmatpush1.bf16.msra.mxu0 %v1031
          %1037 = vmatprep.subr.bf16.mxu0 0
          %1038 = vmatpush1.bf16.msra.mxu0 %v1032
          %1039 = vmatprep.subr.bf16.mxu0 0
          %1040 = vmatpush1.bf16.msra.mxu0 0
          %1041 = vmatprep.subr.bf16.mxu0 0
          %1042 = vmatpush1.bf16.msra.mxu0 0
          %1043 = vmatprep.subr.bf16.mxu0 0
          %1044 = vmatpush1.bf16.msra.mxu0 0
          %1045 = vmatprep.subr.bf16.mxu0 0
          %1046 = vmatpush1.bf16.msra.mxu0 0
          %1047 = vmatprep.subr.bf16.mxu0 0
          %1048 = vmatpush1.bf16.msra.mxu0 0
          %1049 = vmatprep.subr.bf16.mxu0 0
          %1050 = vmatpush1.bf16.msra.mxu0 0
          %1051 = vmatprep.subr.bf16.mxu0 0
          %1052 = vmatpush1.bf16.msra.mxu0 0
          %1053 = vmatprep.subr.bf16.mxu0 0
          %1054 = vmatpush1.bf16.msra.mxu0 0
          %1055 = vmatprep.subr.bf16.mxu0 0
          %1056 = vmatpush1.bf16.msra.mxu0 0
          %1057 = vmatprep.subr.bf16.mxu0 0
          %1058 = vmatpush1.bf16.msra.mxu0 0
          %1059 = vmatprep.subr.bf16.mxu0 0
          %1060 = vmatpush1.bf16.msra.mxu0 0
          %1061 = vmatprep.subr.bf16.mxu0 0
          %1062 = vmatpush1.bf16.msra.mxu0 0
          %1063 = vmatprep.subr.bf16.mxu0 0
          %1064 = vmatpush1.bf16.msra.mxu0 0
          %1065 = vmatprep.subr.bf16.mxu0 0
          %1066 = vmatpush1.bf16.msra.mxu0 0
          %1067 = vmatprep.mubr.bf16.mxu0 0
          %1068 = vmatmul.mubr.bf16.gmra.mrb[0].mxu0 %v975
          %v1069 = vpop.f32.mrb[0].mxu0
          %v1070 = vadd.f32 0.0, %v1069
          %v1071 = vpop.f32.mrb[0].mxu0
          %v1072 = vpop.f32.mrb[0].mxu0
          %v1073 = vpop.f32.mrb[0].mxu0
          %1074 = vdwg.mxu0
          %v1075 = vpack.c.bf16 %v1070, %v1070
          %1076 = vst.msk [vmem:[#allocation5] sm:$0xf] %vm898, %v1075
        $region140: #{tpu_custom_call.1} parent=103 // pred_fallthru
          _
        %v1077 = vld [vmem:[%s819] sm:$0xff]
        %v1078 = vpack.c.bf16 %v1077, %v1077
        %v1079 = vld [vmem:[#allocation6] sm:$0xf]
        %v1080 = vld [vmem:[#allocation6 + $0x4] sm:$0xf]
        %v1081 = vld [vmem:[#allocation6 + $0x8] sm:$0xf]
        %v1082 = vld [vmem:[#allocation6 + $0xc] sm:$0xf]
        %v1087 = vunpack.c.l.b16 %v1079
        %v1088 = vunpack.c.l.b16 %v1080
        %v1089 = vunpack.c.l.b16 %v1081
        %v1090 = vunpack.c.l.b16 %v1082
        %v1091 = vpack.c.b16 %v1088, %v1087
        %v1092 = vpack.c.b16 %v1090, %v1089
        %vm1095 = vcmask 261120
        %v1097 = vsel %vm1095, %v1078, 0
        %1099 = vmatprep.subr.bf16.mxu0 0
        %1100 = vmatpush1.bf16.msra.mxu0 %v1091
        %1101 = vmatprep.subr.bf16.mxu0 0
        %1102 = vmatpush1.bf16.msra.mxu0 %v1092
        %1103 = vmatprep.subr.bf16.mxu0 0
        %1104 = vmatpush1.bf16.msra.mxu0 0
        %1105 = vmatprep.subr.bf16.mxu0 0
        %1106 = vmatpush1.bf16.msra.mxu0 0
        %1107 = vmatprep.subr.bf16.mxu0 0
        %1108 = vmatpush1.bf16.msra.mxu0 0
        %1109 = vmatprep.subr.bf16.mxu0 0
        %1110 = vmatpush1.bf16.msra.mxu0 0
        %1111 = vmatprep.subr.bf16.mxu0 0
        %1112 = vmatpush1.bf16.msra.mxu0 0
        %1113 = vmatprep.subr.bf16.mxu0 0
        %1114 = vmatpush1.bf16.msra.mxu0 0
        %1115 = vmatprep.subr.bf16.mxu0 0
        %1116 = vmatpush1.bf16.msra.mxu0 0
        %1117 = vmatprep.subr.bf16.mxu0 0
        %1118 = vmatpush1.bf16.msra.mxu0 0
        %1119 = vmatprep.subr.bf16.mxu0 0
        %1120 = vmatpush1.bf16.msra.mxu0 0
        %1121 = vmatprep.subr.bf16.mxu0 0
        %1122 = vmatpush1.bf16.msra.mxu0 0
        %1123 = vmatprep.subr.bf16.mxu0 0
        %1124 = vmatpush1.bf16.msra.mxu0 0
        %1125 = vmatprep.subr.bf16.mxu0 0
        %1126 = vmatpush1.bf16.msra.mxu0 0
        %1127 = vmatprep.subr.bf16.mxu0 0
        %1128 = vmatpush1.bf16.msra.mxu0 0
        %1129 = vmatprep.subr.bf16.mxu0 0
        %1130 = vmatpush1.bf16.msra.mxu0 0
        %1131 = vmatprep.mubr.bf16.mxu0 0
        %1132 = vmatmul.mubr.bf16.gmra.mrb[0].mxu0 %v1097
        %v1133 = vpop.f32.mrb[0].mxu0
        %v1134 = vadd.f32 0.0, %v1133
        %v1135 = vpop.f32.mrb[0].mxu0
        %v1136 = vpop.f32.mrb[0].mxu0
        %v1137 = vpop.f32.mrb[0].mxu0
        %1138 = vdwg.mxu0
        %v1139 = vld [vmem:[#allocation2] sm:$0xf]
        %v1140 = vld [vmem:[#allocation3] sm:$0xf]
        %v1141 = vpack.c.bf16 %v1134, %v1134
        %vm1142 = vcmask 64512
        %v1144 = vsel %vm1142, %v1141, 0
        %v1147 = vsel %vm1142, %v1139, 0
        %1149 = vmatprep.subr.bf16.mxu0 0
        %1150 = vmatpush1.bf16.xpose.msra.mxu0 %v1147
        %1151 = vmatprep.subr.bf16.mxu0 0
        %1152 = vmatpush1.bf16.xpose.msra.mxu0 0
        %1153 = vmatprep.subr.bf16.mxu0 0
        %1154 = vmatpush1.bf16.xpose.msra.mxu0 0
        %1155 = vmatprep.subr.bf16.mxu0 0
        %1156 = vmatpush1.bf16.xpose.msra.mxu0 0
        %1157 = vmatprep.subr.bf16.mxu0 0
        %1158 = vmatpush1.bf16.xpose.msra.mxu0 0
        %1159 = vmatprep.subr.bf16.mxu0 0
        %1160 = vmatpush1.bf16.xpose.msra.mxu0 0
        %1161 = vmatprep.subr.bf16.mxu0 0
        %1162 = vmatpush1.bf16.xpose.msra.mxu0 0
        %1163 = vmatprep.subr.bf16.mxu0 0
        %1164 = vmatpush1.bf16.xpose.msra.mxu0 0
        %1165 = vmatprep.subr.bf16.mxu0 0
        %1166 = vmatpush1.bf16.xpose.msra.mxu0 0
        %1167 = vmatprep.subr.bf16.mxu0 0
        %1168 = vmatpush1.bf16.xpose.msra.mxu0 0
        %1169 = vmatprep.subr.bf16.mxu0 0
        %1170 = vmatpush1.bf16.xpose.msra.mxu0 0
        %1171 = vmatprep.subr.bf16.mxu0 0
        %1172 = vmatpush1.bf16.xpose.msra.mxu0 0
        %1173 = vmatprep.subr.bf16.mxu0 0
        %1174 = vmatpush1.bf16.xpose.msra.mxu0 0
        %1175 = vmatprep.subr.bf16.mxu0 0
        %1176 = vmatpush1.bf16.xpose.msra.mxu0 0
        %1177 = vmatprep.subr.bf16.mxu0 0
        %1178 = vmatpush1.bf16.xpose.msra.mxu0 0
        %1179 = vmatprep.subr.bf16.mxu0 0
        %1180 = vmatpush1.bf16.xpose.msra.mxu0 0
        %1181 = vmatprep.mubr.bf16.mxu0 0
        %1182 = vmatmul.mubr.bf16.gmra.mrb[0].mxu0 %v1144
        %v1183 = vpop.f32.mrb[0].mxu0
        %v1184 = vadd.f32 0.0, %v1183
        %v1185 = vpop.f32.mrb[0].mxu0
        %v1186 = vpop.f32.mrb[0].mxu0
        %v1187 = vpop.f32.mrb[0].mxu0
        %1188 = vdwg.mxu0
        %v1189 = vsel %vm1142, %v1184, -inf
        %1190 = vmax.xlane.f32.xlu0 %v1189
        %v1191 = vpop.xlane.xlu0 %1190
        %v1192 = vsub.f32 %v1184, %v1191
        %v1193 = vmul.f32 %v1192, 1.442695
        %v1194 = vpow.pop %v1193
        %v1195 = vsel %vm1142, %v1194, 0.0
        %1196 = vadd.xlane.f32.xlu0 %v1195
        %v1197 = vpop.xlane.xlu0 %1196
        %v1198 = vrcp.pop %v1197
        %v1199 = vmul.f32 %v1194, %v1198
        %v1200 = vpack.c.bf16 %v1199, %v1199
        %v1202 = vsel %vm1142, %v1200, 0
        %vm1204 = vcmask 1043456
        %v1206 = vsel %vm1204, %v1140, 0
        %1208 = vmatprep.subr.bf16.mxu0 0
        %1209 = vmatpush1.bf16.msra.mxu0 %v1206
        %1210 = vmatprep.subr.bf16.mxu0 0
        %1211 = vmatpush1.bf16.msra.mxu0 0
        %1212 = vmatprep.subr.bf16.mxu0 0
        %1213 = vmatpush1.bf16.msra.mxu0 0
        %1214 = vmatprep.subr.bf16.mxu0 0
        %1215 = vmatpush1.bf16.msra.mxu0 0
        %1216 = vmatprep.subr.bf16.mxu0 0
        %1217 = vmatpush1.bf16.msra.mxu0 0
        %1218 = vmatprep.subr.bf16.mxu0 0
        %1219 = vmatpush1.bf16.msra.mxu0 0
        %1220 = vmatprep.subr.bf16.mxu0 0
        %1221 = vmatpush1.bf16.msra.mxu0 0
        %1222 = vmatprep.subr.bf16.mxu0 0
        %1223 = vmatpush1.bf16.msra.mxu0 0
        %1224 = vmatprep.subr.bf16.mxu0 0
        %1225 = vmatpush1.bf16.msra.mxu0 0
        %1226 = vmatprep.subr.bf16.mxu0 0
        %1227 = vmatpush1.bf16.msra.mxu0 0
        %1228 = vmatprep.subr.bf16.mxu0 0
        %1229 = vmatpush1.bf16.msra.mxu0 0
        %1230 = vmatprep.subr.bf16.mxu0 0
        %1231 = vmatpush1.bf16.msra.mxu0 0
        %1232 = vmatprep.subr.bf16.mxu0 0
        %1233 = vmatpush1.bf16.msra.mxu0 0
        %1234 = vmatprep.subr.bf16.mxu0 0
        %1235 = vmatpush1.bf16.msra.mxu0 0
        %1236 = vmatprep.subr.bf16.mxu0 0
        %1237 = vmatpush1.bf16.msra.mxu0 0
        %1238 = vmatprep.subr.bf16.mxu0 0
        %1239 = vmatpush1.bf16.msra.mxu0 0
        %1240 = vmatprep.mubr.bf16.mxu0 0
        %1241 = vmatmul.mubr.bf16.gmra.mrb[0].mxu0 %v1202
        %v1242 = vpop.f32.mrb[0].mxu0
        %v1243 = vadd.f32 0.0, %v1242
        %v1244 = vpop.f32.mrb[0].mxu0
        %v1245 = vpop.f32.mrb[0].mxu0
        %v1246 = vpop.f32.mrb[0].mxu0
        %1247 = vdwg.mxu0
        %v1248 = vpack.c.bf16 %v1243, %v1243
        %v1249 = vld [vmem:[#allocation12] sm:$0xf]
        %1251 = vrot.lane.b32.xlu0 %v1141, 120
        %v1252 = vpop.permute.xlu0 %1251
        %v1254 = vunpack.c.l.b16 %v1139
        %v1255 = vpack.c.b16 %v1254, %v1254
        %1256 = vrot.lane.b32.xlu0 %v1255, 120
        %v1257 = vpop.permute.xlu0 %1256
        %v1259 = vsel %vm1142, %v1252, 0
        %v1262 = vsel %vm1142, %v1257, 0
        %1264 = vmatprep.subr.bf16.mxu0 0
        %1265 = vmatpush1.bf16.xpose.msra.mxu0 %v1262
        %1266 = vmatprep.subr.bf16.mxu0 0
        %1267 = vmatpush1.bf16.xpose.msra.mxu0 0
        %1268 = vmatprep.subr.bf16.mxu0 0
        %1269 = vmatpush1.bf16.xpose.msra.mxu0 0
        %1270 = vmatprep.subr.bf16.mxu0 0
        %1271 = vmatpush1.bf16.xpose.msra.mxu0 0
        %1272 = vmatprep.subr.bf16.mxu0 0
        %1273 = vmatpush1.bf16.xpose.msra.mxu0 0
        %1274 = vmatprep.subr.bf16.mxu0 0
        %1275 = vmatpush1.bf16.xpose.msra.mxu0 0
        %1276 = vmatprep.subr.bf16.mxu0 0
        %1277 = vmatpush1.bf16.xpose.msra.mxu0 0
        %1278 = vmatprep.subr.bf16.mxu0 0
        %1279 = vmatpush1.bf16.xpose.msra.mxu0 0
        %1280 = vmatprep.subr.bf16.mxu0 0
        %1281 = vmatpush1.bf16.xpose.msra.mxu0 0
        %1282 = vmatprep.subr.bf16.mxu0 0
        %1283 = vmatpush1.bf16.xpose.msra.mxu0 0
        %1284 = vmatprep.subr.bf16.mxu0 0
        %1285 = vmatpush1.bf16.xpose.msra.mxu0 0
        %1286 = vmatprep.subr.bf16.mxu0 0
        %1287 = vmatpush1.bf16.xpose.msra.mxu0 0
        %1288 = vmatprep.subr.bf16.mxu0 0
        %1289 = vmatpush1.bf16.xpose.msra.mxu0 0
        %1290 = vmatprep.subr.bf16.mxu0 0
        %1291 = vmatpush1.bf16.xpose.msra.mxu0 0
        %1292 = vmatprep.subr.bf16.mxu0 0
        %1293 = vmatpush1.bf16.xpose.msra.mxu0 0
        %1294 = vmatprep.subr.bf16.mxu0 0
        %1295 = vmatpush1.bf16.xpose.msra.mxu0 0
        %1296 = vmatprep.mubr.bf16.mxu0 0
        %1297 = vmatmul.mubr.bf16.gmra.mrb[0].mxu0 %v1259
        %v1298 = vpop.f32.mrb[0].mxu0
        %v1299 = vadd.f32 0.0, %v1298
        %v1300 = vpop.f32.mrb[0].mxu0
        %v1301 = vpop.f32.mrb[0].mxu0
        %v1302 = vpop.f32.mrb[0].mxu0
        %1303 = vdwg.mxu0
        %v1304 = vsel %vm1142, %v1299, -inf
        %1305 = vmax.xlane.f32.xlu0 %v1304
        %v1306 = vpop.xlane.xlu0 %1305
        %v1307 = vsub.f32 %v1299, %v1306
        %v1308 = vmul.f32 %v1307, 1.442695
        %v1309 = vpow.pop %v1308
        %v1310 = vsel %vm1142, %v1309, 0.0
        %1311 = vadd.xlane.f32.xlu0 %v1310
        %v1312 = vpop.xlane.xlu0 %1311
        %v1313 = vrcp.pop %v1312
        %v1314 = vmul.f32 %v1309, %v1313
        %v1315 = vpack.c.bf16 %v1314, %v1314
        %v1317 = vunpack.c.l.b16 %v1140
        %v1318 = vpack.c.b16 %v1317, %v1317
        %1319 = vrot.lane.b32.xlu0 %v1318, 120
        %v1320 = vpop.permute.xlu0 %1319
        %v1322 = vsel %vm1142, %v1315, 0
        %v1325 = vsel %vm1204, %v1320, 0
        %1327 = vmatprep.subr.bf16.mxu0 0
        %1328 = vmatpush1.bf16.msra.mxu0 %v1325
        %1329 = vmatprep.subr.bf16.mxu0 0
        %1330 = vmatpush1.bf16.msra.mxu0 0
        %1331 = vmatprep.subr.bf16.mxu0 0
        %1332 = vmatpush1.bf16.msra.mxu0 0
        %1333 = vmatprep.subr.bf16.mxu0 0
        %1334 = vmatpush1.bf16.msra.mxu0 0
        %1335 = vmatprep.subr.bf16.mxu0 0
        %1336 = vmatpush1.bf16.msra.mxu0 0
        %1337 = vmatprep.subr.bf16.mxu0 0
        %1338 = vmatpush1.bf16.msra.mxu0 0
        %1339 = vmatprep.subr.bf16.mxu0 0
        %1340 = vmatpush1.bf16.msra.mxu0 0
        %1341 = vmatprep.subr.bf16.mxu0 0
        %1342 = vmatpush1.bf16.msra.mxu0 0
        %1343 = vmatprep.subr.bf16.mxu0 0
        %1344 = vmatpush1.bf16.msra.mxu0 0
        %1345 = vmatprep.subr.bf16.mxu0 0
        %1346 = vmatpush1.bf16.msra.mxu0 0
        %1347 = vmatprep.subr.bf16.mxu0 0
        %1348 = vmatpush1.bf16.msra.mxu0 0
        %1349 = vmatprep.subr.bf16.mxu0 0
        %1350 = vmatpush1.bf16.msra.mxu0 0
        %1351 = vmatprep.subr.bf16.mxu0 0
        %1352 = vmatpush1.bf16.msra.mxu0 0
        %1353 = vmatprep.subr.bf16.mxu0 0
        %1354 = vmatpush1.bf16.msra.mxu0 0
        %1355 = vmatprep.subr.bf16.mxu0 0
        %1356 = vmatpush1.bf16.msra.mxu0 0
        %1357 = vmatprep.subr.bf16.mxu0 0
        %1358 = vmatpush1.bf16.msra.mxu0 0
        %1359 = vmatprep.mubr.bf16.mxu0 0
        %1360 = vmatmul.mubr.bf16.gmra.mrb[0].mxu0 %v1322
        %v1361 = vpop.f32.mrb[0].mxu0
        %v1362 = vadd.f32 0.0, %v1361
        %v1363 = vpop.f32.mrb[0].mxu0
        %v1364 = vpop.f32.mrb[0].mxu0
        %v1365 = vpop.f32.mrb[0].mxu0
        %1366 = vdwg.mxu0
        %v1367 = vpack.c.bf16 %v1362, %v1362
        %v1368 = vld [vmem:[#allocation12 + $0x4] sm:$0xf]
        %v1370 = vsel %vm1142, %v1367, 0
        %v1373 = vsel %vm1204, %v1368, 0
        %1375 = vmatprep.subr.bf16.mxu0 0
        %1376 = vmatpush1.bf16.msra.mxu0 %v1373
        %1377 = vmatprep.subr.bf16.mxu0 0
        %1378 = vmatpush1.bf16.msra.mxu0 0
        %1379 = vmatprep.subr.bf16.mxu0 0
        %1380 = vmatpush1.bf16.msra.mxu0 0
        %1381 = vmatprep.subr.bf16.mxu0 0
        %1382 = vmatpush1.bf16.msra.mxu0 0
        %1383 = vmatprep.subr.bf16.mxu0 0
        %1384 = vmatpush1.bf16.msra.mxu0 0
        %1385 = vmatprep.subr.bf16.mxu0 0
        %1386 = vmatpush1.bf16.msra.mxu0 0
        %1387 = vmatprep.subr.bf16.mxu0 0
        %1388 = vmatpush1.bf16.msra.mxu0 0
        %1389 = vmatprep.subr.bf16.mxu0 0
        %1390 = vmatpush1.bf16.msra.mxu0 0
        %1391 = vmatprep.subr.bf16.mxu0 0
        %1392 = vmatpush1.bf16.msra.mxu0 0
        %1393 = vmatprep.subr.bf16.mxu0 0
        %1394 = vmatpush1.bf16.msra.mxu0 0
        %1395 = vmatprep.subr.bf16.mxu0 0
        %1396 = vmatpush1.bf16.msra.mxu0 0
        %1397 = vmatprep.subr.bf16.mxu0 0
        %1398 = vmatpush1.bf16.msra.mxu0 0
        %1399 = vmatprep.subr.bf16.mxu0 0
        %1400 = vmatpush1.bf16.msra.mxu0 0
        %1401 = vmatprep.subr.bf16.mxu0 0
        %1402 = vmatpush1.bf16.msra.mxu0 0
        %1403 = vmatprep.subr.bf16.mxu0 0
        %1404 = vmatpush1.bf16.msra.mxu0 0
        %1405 = vmatprep.subr.bf16.mxu0 0
        %1406 = vmatpush1.bf16.msra.mxu0 0
        %1407 = vmatprep.mubr.bf16.mxu0 0
        %1408 = vmatmul.mubr.bf16.gmra.mrb[0].mxu0 %v1370
        %v1409 = vpop.f32.mrb[0].mxu0
        %v1410 = vadd.f32 0.0, %v1409
        %v1411 = vpop.f32.mrb[0].mxu0
        %v1412 = vpop.f32.mrb[0].mxu0
        %v1413 = vpop.f32.mrb[0].mxu0
        %1414 = vdwg.mxu0
        %v1416 = vsel %vm1142, %v1248, 0
        %v1419 = vsel %vm1204, %v1249, 0
        %1421 = vmatprep.subr.bf16.mxu0 0
        %1422 = vmatpush1.bf16.msra.mxu0 %v1419
        %1423 = vmatprep.subr.bf16.mxu0 0
        %1424 = vmatpush1.bf16.msra.mxu0 0
        %1425 = vmatprep.subr.bf16.mxu0 0
        %1426 = vmatpush1.bf16.msra.mxu0 0
        %1427 = vmatprep.subr.bf16.mxu0 0
        %1428 = vmatpush1.bf16.msra.mxu0 0
        %1429 = vmatprep.subr.bf16.mxu0 0
        %1430 = vmatpush1.bf16.msra.mxu0 0
        %1431 = vmatprep.subr.bf16.mxu0 0
        %1432 = vmatpush1.bf16.msra.mxu0 0
        %1433 = vmatprep.subr.bf16.mxu0 0
        %1434 = vmatpush1.bf16.msra.mxu0 0
        %1435 = vmatprep.subr.bf16.mxu0 0
        %1436 = vmatpush1.bf16.msra.mxu0 0
        %1437 = vmatprep.subr.bf16.mxu0 0
        %1438 = vmatpush1.bf16.msra.mxu0 0
        %1439 = vmatprep.subr.bf16.mxu0 0
        %1440 = vmatpush1.bf16.msra.mxu0 0
        %1441 = vmatprep.subr.bf16.mxu0 0
        %1442 = vmatpush1.bf16.msra.mxu0 0
        %1443 = vmatprep.subr.bf16.mxu0 0
        %1444 = vmatpush1.bf16.msra.mxu0 0
        %1445 = vmatprep.subr.bf16.mxu0 0
        %1446 = vmatpush1.bf16.msra.mxu0 0
        %1447 = vmatprep.subr.bf16.mxu0 0
        %1448 = vmatpush1.bf16.msra.mxu0 0
        %1449 = vmatprep.subr.bf16.mxu0 0
        %1450 = vmatpush1.bf16.msra.mxu0 0
        %1451 = vmatprep.subr.bf16.mxu0 0
        %1452 = vmatpush1.bf16.msra.mxu0 0
        %1453 = vmatprep.mubr.bf16.mxu0 0
        %1454 = vmatmul.mubr.bf16.gmra.mrb[0].mxu0 %v1416
        %v1455 = vpop.f32.mrb[0].mxu0
        %v1456 = vadd.f32 %v1410, %v1455
        %v1457 = vpop.f32.mrb[0].mxu0
        %v1458 = vpop.f32.mrb[0].mxu0
        %v1459 = vpop.f32.mrb[0].mxu0
        %1460 = vdwg.mxu0
        %1461 = vrot.lane.b32.xlu0 %v1141, 112
        %v1462 = vpop.permute.xlu0 %1461
        %1463 = vrot.lane.b32.xlu0 %v1255, 112
        %v1464 = vpop.permute.xlu0 %1463
        %v1466 = vsel %vm1142, %v1462, 0
        %v1469 = vsel %vm1142, %v1464, 0
        %1471 = vmatprep.subr.bf16.mxu0 0
        %1472 = vmatpush1.bf16.xpose.msra.mxu0 %v1469
        %1473 = vmatprep.subr.bf16.mxu0 0
        %1474 = vmatpush1.bf16.xpose.msra.mxu0 0
        %1475 = vmatprep.subr.bf16.mxu0 0
        %1476 = vmatpush1.bf16.xpose.msra.mxu0 0
        %1477 = vmatprep.subr.bf16.mxu0 0
        %1478 = vmatpush1.bf16.xpose.msra.mxu0 0
        %1479 = vmatprep.subr.bf16.mxu0 0
        %1480 = vmatpush1.bf16.xpose.msra.mxu0 0
        %1481 = vmatprep.subr.bf16.mxu0 0
        %1482 = vmatpush1.bf16.xpose.msra.mxu0 0
        %1483 = vmatprep.subr.bf16.mxu0 0
        %1484 = vmatpush1.bf16.xpose.msra.mxu0 0
        %1485 = vmatprep.subr.bf16.mxu0 0
        %1486 = vmatpush1.bf16.xpose.msra.mxu0 0
        %1487 = vmatprep.subr.bf16.mxu0 0
        %1488 = vmatpush1.bf16.xpose.msra.mxu0 0
        %1489 = vmatprep.subr.bf16.mxu0 0
        %1490 = vmatpush1.bf16.xpose.msra.mxu0 0
        %1491 = vmatprep.subr.bf16.mxu0 0
        %1492 = vmatpush1.bf16.xpose.msra.mxu0 0
        %1493 = vmatprep.subr.bf16.mxu0 0
        %1494 = vmatpush1.bf16.xpose.msra.mxu0 0
        %1495 = vmatprep.subr.bf16.mxu0 0
        %1496 = vmatpush1.bf16.xpose.msra.mxu0 0
        %1497 = vmatprep.subr.bf16.mxu0 0
        %1498 = vmatpush1.bf16.xpose.msra.mxu0 0
        %1499 = vmatprep.subr.bf16.mxu0 0
        %1500 = vmatpush1.bf16.xpose.msra.mxu0 0
        %1501 = vmatprep.subr.bf16.mxu0 0
        %1502 = vmatpush1.bf16.xpose.msra.mxu0 0
        %1503 = vmatprep.mubr.bf16.mxu0 0
        %1504 = vmatmul.mubr.bf16.gmra.mrb[0].mxu0 %v1466
        %v1505 = vpop.f32.mrb[0].mxu0
        %v1506 = vadd.f32 0.0, %v1505
        %v1507 = vpop.f32.mrb[0].mxu0
        %v1508 = vpop.f32.mrb[0].mxu0
        %v1509 = vpop.f32.mrb[0].mxu0
        %1510 = vdwg.mxu0
        %v1511 = vsel %vm1142, %v1506, -inf
        %1512 = vmax.xlane.f32.xlu0 %v1511
        %v1513 = vpop.xlane.xlu0 %1512
        %v1514 = vsub.f32 %v1506, %v1513
        %v1515 = vmul.f32 %v1514, 1.442695
        %v1516 = vpow.pop %v1515
        %v1517 = vsel %vm1142, %v1516, 0.0
        %1518 = vadd.xlane.f32.xlu0 %v1517
        %v1519 = vpop.xlane.xlu0 %1518
        %v1520 = vrcp.pop %v1519
        %v1521 = vmul.f32 %v1516, %v1520
        %v1522 = vpack.c.bf16 %v1521, %v1521
        %1523 = vrot.lane.b32.xlu0 %v1318, 112
        %v1524 = vpop.permute.xlu0 %1523
        %v1526 = vsel %vm1142, %v1522, 0
        %v1529 = vsel %vm1204, %v1524, 0
        %1531 = vmatprep.subr.bf16.mxu0 0
        %1532 = vmatpush1.bf16.msra.mxu0 %v1529
        %1533 = vmatprep.subr.bf16.mxu0 0
        %1534 = vmatpush1.bf16.msra.mxu0 0
        %1535 = vmatprep.subr.bf16.mxu0 0
        %1536 = vmatpush1.bf16.msra.mxu0 0
        %1537 = vmatprep.subr.bf16.mxu0 0
        %1538 = vmatpush1.bf16.msra.mxu0 0
        %1539 = vmatprep.subr.bf16.mxu0 0
        %1540 = vmatpush1.bf16.msra.mxu0 0
        %1541 = vmatprep.subr.bf16.mxu0 0
        %1542 = vmatpush1.bf16.msra.mxu0 0
        %1543 = vmatprep.subr.bf16.mxu0 0
        %1544 = vmatpush1.bf16.msra.mxu0 0
        %1545 = vmatprep.subr.bf16.mxu0 0
        %1546 = vmatpush1.bf16.msra.mxu0 0
        %1547 = vmatprep.subr.bf16.mxu0 0
        %1548 = vmatpush1.bf16.msra.mxu0 0
        %1549 = vmatprep.subr.bf16.mxu0 0
        %1550 = vmatpush1.bf16.msra.mxu0 0
        %1551 = vmatprep.subr.bf16.mxu0 0
        %1552 = vmatpush1.bf16.msra.mxu0 0
        %1553 = vmatprep.subr.bf16.mxu0 0
        %1554 = vmatpush1.bf16.msra.mxu0 0
        %1555 = vmatprep.subr.bf16.mxu0 0
        %1556 = vmatpush1.bf16.msra.mxu0 0
        %1557 = vmatprep.subr.bf16.mxu0 0
        %1558 = vmatpush1.bf16.msra.mxu0 0
        %1559 = vmatprep.subr.bf16.mxu0 0
        %1560 = vmatpush1.bf16.msra.mxu0 0
        %1561 = vmatprep.subr.bf16.mxu0 0
        %1562 = vmatpush1.bf16.msra.mxu0 0
        %1563 = vmatprep.mubr.bf16.mxu0 0
        %1564 = vmatmul.mubr.bf16.gmra.mrb[0].mxu0 %v1526
        %v1565 = vpop.f32.mrb[0].mxu0
        %v1566 = vadd.f32 0.0, %v1565
        %v1567 = vpop.f32.mrb[0].mxu0
        %v1568 = vpop.f32.mrb[0].mxu0
        %v1569 = vpop.f32.mrb[0].mxu0
        %1570 = vdwg.mxu0
        %v1571 = vpack.c.bf16 %v1566, %v1566
        %v1572 = vld [vmem:[#allocation12 + $0x8] sm:$0xf]
        %v1574 = vsel %vm1142, %v1571, 0
        %v1577 = vsel %vm1204, %v1572, 0
        %1579 = vmatprep.subr.bf16.mxu0 0
        %1580 = vmatpush1.bf16.msra.mxu0 %v1577
        %1581 = vmatprep.subr.bf16.mxu0 0
        %1582 = vmatpush1.bf16.msra.mxu0 0
        %1583 = vmatprep.subr.bf16.mxu0 0
        %1584 = vmatpush1.bf16.msra.mxu0 0
        %1585 = vmatprep.subr.bf16.mxu0 0
        %1586 = vmatpush1.bf16.msra.mxu0 0
        %1587 = vmatprep.subr.bf16.mxu0 0
        %1588 = vmatpush1.bf16.msra.mxu0 0
        %1589 = vmatprep.subr.bf16.mxu0 0
        %1590 = vmatpush1.bf16.msra.mxu0 0
        %1591 = vmatprep.subr.bf16.mxu0 0
        %1592 = vmatpush1.bf16.msra.mxu0 0
        %1593 = vmatprep.subr.bf16.mxu0 0
        %1594 = vmatpush1.bf16.msra.mxu0 0
        %1595 = vmatprep.subr.bf16.mxu0 0
        %1596 = vmatpush1.bf16.msra.mxu0 0
        %1597 = vmatprep.subr.bf16.mxu0 0
        %1598 = vmatpush1.bf16.msra.mxu0 0
        %1599 = vmatprep.subr.bf16.mxu0 0
        %1600 = vmatpush1.bf16.msra.mxu0 0
        %1601 = vmatprep.subr.bf16.mxu0 0
        %1602 = vmatpush1.bf16.msra.mxu0 0
        %1603 = vmatprep.subr.bf16.mxu0 0
        %1604 = vmatpush1.bf16.msra.mxu0 0
        %1605 = vmatprep.subr.bf16.mxu0 0
        %1606 = vmatpush1.bf16.msra.mxu0 0
        %1607 = vmatprep.subr.bf16.mxu0 0
        %1608 = vmatpush1.bf16.msra.mxu0 0
        %1609 = vmatprep.subr.bf16.mxu0 0
        %1610 = vmatpush1.bf16.msra.mxu0 0
        %1611 = vmatprep.mubr.bf16.mxu0 0
        %1612 = vmatmul.mubr.bf16.gmra.mrb[0].mxu0 %v1574
        %v1613 = vpop.f32.mrb[0].mxu0
        %v1614 = vadd.f32 0.0, %v1613
        %v1615 = vpop.f32.mrb[0].mxu0
        %v1616 = vpop.f32.mrb[0].mxu0
        %v1617 = vpop.f32.mrb[0].mxu0
        %1618 = vdwg.mxu0
        %v1619 = vadd.f32 %v1456, %v1614
        %1620 = vrot.lane.b32.xlu0 %v1141, 104
        %v1621 = vpop.permute.xlu0 %1620
        %1622 = vrot.lane.b32.xlu0 %v1255, 104
        %v1623 = vpop.permute.xlu0 %1622
        %v1625 = vsel %vm1142, %v1621, 0
        %v1628 = vsel %vm1142, %v1623, 0
        %1630 = vmatprep.subr.bf16.mxu0 0
        %1631 = vmatpush1.bf16.xpose.msra.mxu0 %v1628
        %1632 = vmatprep.subr.bf16.mxu0 0
        %1633 = vmatpush1.bf16.xpose.msra.mxu0 0
        %1634 = vmatprep.subr.bf16.mxu0 0
        %1635 = vmatpush1.bf16.xpose.msra.mxu0 0
        %1636 = vmatprep.subr.bf16.mxu0 0
        %1637 = vmatpush1.bf16.xpose.msra.mxu0 0
        %1638 = vmatprep.subr.bf16.mxu0 0
        %1639 = vmatpush1.bf16.xpose.msra.mxu0 0
        %1640 = vmatprep.subr.bf16.mxu0 0
        %1641 = vmatpush1.bf16.xpose.msra.mxu0 0
        %1642 = vmatprep.subr.bf16.mxu0 0
        %1643 = vmatpush1.bf16.xpose.msra.mxu0 0
        %1644 = vmatprep.subr.bf16.mxu0 0
        %1645 = vmatpush1.bf16.xpose.msra.mxu0 0
        %1646 = vmatprep.subr.bf16.mxu0 0
        %1647 = vmatpush1.bf16.xpose.msra.mxu0 0
        %1648 = vmatprep.subr.bf16.mxu0 0
        %1649 = vmatpush1.bf16.xpose.msra.mxu0 0
        %1650 = vmatprep.subr.bf16.mxu0 0
        %1651 = vmatpush1.bf16.xpose.msra.mxu0 0
        %1652 = vmatprep.subr.bf16.mxu0 0
        %1653 = vmatpush1.bf16.xpose.msra.mxu0 0
        %1654 = vmatprep.subr.bf16.mxu0 0
        %1655 = vmatpush1.bf16.xpose.msra.mxu0 0
        %1656 = vmatprep.subr.bf16.mxu0 0
        %1657 = vmatpush1.bf16.xpose.msra.mxu0 0
        %1658 = vmatprep.subr.bf16.mxu0 0
        %1659 = vmatpush1.bf16.xpose.msra.mxu0 0
        %1660 = vmatprep.subr.bf16.mxu0 0
        %1661 = vmatpush1.bf16.xpose.msra.mxu0 0
        %1662 = vmatprep.mubr.bf16.mxu0 0
        %1663 = vmatmul.mubr.bf16.gmra.mrb[0].mxu0 %v1625
        %v1664 = vpop.f32.mrb[0].mxu0
        %v1665 = vadd.f32 0.0, %v1664
        %v1666 = vpop.f32.mrb[0].mxu0
        %v1667 = vpop.f32.mrb[0].mxu0
        %v1668 = vpop.f32.mrb[0].mxu0
        %1669 = vdwg.mxu0
        %v1670 = vsel %vm1142, %v1665, -inf
        %1671 = vmax.xlane.f32.xlu0 %v1670
        %v1672 = vpop.xlane.xlu0 %1671
        %v1673 = vsub.f32 %v1665, %v1672
        %v1674 = vmul.f32 %v1673, 1.442695
        %v1675 = vpow.pop %v1674
        %v1676 = vsel %vm1142, %v1675, 0.0
        %1677 = vadd.xlane.f32.xlu0 %v1676
        %v1678 = vpop.xlane.xlu0 %1677
        %v1679 = vrcp.pop %v1678
        %v1680 = vmul.f32 %v1675, %v1679
        %v1681 = vpack.c.bf16 %v1680, %v1680
        %1682 = vrot.lane.b32.xlu0 %v1318, 104
        %v1683 = vpop.permute.xlu0 %1682
        %v1685 = vsel %vm1142, %v1681, 0
        %v1688 = vsel %vm1204, %v1683, 0
        %1690 = vmatprep.subr.bf16.mxu0 0
        %1691 = vmatpush1.bf16.msra.mxu0 %v1688
        %1692 = vmatprep.subr.bf16.mxu0 0
        %1693 = vmatpush1.bf16.msra.mxu0 0
        %1694 = vmatprep.subr.bf16.mxu0 0
        %1695 = vmatpush1.bf16.msra.mxu0 0
        %1696 = vmatprep.subr.bf16.mxu0 0
        %1697 = vmatpush1.bf16.msra.mxu0 0
        %1698 = vmatprep.subr.bf16.mxu0 0
        %1699 = vmatpush1.bf16.msra.mxu0 0
        %1700 = vmatprep.subr.bf16.mxu0 0
        %1701 = vmatpush1.bf16.msra.mxu0 0
        %1702 = vmatprep.subr.bf16.mxu0 0
        %1703 = vmatpush1.bf16.msra.mxu0 0
        %1704 = vmatprep.subr.bf16.mxu0 0
        %1705 = vmatpush1.bf16.msra.mxu0 0
        %1706 = vmatprep.subr.bf16.mxu0 0
        %1707 = vmatpush1.bf16.msra.mxu0 0
        %1708 = vmatprep.subr.bf16.mxu0 0
        %1709 = vmatpush1.bf16.msra.mxu0 0
        %1710 = vmatprep.subr.bf16.mxu0 0
        %1711 = vmatpush1.bf16.msra.mxu0 0
        %1712 = vmatprep.subr.bf16.mxu0 0
        %1713 = vmatpush1.bf16.msra.mxu0 0
        %1714 = vmatprep.subr.bf16.mxu0 0
        %1715 = vmatpush1.bf16.msra.mxu0 0
        %1716 = vmatprep.subr.bf16.mxu0 0
        %1717 = vmatpush1.bf16.msra.mxu0 0
        %1718 = vmatprep.subr.bf16.mxu0 0
        %1719 = vmatpush1.bf16.msra.mxu0 0
        %1720 = vmatprep.subr.bf16.mxu0 0
        %1721 = vmatpush1.bf16.msra.mxu0 0
        %1722 = vmatprep.mubr.bf16.mxu0 0
        %1723 = vmatmul.mubr.bf16.gmra.mrb[0].mxu0 %v1685
        %v1724 = vpop.f32.mrb[0].mxu0
        %v1725 = vadd.f32 0.0, %v1724
        %v1726 = vpop.f32.mrb[0].mxu0
        %v1727 = vpop.f32.mrb[0].mxu0
        %v1728 = vpop.f32.mrb[0].mxu0
        %1729 = vdwg.mxu0
        %v1730 = vpack.c.bf16 %v1725, %v1725
        %v1731 = vld [vmem:[#allocation12 + $0xc] sm:$0xf]
        %v1733 = vsel %vm1142, %v1730, 0
        %v1736 = vsel %vm1204, %v1731, 0
        %1738 = vmatprep.subr.bf16.mxu0 0
        %1739 = vmatpush1.bf16.msra.mxu0 %v1736
        %1740 = vmatprep.subr.bf16.mxu0 0
        %1741 = vmatpush1.bf16.msra.mxu0 0
        %1742 = vmatprep.subr.bf16.mxu0 0
        %1743 = vmatpush1.bf16.msra.mxu0 0
        %1744 = vmatprep.subr.bf16.mxu0 0
        %1745 = vmatpush1.bf16.msra.mxu0 0
        %1746 = vmatprep.subr.bf16.mxu0 0
        %1747 = vmatpush1.bf16.msra.mxu0 0
        %1748 = vmatprep.subr.bf16.mxu0 0
        %1749 = vmatpush1.bf16.msra.mxu0 0
        %1750 = vmatprep.subr.bf16.mxu0 0
        %1751 = vmatpush1.bf16.msra.mxu0 0
        %1752 = vmatprep.subr.bf16.mxu0 0
        %1753 = vmatpush1.bf16.msra.mxu0 0
        %1754 = vmatprep.subr.bf16.mxu0 0
        %1755 = vmatpush1.bf16.msra.mxu0 0
        %1756 = vmatprep.subr.bf16.mxu0 0
        %1757 = vmatpush1.bf16.msra.mxu0 0
        %1758 = vmatprep.subr.bf16.mxu0 0
        %1759 = vmatpush1.bf16.msra.mxu0 0
        %1760 = vmatprep.subr.bf16.mxu0 0
        %1761 = vmatpush1.bf16.msra.mxu0 0
        %1762 = vmatprep.subr.bf16.mxu0 0
        %1763 = vmatpush1.bf16.msra.mxu0 0
        %1764 = vmatprep.subr.bf16.mxu0 0
        %1765 = vmatpush1.bf16.msra.mxu0 0
        %1766 = vmatprep.subr.bf16.mxu0 0
        %1767 = vmatpush1.bf16.msra.mxu0 0
        %1768 = vmatprep.subr.bf16.mxu0 0
        %1769 = vmatpush1.bf16.msra.mxu0 0
        %1770 = vmatprep.mubr.bf16.mxu0 0
        %1771 = vmatmul.mubr.bf16.gmra.mrb[0].mxu0 %v1733
        %v1772 = vpop.f32.mrb[0].mxu0
        %v1773 = vadd.f32 0.0, %v1772
        %v1774 = vpop.f32.mrb[0].mxu0
        %v1775 = vpop.f32.mrb[0].mxu0
        %v1776 = vpop.f32.mrb[0].mxu0
        %1777 = vdwg.mxu0
        %v1778 = vadd.f32 %v1619, %v1773
        %v1779 = vadd.f32 %v1077, %v1778
        %v1780 = vsel %vm1095, %v1779, 0.0
        %1781 = vadd.xlane.f32.xlu0 %v1780
        %v1782 = vpop.xlane.xlu0 %1781
        %v1783 = vrcp.pop 32.0
        %v1784 = vmul.f32 %v1782, %v1783
        %v1785 = vsub.f32 %v1779, %v1784
        %v1786 = vmul.f32 %v1785, %v1785
        %v1787 = vsel %vm1095, %v1786, 0.0
        %1788 = vadd.xlane.f32.xlu0 %v1787
        %v1789 = vpop.xlane.xlu0 %1788
        %v1790 = vmul.f32 %v1789, %v1783
        %v1791 = vadd.f32 %v1790, 1e-05
        %v1792 = vrsqrt.pop %v1791
        %v1793 = vmul.f32 %v1785, %v1792
        %v1794 = vld [vmem:[%s15] sm:$0x1]
        %v1796 = vlaneseq
        %v1797 = vshrl.u32 %v1796, 7
        %v1798 = vsub.s32 0, %v1797
        %v1799 = vrot.slane %v1794, %v1798
        %v1801 = vmul.f32 %v1793, %v1799
        %v1802 = vld [vmem:[%s16] sm:$0x1]
        %v1804 = vlaneseq
        %v1805 = vshrl.u32 %v1804, 7
        %v1806 = vsub.s32 0, %v1805
        %v1807 = vrot.slane %v1802, %v1806
        %v1809 = vadd.f32 %v1801, %v1807
        %v1810 = vpack.c.bf16 %v1809, %v1809
        %v1811 = vld [vmem:[#allocation14] sm:$0xf]
        %v1812 = vld [vmem:[#allocation14 + $0x4] sm:$0xf]
        %v1813 = vld [vmem:[#allocation14 + $0x8] sm:$0xf]
        %v1814 = vld [vmem:[#allocation14 + $0xc] sm:$0xf]
        %v1819 = vunpack.c.l.b16 %v1811
        %v1820 = vunpack.c.l.b16 %v1812
        %v1821 = vunpack.c.l.b16 %v1813
        %v1822 = vunpack.c.l.b16 %v1814
        %v1823 = vpack.c.b16 %v1820, %v1819
        %v1824 = vpack.c.b16 %v1822, %v1821
        %v1828 = vsel %vm1095, %v1810, 0
        %1830 = vmatprep.subr.bf16.mxu0 0
        %1831 = vmatpush1.bf16.msra.mxu0 %v1823
        %1832 = vmatprep.subr.bf16.mxu0 0
        %1833 = vmatpush1.bf16.msra.mxu0 %v1824
        %1834 = vmatprep.subr.bf16.mxu0 0
        %1835 = vmatpush1.bf16.msra.mxu0 0
        %1836 = vmatprep.subr.bf16.mxu0 0
        %1837 = vmatpush1.bf16.msra.mxu0 0
        %1838 = vmatprep.subr.bf16.mxu0 0
        %1839 = vmatpush1.bf16.msra.mxu0 0
        %1840 = vmatprep.subr.bf16.mxu0 0
        %1841 = vmatpush1.bf16.msra.mxu0 0
        %1842 = vmatprep.subr.bf16.mxu0 0
        %1843 = vmatpush1.bf16.msra.mxu0 0
        %1844 = vmatprep.subr.bf16.mxu0 0
        %1845 = vmatpush1.bf16.msra.mxu0 0
        %1846 = vmatprep.subr.bf16.mxu0 0
        %1847 = vmatpush1.bf16.msra.mxu0 0
        %1848 = vmatprep.subr.bf16.mxu0 0
        %1849 = vmatpush1.bf16.msra.mxu0 0
        %1850 = vmatprep.subr.bf16.mxu0 0
        %1851 = vmatpush1.bf16.msra.mxu0 0
        %1852 = vmatprep.subr.bf16.mxu0 0
        %1853 = vmatpush1.bf16.msra.mxu0 0
        %1854 = vmatprep.subr.bf16.mxu0 0
        %1855 = vmatpush1.bf16.msra.mxu0 0
        %1856 = vmatprep.subr.bf16.mxu0 0
        %1857 = vmatpush1.bf16.msra.mxu0 0
        %1858 = vmatprep.subr.bf16.mxu0 0
        %1859 = vmatpush1.bf16.msra.mxu0 0
        %1860 = vmatprep.subr.bf16.mxu0 0
        %1861 = vmatpush1.bf16.msra.mxu0 0
        %1862 = vmatprep.mubr.bf16.mxu0 0
        %1863 = vmatmul.mubr.bf16.gmra.mrb[0].mxu0 %v1828
        %v1864 = vpop.f32.mrb[0].mxu0
        %v1865 = vadd.f32 0.0, %v1864
        %v1866 = vpop.f32.mrb[0].mxu0
        %v1867 = vpop.f32.mrb[0].mxu0
        %v1868 = vpop.f32.mrb[0].mxu0
        %1869 = vdwg.mxu0
        %v1870 = vld [vmem:[#allocation4] sm:$0xf]
        %v1871 = vld [vmem:[#allocation5] sm:$0xf]
        %v1872 = vpack.c.bf16 %v1865, %v1865
        %v1874 = vsel %vm1142, %v1872, 0
        %v1877 = vsel %vm1142, %v1870, 0
        %1879 = vmatprep.subr.bf16.mxu0 0
        %1880 = vmatpush1.bf16.xpose.msra.mxu0 %v1877
        %1881 = vmatprep.subr.bf16.mxu0 0
        %1882 = vmatpush1.bf16.xpose.msra.mxu0 0
        %1883 = vmatprep.subr.bf16.mxu0 0
        %1884 = vmatpush1.bf16.xpose.msra.mxu0 0
        %1885 = vmatprep.subr.bf16.mxu0 0
        %1886 = vmatpush1.bf16.xpose.msra.mxu0 0
        %1887 = vmatprep.subr.bf16.mxu0 0
        %1888 = vmatpush1.bf16.xpose.msra.mxu0 0
        %1889 = vmatprep.subr.bf16.mxu0 0
        %1890 = vmatpush1.bf16.xpose.msra.mxu0 0
        %1891 = vmatprep.subr.bf16.mxu0 0
        %1892 = vmatpush1.bf16.xpose.msra.mxu0 0
        %1893 = vmatprep.subr.bf16.mxu0 0
        %1894 = vmatpush1.bf16.xpose.msra.mxu0 0
        %1895 = vmatprep.subr.bf16.mxu0 0
        %1896 = vmatpush1.bf16.xpose.msra.mxu0 0
        %1897 = vmatprep.subr.bf16.mxu0 0
        %1898 = vmatpush1.bf16.xpose.msra.mxu0 0
        %1899 = vmatprep.subr.bf16.mxu0 0
        %1900 = vmatpush1.bf16.xpose.msra.mxu0 0
        %1901 = vmatprep.subr.bf16.mxu0 0
        %1902 = vmatpush1.bf16.xpose.msra.mxu0 0
        %1903 = vmatprep.subr.bf16.mxu0 0
        %1904 = vmatpush1.bf16.xpose.msra.mxu0 0
        %1905 = vmatprep.subr.bf16.mxu0 0
        %1906 = vmatpush1.bf16.xpose.msra.mxu0 0
        %1907 = vmatprep.subr.bf16.mxu0 0
        %1908 = vmatpush1.bf16.xpose.msra.mxu0 0
        %1909 = vmatprep.subr.bf16.mxu0 0
        %1910 = vmatpush1.bf16.xpose.msra.mxu0 0
        %1911 = vmatprep.mubr.bf16.mxu0 0
        %1912 = vmatmul.mubr.bf16.gmra.mrb[0].mxu0 %v1874
        %v1913 = vpop.f32.mrb[0].mxu0
        %v1914 = vadd.f32 0.0, %v1913
        %v1915 = vpop.f32.mrb[0].mxu0
        %v1916 = vpop.f32.mrb[0].mxu0
        %v1917 = vpop.f32.mrb[0].mxu0
        %1918 = vdwg.mxu0
        %v1919 = vsel %vm1142, %v1914, -inf
        %1920 = vmax.xlane.f32.xlu0 %v1919
        %v1921 = vpop.xlane.xlu0 %1920
        %v1922 = vsub.f32 %v1914, %v1921
        %v1923 = vmul.f32 %v1922, 1.442695
        %v1924 = vpow.pop %v1923
        %v1925 = vsel %vm1142, %v1924, 0.0
        %1926 = vadd.xlane.f32.xlu0 %v1925
        %v1927 = vpop.xlane.xlu0 %1926
        %v1928 = vrcp.pop %v1927
        %v1929 = vmul.f32 %v1924, %v1928
        %v1930 = vpack.c.bf16 %v1929, %v1929
        %v1932 = vsel %vm1142, %v1930, 0
        %v1935 = vsel %vm1204, %v1871, 0
        %1937 = vmatprep.subr.bf16.mxu0 0
        %1938 = vmatpush1.bf16.msra.mxu0 %v1935
        %1939 = vmatprep.subr.bf16.mxu0 0
        %1940 = vmatpush1.bf16.msra.mxu0 0
        %1941 = vmatprep.subr.bf16.mxu0 0
        %1942 = vmatpush1.bf16.msra.mxu0 0
        %1943 = vmatprep.subr.bf16.mxu0 0
        %1944 = vmatpush1.bf16.msra.mxu0 0
        %1945 = vmatprep.subr.bf16.mxu0 0
        %1946 = vmatpush1.bf16.msra.mxu0 0
        %1947 = vmatprep.subr.bf16.mxu0 0
        %1948 = vmatpush1.bf16.msra.mxu0 0
        %1949 = vmatprep.subr.bf16.mxu0 0
        %1950 = vmatpush1.bf16.msra.mxu0 0
        %1951 = vmatprep.subr.bf16.mxu0 0
        %1952 = vmatpush1.bf16.msra.mxu0 0
        %1953 = vmatprep.subr.bf16.mxu0 0
        %1954 = vmatpush1.bf16.msra.mxu0 0
        %1955 = vmatprep.subr.bf16.mxu0 0
        %1956 = vmatpush1.bf16.msra.mxu0 0
        %1957 = vmatprep.subr.bf16.mxu0 0
        %1958 = vmatpush1.bf16.msra.mxu0 0
        %1959 = vmatprep.subr.bf16.mxu0 0
        %1960 = vmatpush1.bf16.msra.mxu0 0
        %1961 = vmatprep.subr.bf16.mxu0 0
        %1962 = vmatpush1.bf16.msra.mxu0 0
        %1963 = vmatprep.subr.bf16.mxu0 0
        %1964 = vmatpush1.bf16.msra.mxu0 0
        %1965 = vmatprep.subr.bf16.mxu0 0
        %1966 = vmatpush1.bf16.msra.mxu0 0
        %1967 = vmatprep.subr.bf16.mxu0 0
        %1968 = vmatpush1.bf16.msra.mxu0 0
        %1969 = vmatprep.mubr.bf16.mxu0 0
        %1970 = vmatmul.mubr.bf16.gmra.mrb[0].mxu0 %v1932
        %v1971 = vpop.f32.mrb[0].mxu0
        %v1972 = vadd.f32 0.0, %v1971
        %v1973 = vpop.f32.mrb[0].mxu0
        %v1974 = vpop.f32.mrb[0].mxu0
        %v1975 = vpop.f32.mrb[0].mxu0
        %1976 = vdwg.mxu0
        %v1977 = vpack.c.bf16 %v1972, %v1972
        %v1978 = vld [vmem:[#allocation17] sm:$0xf]
        %1980 = vrot.lane.b32.xlu0 %v1872, 120
        %v1981 = vpop.permute.xlu0 %1980
        %v1983 = vunpack.c.l.b16 %v1870
        %v1984 = vpack.c.b16 %v1983, %v1983
        %1985 = vrot.lane.b32.xlu0 %v1984, 120
        %v1986 = vpop.permute.xlu0 %1985
        %v1988 = vsel %vm1142, %v1981, 0
        %v1991 = vsel %vm1142, %v1986, 0
        %1993 = vmatprep.subr.bf16.mxu0 0
        %1994 = vmatpush1.bf16.xpose.msra.mxu0 %v1991
        %1995 = vmatprep.subr.bf16.mxu0 0
        %1996 = vmatpush1.bf16.xpose.msra.mxu0 0
        %1997 = vmatprep.subr.bf16.mxu0 0
        %1998 = vmatpush1.bf16.xpose.msra.mxu0 0
        %1999 = vmatprep.subr.bf16.mxu0 0
        %2000 = vmatpush1.bf16.xpose.msra.mxu0 0
        %2001 = vmatprep.subr.bf16.mxu0 0
        %2002 = vmatpush1.bf16.xpose.msra.mxu0 0
        %2003 = vmatprep.subr.bf16.mxu0 0
        %2004 = vmatpush1.bf16.xpose.msra.mxu0 0
        %2005 = vmatprep.subr.bf16.mxu0 0
        %2006 = vmatpush1.bf16.xpose.msra.mxu0 0
        %2007 = vmatprep.subr.bf16.mxu0 0
        %2008 = vmatpush1.bf16.xpose.msra.mxu0 0
        %2009 = vmatprep.subr.bf16.mxu0 0
        %2010 = vmatpush1.bf16.xpose.msra.mxu0 0
        %2011 = vmatprep.subr.bf16.mxu0 0
        %2012 = vmatpush1.bf16.xpose.msra.mxu0 0
        %2013 = vmatprep.subr.bf16.mxu0 0
        %2014 = vmatpush1.bf16.xpose.msra.mxu0 0
        %2015 = vmatprep.subr.bf16.mxu0 0
        %2016 = vmatpush1.bf16.xpose.msra.mxu0 0
        %2017 = vmatprep.subr.bf16.mxu0 0
        %2018 = vmatpush1.bf16.xpose.msra.mxu0 0
        %2019 = vmatprep.subr.bf16.mxu0 0
        %2020 = vmatpush1.bf16.xpose.msra.mxu0 0
        %2021 = vmatprep.subr.bf16.mxu0 0
        %2022 = vmatpush1.bf16.xpose.msra.mxu0 0
        %2023 = vmatprep.subr.bf16.mxu0 0
        %2024 = vmatpush1.bf16.xpose.msra.mxu0 0
        %2025 = vmatprep.mubr.bf16.mxu0 0
        %2026 = vmatmul.mubr.bf16.gmra.mrb[0].mxu0 %v1988
        %v2027 = vpop.f32.mrb[0].mxu0
        %v2028 = vadd.f32 0.0, %v2027
        %v2029 = vpop.f32.mrb[0].mxu0
        %v2030 = vpop.f32.mrb[0].mxu0
        %v2031 = vpop.f32.mrb[0].mxu0
        %2032 = vdwg.mxu0
        %v2033 = vsel %vm1142, %v2028, -inf
        %2034 = vmax.xlane.f32.xlu0 %v2033
        %v2035 = vpop.xlane.xlu0 %2034
        %v2036 = vsub.f32 %v2028, %v2035
        %v2037 = vmul.f32 %v2036, 1.442695
        %v2038 = vpow.pop %v2037
        %v2039 = vsel %vm1142, %v2038, 0.0
        %2040 = vadd.xlane.f32.xlu0 %v2039
        %v2041 = vpop.xlane.xlu0 %2040
        %v2042 = vrcp.pop %v2041
        %v2043 = vmul.f32 %v2038, %v2042
        %v2044 = vpack.c.bf16 %v2043, %v2043
        %v2046 = vunpack.c.l.b16 %v1871
        %v2047 = vpack.c.b16 %v2046, %v2046
        %2048 = vrot.lane.b32.xlu0 %v2047, 120
        %v2049 = vpop.permute.xlu0 %2048
        %v2051 = vsel %vm1142, %v2044, 0
        %v2054 = vsel %vm1204, %v2049, 0
        %2056 = vmatprep.subr.bf16.mxu0 0
        %2057 = vmatpush1.bf16.msra.mxu0 %v2054
        %2058 = vmatprep.subr.bf16.mxu0 0
        %2059 = vmatpush1.bf16.msra.mxu0 0
        %2060 = vmatprep.subr.bf16.mxu0 0
        %2061 = vmatpush1.bf16.msra.mxu0 0
        %2062 = vmatprep.subr.bf16.mxu0 0
        %2063 = vmatpush1.bf16.msra.mxu0 0
        %2064 = vmatprep.subr.bf16.mxu0 0
        %2065 = vmatpush1.bf16.msra.mxu0 0
        %2066 = vmatprep.subr.bf16.mxu0 0
        %2067 = vmatpush1.bf16.msra.mxu0 0
        %2068 = vmatprep.subr.bf16.mxu0 0
        %2069 = vmatpush1.bf16.msra.mxu0 0
        %2070 = vmatprep.subr.bf16.mxu0 0
        %2071 = vmatpush1.bf16.msra.mxu0 0
        %2072 = vmatprep.subr.bf16.mxu0 0
        %2073 = vmatpush1.bf16.msra.mxu0 0
        %2074 = vmatprep.subr.bf16.mxu0 0
        %2075 = vmatpush1.bf16.msra.mxu0 0
        %2076 = vmatprep.subr.bf16.mxu0 0
        %2077 = vmatpush1.bf16.msra.mxu0 0
        %2078 = vmatprep.subr.bf16.mxu0 0
        %2079 = vmatpush1.bf16.msra.mxu0 0
        %2080 = vmatprep.subr.bf16.mxu0 0
        %2081 = vmatpush1.bf16.msra.mxu0 0
        %2082 = vmatprep.subr.bf16.mxu0 0
        %2083 = vmatpush1.bf16.msra.mxu0 0
        %2084 = vmatprep.subr.bf16.mxu0 0
        %2085 = vmatpush1.bf16.msra.mxu0 0
        %2086 = vmatprep.subr.bf16.mxu0 0
        %2087 = vmatpush1.bf16.msra.mxu0 0
        %2088 = vmatprep.mubr.bf16.mxu0 0
        %2089 = vmatmul.mubr.bf16.gmra.mrb[0].mxu0 %v2051
        %v2090 = vpop.f32.mrb[0].mxu0
        %v2091 = vadd.f32 0.0, %v2090
        %v2092 = vpop.f32.mrb[0].mxu0
        %v2093 = vpop.f32.mrb[0].mxu0
        %v2094 = vpop.f32.mrb[0].mxu0
        %2095 = vdwg.mxu0
        %v2096 = vpack.c.bf16 %v2091, %v2091
        %v2097 = vld [vmem:[#allocation17 + $0x4] sm:$0xf]
        %v2099 = vsel %vm1142, %v2096, 0
        %v2102 = vsel %vm1204, %v2097, 0
        %2104 = vmatprep.subr.bf16.mxu0 0
        %2105 = vmatpush1.bf16.msra.mxu0 %v2102
        %2106 = vmatprep.subr.bf16.mxu0 0
        %2107 = vmatpush1.bf16.msra.mxu0 0
        %2108 = vmatprep.subr.bf16.mxu0 0
        %2109 = vmatpush1.bf16.msra.mxu0 0
        %2110 = vmatprep.subr.bf16.mxu0 0
        %2111 = vmatpush1.bf16.msra.mxu0 0
        %2112 = vmatprep.subr.bf16.mxu0 0
        %2113 = vmatpush1.bf16.msra.mxu0 0
        %2114 = vmatprep.subr.bf16.mxu0 0
        %2115 = vmatpush1.bf16.msra.mxu0 0
        %2116 = vmatprep.subr.bf16.mxu0 0
        %2117 = vmatpush1.bf16.msra.mxu0 0
        %2118 = vmatprep.subr.bf16.mxu0 0
        %2119 = vmatpush1.bf16.msra.mxu0 0
        %2120 = vmatprep.subr.bf16.mxu0 0
        %2121 = vmatpush1.bf16.msra.mxu0 0
        %2122 = vmatprep.subr.bf16.mxu0 0
        %2123 = vmatpush1.bf16.msra.mxu0 0
        %2124 = vmatprep.subr.bf16.mxu0 0
        %2125 = vmatpush1.bf16.msra.mxu0 0
        %2126 = vmatprep.subr.bf16.mxu0 0
        %2127 = vmatpush1.bf16.msra.mxu0 0
        %2128 = vmatprep.subr.bf16.mxu0 0
        %2129 = vmatpush1.bf16.msra.mxu0 0
        %2130 = vmatprep.subr.bf16.mxu0 0
        %2131 = vmatpush1.bf16.msra.mxu0 0
        %2132 = vmatprep.subr.bf16.mxu0 0
        %2133 = vmatpush1.bf16.msra.mxu0 0
        %2134 = vmatprep.subr.bf16.mxu0 0
        %2135 = vmatpush1.bf16.msra.mxu0 0
        %2136 = vmatprep.mubr.bf16.mxu0 0
        %2137 = vmatmul.mubr.bf16.gmra.mrb[0].mxu0 %v2099
        %v2138 = vpop.f32.mrb[0].mxu0
        %v2139 = vadd.f32 0.0, %v2138
        %v2140 = vpop.f32.mrb[0].mxu0
        %v2141 = vpop.f32.mrb[0].mxu0
        %v2142 = vpop.f32.mrb[0].mxu0
        %2143 = vdwg.mxu0
        %v2145 = vsel %vm1142, %v1977, 0
        %v2148 = vsel %vm1204, %v1978, 0
        %2150 = vmatprep.subr.bf16.mxu0 0
        %2151 = vmatpush1.bf16.msra.mxu0 %v2148
        %2152 = vmatprep.subr.bf16.mxu0 0
        %2153 = vmatpush1.bf16.msra.mxu0 0
        %2154 = vmatprep.subr.bf16.mxu0 0
        %2155 = vmatpush1.bf16.msra.mxu0 0
        %2156 = vmatprep.subr.bf16.mxu0 0
        %2157 = vmatpush1.bf16.msra.mxu0 0
        %2158 = vmatprep.subr.bf16.mxu0 0
        %2159 = vmatpush1.bf16.msra.mxu0 0
        %2160 = vmatprep.subr.bf16.mxu0 0
        %2161 = vmatpush1.bf16.msra.mxu0 0
        %2162 = vmatprep.subr.bf16.mxu0 0
        %2163 = vmatpush1.bf16.msra.mxu0 0
        %2164 = vmatprep.subr.bf16.mxu0 0
        %2165 = vmatpush1.bf16.msra.mxu0 0
        %2166 = vmatprep.subr.bf16.mxu0 0
        %2167 = vmatpush1.bf16.msra.mxu0 0
        %2168 = vmatprep.subr.bf16.mxu0 0
        %2169 = vmatpush1.bf16.msra.mxu0 0
        %2170 = vmatprep.subr.bf16.mxu0 0
        %2171 = vmatpush1.bf16.msra.mxu0 0
        %2172 = vmatprep.subr.bf16.mxu0 0
        %2173 = vmatpush1.bf16.msra.mxu0 0
        %2174 = vmatprep.subr.bf16.mxu0 0
        %2175 = vmatpush1.bf16.msra.mxu0 0
        %2176 = vmatprep.subr.bf16.mxu0 0
        %2177 = vmatpush1.bf16.msra.mxu0 0
        %2178 = vmatprep.subr.bf16.mxu0 0
        %2179 = vmatpush1.bf16.msra.mxu0 0
        %2180 = vmatprep.subr.bf16.mxu0 0
        %2181 = vmatpush1.bf16.msra.mxu0 0
        %2182 = vmatprep.mubr.bf16.mxu0 0
        %2183 = vmatmul.mubr.bf16.gmra.mrb[0].mxu0 %v2145
        %v2184 = vpop.f32.mrb[0].mxu0
        %v2185 = vadd.f32 %v2139, %v2184
        %v2186 = vpop.f32.mrb[0].mxu0
        %v2187 = vpop.f32.mrb[0].mxu0
        %v2188 = vpop.f32.mrb[0].mxu0
        %2189 = vdwg.mxu0
        %2190 = vrot.lane.b32.xlu0 %v1872, 112
        %v2191 = vpop.permute.xlu0 %2190
        %2192 = vrot.lane.b32.xlu0 %v1984, 112
        %v2193 = vpop.permute.xlu0 %2192
        %v2195 = vsel %vm1142, %v2191, 0
        %v2198 = vsel %vm1142, %v2193, 0
        %2200 = vmatprep.subr.bf16.mxu0 0
        %2201 = vmatpush1.bf16.xpose.msra.mxu0 %v2198
        %2202 = vmatprep.subr.bf16.mxu0 0
        %2203 = vmatpush1.bf16.xpose.msra.mxu0 0
        %2204 = vmatprep.subr.bf16.mxu0 0
        %2205 = vmatpush1.bf16.xpose.msra.mxu0 0
        %2206 = vmatprep.subr.bf16.mxu0 0
        %2207 = vmatpush1.bf16.xpose.msra.mxu0 0
        %2208 = vmatprep.subr.bf16.mxu0 0
        %2209 = vmatpush1.bf16.xpose.msra.mxu0 0
        %2210 = vmatprep.subr.bf16.mxu0 0
        %2211 = vmatpush1.bf16.xpose.msra.mxu0 0
        %2212 = vmatprep.subr.bf16.mxu0 0
        %2213 = vmatpush1.bf16.xpose.msra.mxu0 0
        %2214 = vmatprep.subr.bf16.mxu0 0
        %2215 = vmatpush1.bf16.xpose.msra.mxu0 0
        %2216 = vmatprep.subr.bf16.mxu0 0
        %2217 = vmatpush1.bf16.xpose.msra.mxu0 0
        %2218 = vmatprep.subr.bf16.mxu0 0
        %2219 = vmatpush1.bf16.xpose.msra.mxu0 0
        %2220 = vmatprep.subr.bf16.mxu0 0
        %2221 = vmatpush1.bf16.xpose.msra.mxu0 0
        %2222 = vmatprep.subr.bf16.mxu0 0
        %2223 = vmatpush1.bf16.xpose.msra.mxu0 0
        %2224 = vmatprep.subr.bf16.mxu0 0
        %2225 = vmatpush1.bf16.xpose.msra.mxu0 0
        %2226 = vmatprep.subr.bf16.mxu0 0
        %2227 = vmatpush1.bf16.xpose.msra.mxu0 0
        %2228 = vmatprep.subr.bf16.mxu0 0
        %2229 = vmatpush1.bf16.xpose.msra.mxu0 0
        %2230 = vmatprep.subr.bf16.mxu0 0
        %2231 = vmatpush1.bf16.xpose.msra.mxu0 0
        %2232 = vmatprep.mubr.bf16.mxu0 0
        %2233 = vmatmul.mubr.bf16.gmra.mrb[0].mxu0 %v2195
        %v2234 = vpop.f32.mrb[0].mxu0
        %v2235 = vadd.f32 0.0, %v2234
        %v2236 = vpop.f32.mrb[0].mxu0
        %v2237 = vpop.f32.mrb[0].mxu0
        %v2238 = vpop.f32.mrb[0].mxu0
        %2239 = vdwg.mxu0
        %v2240 = vsel %vm1142, %v2235, -inf
        %2241 = vmax.xlane.f32.xlu0 %v2240
        %v2242 = vpop.xlane.xlu0 %2241
        %v2243 = vsub.f32 %v2235, %v2242
        %v2244 = vmul.f32 %v2243, 1.442695
        %v2245 = vpow.pop %v2244
        %v2246 = vsel %vm1142, %v2245, 0.0
        %2247 = vadd.xlane.f32.xlu0 %v2246
        %v2248 = vpop.xlane.xlu0 %2247
        %v2249 = vrcp.pop %v2248
        %v2250 = vmul.f32 %v2245, %v2249
        %v2251 = vpack.c.bf16 %v2250, %v2250
        %2252 = vrot.lane.b32.xlu0 %v2047, 112
        %v2253 = vpop.permute.xlu0 %2252
        %v2255 = vsel %vm1142, %v2251, 0
        %v2258 = vsel %vm1204, %v2253, 0
        %2260 = vmatprep.subr.bf16.mxu0 0
        %2261 = vmatpush1.bf16.msra.mxu0 %v2258
        %2262 = vmatprep.subr.bf16.mxu0 0
        %2263 = vmatpush1.bf16.msra.mxu0 0
        %2264 = vmatprep.subr.bf16.mxu0 0
        %2265 = vmatpush1.bf16.msra.mxu0 0
        %2266 = vmatprep.subr.bf16.mxu0 0
        %2267 = vmatpush1.bf16.msra.mxu0 0
        %2268 = vmatprep.subr.bf16.mxu0 0
        %2269 = vmatpush1.bf16.msra.mxu0 0
        %2270 = vmatprep.subr.bf16.mxu0 0
        %2271 = vmatpush1.bf16.msra.mxu0 0
        %2272 = vmatprep.subr.bf16.mxu0 0
        %2273 = vmatpush1.bf16.msra.mxu0 0
        %2274 = vmatprep.subr.bf16.mxu0 0
        %2275 = vmatpush1.bf16.msra.mxu0 0
        %2276 = vmatprep.subr.bf16.mxu0 0
        %2277 = vmatpush1.bf16.msra.mxu0 0
        %2278 = vmatprep.subr.bf16.mxu0 0
        %2279 = vmatpush1.bf16.msra.mxu0 0
        %2280 = vmatprep.subr.bf16.mxu0 0
        %2281 = vmatpush1.bf16.msra.mxu0 0
        %2282 = vmatprep.subr.bf16.mxu0 0
        %2283 = vmatpush1.bf16.msra.mxu0 0
        %2284 = vmatprep.subr.bf16.mxu0 0
        %2285 = vmatpush1.bf16.msra.mxu0 0
        %2286 = vmatprep.subr.bf16.mxu0 0
        %2287 = vmatpush1.bf16.msra.mxu0 0
        %2288 = vmatprep.subr.bf16.mxu0 0
        %2289 = vmatpush1.bf16.msra.mxu0 0
        %2290 = vmatprep.subr.bf16.mxu0 0
        %2291 = vmatpush1.bf16.msra.mxu0 0
        %2292 = vmatprep.mubr.bf16.mxu0 0
        %2293 = vmatmul.mubr.bf16.gmra.mrb[0].mxu0 %v2255
        %v2294 = vpop.f32.mrb[0].mxu0
        %v2295 = vadd.f32 0.0, %v2294
        %v2296 = vpop.f32.mrb[0].mxu0
        %v2297 = vpop.f32.mrb[0].mxu0
        %v2298 = vpop.f32.mrb[0].mxu0
        %2299 = vdwg.mxu0
        %v2300 = vpack.c.bf16 %v2295, %v2295
        %v2301 = vld [vmem:[#allocation17 + $0x8] sm:$0xf]
        %v2303 = vsel %vm1142, %v2300, 0
        %v2306 = vsel %vm1204, %v2301, 0
        %2308 = vmatprep.subr.bf16.mxu0 0
        %2309 = vmatpush1.bf16.msra.mxu0 %v2306
        %2310 = vmatprep.subr.bf16.mxu0 0
        %2311 = vmatpush1.bf16.msra.mxu0 0
        %2312 = vmatprep.subr.bf16.mxu0 0
        %2313 = vmatpush1.bf16.msra.mxu0 0
        %2314 = vmatprep.subr.bf16.mxu0 0
        %2315 = vmatpush1.bf16.msra.mxu0 0
        %2316 = vmatprep.subr.bf16.mxu0 0
        %2317 = vmatpush1.bf16.msra.mxu0 0
        %2318 = vmatprep.subr.bf16.mxu0 0
        %2319 = vmatpush1.bf16.msra.mxu0 0
        %2320 = vmatprep.subr.bf16.mxu0 0
        %2321 = vmatpush1.bf16.msra.mxu0 0
        %2322 = vmatprep.subr.bf16.mxu0 0
        %2323 = vmatpush1.bf16.msra.mxu0 0
        %2324 = vmatprep.subr.bf16.mxu0 0
        %2325 = vmatpush1.bf16.msra.mxu0 0
        %2326 = vmatprep.subr.bf16.mxu0 0
        %2327 = vmatpush1.bf16.msra.mxu0 0
        %2328 = vmatprep.subr.bf16.mxu0 0
        %2329 = vmatpush1.bf16.msra.mxu0 0
        %2330 = vmatprep.subr.bf16.mxu0 0
        %2331 = vmatpush1.bf16.msra.mxu0 0
        %2332 = vmatprep.subr.bf16.mxu0 0
        %2333 = vmatpush1.bf16.msra.mxu0 0
        %2334 = vmatprep.subr.bf16.mxu0 0
        %2335 = vmatpush1.bf16.msra.mxu0 0
        %2336 = vmatprep.subr.bf16.mxu0 0
        %2337 = vmatpush1.bf16.msra.mxu0 0
        %2338 = vmatprep.subr.bf16.mxu0 0
        %2339 = vmatpush1.bf16.msra.mxu0 0
        %2340 = vmatprep.mubr.bf16.mxu0 0
        %2341 = vmatmul.mubr.bf16.gmra.mrb[0].mxu0 %v2303
        %v2342 = vpop.f32.mrb[0].mxu0
        %v2343 = vadd.f32 0.0, %v2342
        %v2344 = vpop.f32.mrb[0].mxu0
        %v2345 = vpop.f32.mrb[0].mxu0
        %v2346 = vpop.f32.mrb[0].mxu0
        %2347 = vdwg.mxu0
        %v2348 = vadd.f32 %v2185, %v2343
        %2349 = vrot.lane.b32.xlu0 %v1872, 104
        %v2350 = vpop.permute.xlu0 %2349
        %2351 = vrot.lane.b32.xlu0 %v1984, 104
        %v2352 = vpop.permute.xlu0 %2351
        %v2354 = vsel %vm1142, %v2350, 0
        %v2357 = vsel %vm1142, %v2352, 0
        %2359 = vmatprep.subr.bf16.mxu0 0
        %2360 = vmatpush1.bf16.xpose.msra.mxu0 %v2357
        %2361 = vmatprep.subr.bf16.mxu0 0
        %2362 = vmatpush1.bf16.xpose.msra.mxu0 0
        %2363 = vmatprep.subr.bf16.mxu0 0
        %2364 = vmatpush1.bf16.xpose.msra.mxu0 0
        %2365 = vmatprep.subr.bf16.mxu0 0
        %2366 = vmatpush1.bf16.xpose.msra.mxu0 0
        %2367 = vmatprep.subr.bf16.mxu0 0
        %2368 = vmatpush1.bf16.xpose.msra.mxu0 0
        %2369 = vmatprep.subr.bf16.mxu0 0
        %2370 = vmatpush1.bf16.xpose.msra.mxu0 0
        %2371 = vmatprep.subr.bf16.mxu0 0
        %2372 = vmatpush1.bf16.xpose.msra.mxu0 0
        %2373 = vmatprep.subr.bf16.mxu0 0
        %2374 = vmatpush1.bf16.xpose.msra.mxu0 0
        %2375 = vmatprep.subr.bf16.mxu0 0
        %2376 = vmatpush1.bf16.xpose.msra.mxu0 0
        %2377 = vmatprep.subr.bf16.mxu0 0
        %2378 = vmatpush1.bf16.xpose.msra.mxu0 0
        %2379 = vmatprep.subr.bf16.mxu0 0
        %2380 = vmatpush1.bf16.xpose.msra.mxu0 0
        %2381 = vmatprep.subr.bf16.mxu0 0
        %2382 = vmatpush1.bf16.xpose.msra.mxu0 0
        %2383 = vmatprep.subr.bf16.mxu0 0
        %2384 = vmatpush1.bf16.xpose.msra.mxu0 0
        %2385 = vmatprep.subr.bf16.mxu0 0
        %2386 = vmatpush1.bf16.xpose.msra.mxu0 0
        %2387 = vmatprep.subr.bf16.mxu0 0
        %2388 = vmatpush1.bf16.xpose.msra.mxu0 0
        %2389 = vmatprep.subr.bf16.mxu0 0
        %2390 = vmatpush1.bf16.xpose.msra.mxu0 0
        %2391 = vmatprep.mubr.bf16.mxu0 0
        %2392 = vmatmul.mubr.bf16.gmra.mrb[0].mxu0 %v2354
        %v2393 = vpop.f32.mrb[0].mxu0
        %v2394 = vadd.f32 0.0, %v2393
        %v2395 = vpop.f32.mrb[0].mxu0
        %v2396 = vpop.f32.mrb[0].mxu0
        %v2397 = vpop.f32.mrb[0].mxu0
        %2398 = vdwg.mxu0
        %v2399 = vsel %vm1142, %v2394, -inf
        %2400 = vmax.xlane.f32.xlu0 %v2399
        %v2401 = vpop.xlane.xlu0 %2400
        %v2402 = vsub.f32 %v2394, %v2401
        %v2403 = vmul.f32 %v2402, 1.442695
        %v2404 = vpow.pop %v2403
        %v2405 = vsel %vm1142, %v2404, 0.0
        %2406 = vadd.xlane.f32.xlu0 %v2405
        %v2407 = vpop.xlane.xlu0 %2406
        %v2408 = vrcp.pop %v2407
        %v2409 = vmul.f32 %v2404, %v2408
        %v2410 = vpack.c.bf16 %v2409, %v2409
        %2411 = vrot.lane.b32.xlu0 %v2047, 104
        %v2412 = vpop.permute.xlu0 %2411
        %v2414 = vsel %vm1142, %v2410, 0
        %v2417 = vsel %vm1204, %v2412, 0
        %2419 = vmatprep.subr.bf16.mxu0 0
        %2420 = vmatpush1.bf16.msra.mxu0 %v2417
        %2421 = vmatprep.subr.bf16.mxu0 0
        %2422 = vmatpush1.bf16.msra.mxu0 0
        %2423 = vmatprep.subr.bf16.mxu0 0
        %2424 = vmatpush1.bf16.msra.mxu0 0
        %2425 = vmatprep.subr.bf16.mxu0 0
        %2426 = vmatpush1.bf16.msra.mxu0 0
        %2427 = vmatprep.subr.bf16.mxu0 0
        %2428 = vmatpush1.bf16.msra.mxu0 0
        %2429 = vmatprep.subr.bf16.mxu0 0
        %2430 = vmatpush1.bf16.msra.mxu0 0
        %2431 = vmatprep.subr.bf16.mxu0 0
        %2432 = vmatpush1.bf16.msra.mxu0 0
        %2433 = vmatprep.subr.bf16.mxu0 0
        %2434 = vmatpush1.bf16.msra.mxu0 0
        %2435 = vmatprep.subr.bf16.mxu0 0
        %2436 = vmatpush1.bf16.msra.mxu0 0
        %2437 = vmatprep.subr.bf16.mxu0 0
        %2438 = vmatpush1.bf16.msra.mxu0 0
        %2439 = vmatprep.subr.bf16.mxu0 0
        %2440 = vmatpush1.bf16.msra.mxu0 0
        %2441 = vmatprep.subr.bf16.mxu0 0
        %2442 = vmatpush1.bf16.msra.mxu0 0
        %2443 = vmatprep.subr.bf16.mxu0 0
        %2444 = vmatpush1.bf16.msra.mxu0 0
        %2445 = vmatprep.subr.bf16.mxu0 0
        %2446 = vmatpush1.bf16.msra.mxu0 0
        %2447 = vmatprep.subr.bf16.mxu0 0
        %2448 = vmatpush1.bf16.msra.mxu0 0
        %2449 = vmatprep.subr.bf16.mxu0 0
        %2450 = vmatpush1.bf16.msra.mxu0 0
        %2451 = vmatprep.mubr.bf16.mxu0 0
        %2452 = vmatmul.mubr.bf16.gmra.mrb[0].mxu0 %v2414
        %v2453 = vpop.f32.mrb[0].mxu0
        %v2454 = vadd.f32 0.0, %v2453
        %v2455 = vpop.f32.mrb[0].mxu0
        %v2456 = vpop.f32.mrb[0].mxu0
        %v2457 = vpop.f32.mrb[0].mxu0
        %2458 = vdwg.mxu0
        %v2459 = vpack.c.bf16 %v2454, %v2454
        %v2460 = vld [vmem:[#allocation17 + $0xc] sm:$0xf]
        %v2462 = vsel %vm1142, %v2459, 0
        %v2465 = vsel %vm1204, %v2460, 0
        %2467 = vmatprep.subr.bf16.mxu0 0
        %2468 = vmatpush1.bf16.msra.mxu0 %v2465
        %2469 = vmatprep.subr.bf16.mxu0 0
        %2470 = vmatpush1.bf16.msra.mxu0 0
        %2471 = vmatprep.subr.bf16.mxu0 0
        %2472 = vmatpush1.bf16.msra.mxu0 0
        %2473 = vmatprep.subr.bf16.mxu0 0
        %2474 = vmatpush1.bf16.msra.mxu0 0
        %2475 = vmatprep.subr.bf16.mxu0 0
        %2476 = vmatpush1.bf16.msra.mxu0 0
        %2477 = vmatprep.subr.bf16.mxu0 0
        %2478 = vmatpush1.bf16.msra.mxu0 0
        %2479 = vmatprep.subr.bf16.mxu0 0
        %2480 = vmatpush1.bf16.msra.mxu0 0
        %2481 = vmatprep.subr.bf16.mxu0 0
        %2482 = vmatpush1.bf16.msra.mxu0 0
        %2483 = vmatprep.subr.bf16.mxu0 0
        %2484 = vmatpush1.bf16.msra.mxu0 0
        %2485 = vmatprep.subr.bf16.mxu0 0
        %2486 = vmatpush1.bf16.msra.mxu0 0
        %2487 = vmatprep.subr.bf16.mxu0 0
        %2488 = vmatpush1.bf16.msra.mxu0 0
        %2489 = vmatprep.subr.bf16.mxu0 0
        %2490 = vmatpush1.bf16.msra.mxu0 0
        %2491 = vmatprep.subr.bf16.mxu0 0
        %2492 = vmatpush1.bf16.msra.mxu0 0
        %2493 = vmatprep.subr.bf16.mxu0 0
        %2494 = vmatpush1.bf16.msra.mxu0 0
        %2495 = vmatprep.subr.bf16.mxu0 0
        %2496 = vmatpush1.bf16.msra.mxu0 0
        %2497 = vmatprep.subr.bf16.mxu0 0
        %2498 = vmatpush1.bf16.msra.mxu0 0
        %2499 = vmatprep.mubr.bf16.mxu0 0
        %2500 = vmatmul.mubr.bf16.gmra.mrb[0].mxu0 %v2462
        %v2501 = vpop.f32.mrb[0].mxu0
        %v2502 = vadd.f32 0.0, %v2501
        %v2503 = vpop.f32.mrb[0].mxu0
        %v2504 = vpop.f32.mrb[0].mxu0
        %v2505 = vpop.f32.mrb[0].mxu0
        %2506 = vdwg.mxu0
        %v2507 = vadd.f32 %v2348, %v2502
        %v2508 = vadd.f32 %v1809, %v2507
        %v2509 = vsel %vm1095, %v2508, 0.0
        %2510 = vadd.xlane.f32.xlu0 %v2509
        %v2511 = vpop.xlane.xlu0 %2510
        %v2512 = vmul.f32 %v2511, %v1783
        %v2513 = vsub.f32 %v2508, %v2512
        %v2514 = vmul.f32 %v2513, %v2513
        %v2515 = vsel %vm1095, %v2514, 0.0
        %2516 = vadd.xlane.f32.xlu0 %v2515
        %v2517 = vpop.xlane.xlu0 %2516
        %v2518 = vmul.f32 %v2517, %v1783
        %v2519 = vadd.f32 %v2518, 1e-05
        %v2520 = vrsqrt.pop %v2519
        %v2521 = vmul.f32 %v2513, %v2520
        %v2522 = vld [vmem:[%s17] sm:$0x1]
        %v2524 = vlaneseq
        %v2525 = vshrl.u32 %v2524, 7
        %v2526 = vsub.s32 0, %v2525
        %v2527 = vrot.slane %v2522, %v2526
        %v2529 = vmul.f32 %v2521, %v2527
        %v2530 = vld [vmem:[%s18] sm:$0x1]
        %v2532 = vlaneseq
        %v2533 = vshrl.u32 %v2532, 7
        %v2534 = vsub.s32 0, %v2533
        %v2535 = vrot.slane %v2530, %v2534
        %v2537 = vadd.f32 %v2529, %v2535
        %v2538 = vpack.c.bf16 %v2537, %v2537
        %v2539 = vld [vmem:[#allocation18] sm:$0xf]
        %v2540 = vld [vmem:[#allocation18 + $0x4] sm:$0xf]
        %v2541 = vld [vmem:[#allocation18 + $0x8] sm:$0xf]
        %v2542 = vld [vmem:[#allocation18 + $0xc] sm:$0xf]
        %v2543 = vld [vmem:[%s12] sm:$0x1]
        %v2545 = vlaneseq
        %v2546 = vshrl.u32 %v2545, 7
        %v2547 = vsub.s32 0, %v2546
        %v2548 = vrot.slane %v2543, %v2547
        %v2554 = vunpack.c.l.b16 %v2539
        %v2555 = vunpack.c.l.b16 %v2540
        %v2556 = vunpack.c.l.b16 %v2541
        %v2557 = vunpack.c.l.b16 %v2542
        %v2558 = vpack.c.b16 %v2555, %v2554
        %v2559 = vpack.c.b16 %v2557, %v2556
        %v2563 = vsel %vm1095, %v2538, 0
        %2565 = vmatprep.subr.bf16.mxu0 0
        %2566 = vmatpush1.bf16.msra.mxu0 %v2558
        %2567 = vmatprep.subr.bf16.mxu0 0
        %2568 = vmatpush1.bf16.msra.mxu0 %v2559
        %2569 = vmatprep.subr.bf16.mxu0 0
        %2570 = vmatpush1.bf16.msra.mxu0 0
        %2571 = vmatprep.subr.bf16.mxu0 0
        %2572 = vmatpush1.bf16.msra.mxu0 0
        %2573 = vmatprep.subr.bf16.mxu0 0
        %2574 = vmatpush1.bf16.msra.mxu0 0
        %2575 = vmatprep.subr.bf16.mxu0 0
        %2576 = vmatpush1.bf16.msra.mxu0 0
        %2577 = vmatprep.subr.bf16.mxu0 0
        %2578 = vmatpush1.bf16.msra.mxu0 0
        %2579 = vmatprep.subr.bf16.mxu0 0
        %2580 = vmatpush1.bf16.msra.mxu0 0
        %2581 = vmatprep.subr.bf16.mxu0 0
        %2582 = vmatpush1.bf16.msra.mxu0 0
        %2583 = vmatprep.subr.bf16.mxu0 0
        %2584 = vmatpush1.bf16.msra.mxu0 0
        %2585 = vmatprep.subr.bf16.mxu0 0
        %2586 = vmatpush1.bf16.msra.mxu0 0
        %2587 = vmatprep.subr.bf16.mxu0 0
        %2588 = vmatpush1.bf16.msra.mxu0 0
        %2589 = vmatprep.subr.bf16.mxu0 0
        %2590 = vmatpush1.bf16.msra.mxu0 0
        %2591 = vmatprep.subr.bf16.mxu0 0
        %2592 = vmatpush1.bf16.msra.mxu0 0
        %2593 = vmatprep.subr.bf16.mxu0 0
        %2594 = vmatpush1.bf16.msra.mxu0 0
        %2595 = vmatprep.subr.bf16.mxu0 0
        %2596 = vmatpush1.bf16.msra.mxu0 0
        %2597 = vmatprep.mubr.bf16.mxu0 0
        %2598 = vmatmul.mubr.bf16.gmra.mrb[0].mxu0 %v2563
        %v2599 = vpop.f32.mrb[0].mxu0
        %v2600 = vadd.f32 %v2548, %v2599
        %v2601 = vpop.f32.mrb[0].mxu0
        %v2602 = vpop.f32.mrb[0].mxu0
        %v2603 = vpop.f32.mrb[0].mxu0
        %2604 = vdwg.mxu0
        %v2605 = vmax.f32 %v2600, 0.0
        %v2606 = vpack.c.bf16 %v2605, %v2605
        %v2607 = vld [vmem:[%s13] sm:$0xf]
        %v2608 = vld [vmem:[%s13 + $0x4] sm:$0xf]
        %v2609 = vld [vmem:[%s13 + $0x8] sm:$0xf]
        %v2610 = vld [vmem:[%s13 + $0xc] sm:$0xf]
        %v2611 = vld [vmem:[%s13 + $0x10] sm:$0xf]
        %v2612 = vld [vmem:[%s13 + $0x14] sm:$0xf]
        %v2613 = vld [vmem:[%s13 + $0x18] sm:$0xf]
        %v2614 = vld [vmem:[%s13 + $0x1c] sm:$0xf]
        %v2615 = vld [vmem:[%s14] sm:$0x1]
        %v2617 = vlaneseq
        %v2618 = vshrl.u32 %v2617, 7
        %v2619 = vsub.s32 0, %v2618
        %v2620 = vrot.slane %v2615, %v2619
        %v2630 = vunpack.c.l.b16 %v2607
        %v2631 = vunpack.c.l.b16 %v2608
        %v2632 = vunpack.c.l.b16 %v2609
        %v2633 = vunpack.c.l.b16 %v2610
        %v2634 = vunpack.c.l.b16 %v2611
        %v2635 = vunpack.c.l.b16 %v2612
        %v2636 = vunpack.c.l.b16 %v2613
        %v2637 = vunpack.c.l.b16 %v2614
        %v2638 = vpack.c.b16 %v2631, %v2630
        %v2639 = vpack.c.b16 %v2633, %v2632
        %v2640 = vpack.c.b16 %v2635, %v2634
        %v2641 = vpack.c.b16 %v2637, %v2636
        %vm2646 = vcmask 523264
        %v2648 = vsel %vm2646, %v2606, 0
        %2650 = vmatprep.subr.bf16.mxu0 0
        %2651 = vmatpush1.bf16.msra.mxu0 %v2638
        %2652 = vmatprep.subr.bf16.mxu0 0
        %2653 = vmatpush1.bf16.msra.mxu0 %v2639
        %2654 = vmatprep.subr.bf16.mxu0 0
        %2655 = vmatpush1.bf16.msra.mxu0 %v2640
        %2656 = vmatprep.subr.bf16.mxu0 0
        %2657 = vmatpush1.bf16.msra.mxu0 %v2641
        %2658 = vmatprep.subr.bf16.mxu0 0
        %2659 = vmatpush1.bf16.msra.mxu0 0
        %2660 = vmatprep.subr.bf16.mxu0 0
        %2661 = vmatpush1.bf16.msra.mxu0 0
        %2662 = vmatprep.subr.bf16.mxu0 0
        %2663 = vmatpush1.bf16.msra.mxu0 0
        %2664 = vmatprep.subr.bf16.mxu0 0
        %2665 = vmatpush1.bf16.msra.mxu0 0
        %2666 = vmatprep.subr.bf16.mxu0 0
        %2667 = vmatpush1.bf16.msra.mxu0 0
        %2668 = vmatprep.subr.bf16.mxu0 0
        %2669 = vmatpush1.bf16.msra.mxu0 0
        %2670 = vmatprep.subr.bf16.mxu0 0
        %2671 = vmatpush1.bf16.msra.mxu0 0
        %2672 = vmatprep.subr.bf16.mxu0 0
        %2673 = vmatpush1.bf16.msra.mxu0 0
        %2674 = vmatprep.subr.bf16.mxu0 0
        %2675 = vmatpush1.bf16.msra.mxu0 0
        %2676 = vmatprep.subr.bf16.mxu0 0
        %2677 = vmatpush1.bf16.msra.mxu0 0
        %2678 = vmatprep.subr.bf16.mxu0 0
        %2679 = vmatpush1.bf16.msra.mxu0 0
        %2680 = vmatprep.subr.bf16.mxu0 0
        %2681 = vmatpush1.bf16.msra.mxu0 0
        %2682 = vmatprep.mubr.bf16.mxu0 0
        %2683 = vmatmul.mubr.bf16.gmra.mrb[0].mxu0 %v2648
        %v2684 = vpop.f32.mrb[0].mxu0
        %v2685 = vadd.f32 %v2620, %v2684
        %v2686 = vpop.f32.mrb[0].mxu0
        %v2687 = vpop.f32.mrb[0].mxu0
        %v2688 = vpop.f32.mrb[0].mxu0
        %2689 = vdwg.mxu0
        %v2690 = vadd.f32 %v2537, %v2685
        %v2691 = vsel %vm1095, %v2690, 0.0
        %2692 = vadd.xlane.f32.xlu0 %v2691
        %v2693 = vpop.xlane.xlu0 %2692
        %v2694 = vmul.f32 %v2693, %v1783
        %v2695 = vsub.f32 %v2690, %v2694
        %v2696 = vmul.f32 %v2695, %v2695
        %v2697 = vsel %vm1095, %v2696, 0.0
        %2698 = vadd.xlane.f32.xlu0 %v2697
        %v2699 = vpop.xlane.xlu0 %2698
        %v2700 = vmul.f32 %v2699, %v1783
        %v2701 = vadd.f32 %v2700, 1e-05
        %v2702 = vrsqrt.pop %v2701
        %v2703 = vmul.f32 %v2695, %v2702
        %v2704 = vld [vmem:[%s19] sm:$0x1]
        %v2706 = vlaneseq
        %v2707 = vshrl.u32 %v2706, 7
        %v2708 = vsub.s32 0, %v2707
        %v2709 = vrot.slane %v2704, %v2708
        %v2711 = vmul.f32 %v2703, %v2709
        %v2712 = vld [vmem:[%s20] sm:$0x1]
        %v2714 = vlaneseq
        %v2715 = vshrl.u32 %v2714, 7
        %v2716 = vsub.s32 0, %v2715
        %v2717 = vrot.slane %v2712, %v2716
        %v2719 = vadd.f32 %v2711, %v2717
        %2720 = vst.msk [vmem:[%s812] sm:$0xff] %vm1095, %v2719
        %s2721 = sand.u32 %s520, 1
        %s2722 = scalar_lea.sflag [#allocation8], %s2721
        %s2723 = sand.u32 %s520, 1
        %s2724 = smul.addr %s2723, 8
        %s2725 = scalar_lea.vmem [#allocation20], %s2724
        // Predicated region
        $region141: #{tpu_custom_call.1} parent=103 // pred_check
          %p2726 = pneg %p530
        $region142: #{tpu_custom_call.1} parent=103 // pred_check_branch
          %2728 = sbr.rel (%p2726) target = $region144
        $region143: #{tpu_custom_call.1} parent=103 // pred_region
          %s2730 = ssub.s32 128, 128
          %2731 = vsyncadd %s2722, %s2730
          %s2732 = sadd.s32 %s45, %s44
          %s2733 = smul.addr %s2732, 128
          %s2734 = scalar_lea.hbm %s21, %s2733
          %s2736 = sshll.u32 %s2725, 4
          %s2737 = int_to_ptr.vmem [resolvable:$true] %s2736
          %2739 = dma.vmem_to_hbm [thread:$0]  %s2737, 128, %s2734, %s2722
        $region144: #{tpu_custom_call.1} parent=103 // pred_fallthru
          _
      $region104: #{tpu_custom_call.1} parent=5 // pred_fallthru
        _
      %p2740 = scmp.le.s32.totalorder 2, %s35
      // Predicated region
      $region145: #{tpu_custom_call.1} parent=5 // pred_check
        %p2741 = pneg %p2740
      $region146: #{tpu_custom_call.1} parent=5 // pred_check_branch
        %2743 = sbr.rel (%p2741) target = $region148
      $region147: #{tpu_custom_call.1} parent=5 // pred_region
        %s2744 = ssub.s32 %s35, 2
        // Predicated region
        $region149: #{tpu_custom_call.1} parent=147 // pred_check
          %p2745 = pneg %p536
        $region150: #{tpu_custom_call.1} parent=147 // pred_check_branch
          %2747 = sbr.rel (%p2745) target = $region152
        $region151: #{tpu_custom_call.1} parent=147 // pred_region
          %s2748 = sand.u32 %s521, 1
          %s2749 = scalar_lea.sflag [#allocation8], %s2748
          %s2750 = sand.u32 %s521, 1
          %s2751 = smul.addr %s2750, 8
          %s2752 = scalar_lea.vmem [#allocation20], %s2751
          %2753 = dma.done %s2749, 128
        $region152: #{tpu_custom_call.1} parent=147 // pred_fallthru
          _
      $region148: #{tpu_custom_call.1} parent=5 // pred_fallthru
        _
    $region6: #{tpu_custom_call.1} parent=1 // loop_footer
      %s39 = sadd.s32 1, %s35
    $region7: #{tpu_custom_call.1} parent=1 // loop_footer_branch
      %34 = sbr.rel target = $region3
    $region8: #{tpu_custom_call.1} parent=1 // loop_exit
      _
    %2754 = vsyncpa [#allocation7], 1
    %s2755 = scalar_lea.sflag [#allocation7], 1
    %2756 = vsyncpa %s2755, 1
    %2757 = vsyncpa [#allocation10], 1
    %2758 = vsyncpa [#allocation13], 1
    %2759 = vsyncpa [#allocation16], 1
    %2760 = vsyncpa [#allocation19], 1
    %2761 = vsyncpa [#allocation8], 1
    %s2762 = scalar_lea.sflag [#allocation8], 1
    %2763 = vsyncpa %s2762, 1

</llo_original>
